<compile_context>
chip_gen: v7x
topology: tpu7x:2x2x1
jax: 0.10.0
libtpu: 0.0.40
codegen_flags: <defaults>
</compile_context>

<pallas_src>
import jax
import jax.numpy as jnp
from jax import lax
from jax.experimental import pallas as pl
from jax.experimental.pallas import tpu as pltpu


def _conv1x1_kernel(w_ref, x_ref, o_ref):
    # w_ref: (Cout_blk, Cin)    -- one Cout shard of the 1x1 weight
    # x_ref: (Bt, Cin, HW)      -- Bt images' channel-major pixel matrices
    # o_ref: (Bt, Cout_blk, HW)
    bt = x_ref.shape[0]
    for b in range(bt):  # static unroll, Bt <= 8; each dot hits the MXU directly
        o_ref[b] = jnp.dot(
            w_ref[...],
            x_ref[b],
            precision=lax.Precision.HIGHEST,
            preferred_element_type=jnp.float32,
        ).astype(o_ref.dtype)


def conv2d_1x1(x_nchw, weight_oihw, *, batch_tile=8):
    """1x1 conv, stride 1, no bias.

    x_nchw:      (N, Cin, H, W)    float32
    weight_oihw: (Cout, Cin, 1, 1) float32
    returns:     (N, Cout, H, W)   float32
    """
    N, Cin, H, W = x_nchw.shape
    Cout = weight_oihw.shape[0]
    HW = H * W

    # Free (contiguous) reshapes only -- no HBM transpose passes.
    x_mat = x_nchw.reshape(N, Cin, HW)       # (N, Cin, HW)
    w_mat = weight_oihw.reshape(Cout, Cin)   # (Cout, Cin)

    # --- Cout split: give v7x's second TensorCore work even when N == 1. ---
    cout_split = 2 if (Cout % 2 == 0 and (Cout // 2) % 8 == 0) else 1
    cout_blk = Cout // cout_split

    # --- Batch tile: amortize per-grid-step overhead, cap X block ~4 MB. ---
    x_img_bytes = Cin * HW * x_mat.dtype.itemsize
    bt = int(max(1, min(batch_tile, N, max(1, (4 << 20) // max(1, x_img_bytes)))))

    n_tiles = pl.cdiv(N, bt)
    n_pad = n_tiles * bt
    if n_pad != N:
        # Zero-pad ragged tail; padded rows produce zeros and are sliced off.
        x_mat = jnp.pad(x_mat, ((0, n_pad - N), (0, 0), (0, 0)))

    cost = pl.CostEstimate(
        flops=2 * n_pad * HW * Cin * Cout,
        transcendentals=0,
        bytes_accessed=4 * (n_pad * Cin * HW + n_tiles * Cin * Cout + n_pad * Cout * HW),
    )

    out = pl.pallas_call(
        _conv1x1_kernel,
        out_shape=jax.ShapeDtypeStruct((n_pad, Cout, HW), x_nchw.dtype),
        grid_spec=pltpu.PrefetchScalarGridSpec(
            num_scalar_prefetch=0,
            grid=(n_tiles, cout_split),
            in_specs=[
                # Weight shard varies only along the inner cout axis.
                pl.BlockSpec((cout_blk, Cin), lambda n, c: (c, 0)),
                # X block is constant along the inner cout axis -> stays VMEM-resident.
                pl.BlockSpec((bt, Cin, HW), lambda n, c: (n, 0, 0)),
            ],
            out_specs=pl.BlockSpec((bt, cout_blk, HW), lambda n, c: (n, c, 0)),
        ),
        compiler_params=pltpu.CompilerParams(
            # Both axes independent -> megacore-shardable on v7x.
            dimension_semantics=("parallel", "parallel"),
        ),
        cost_estimate=cost,
    )(w_mat, x_mat)

    if n_pad != N:
        out = out[:N]

    # Contiguous reshape back to NCHW (no transpose).
    return out.reshape(N, Cout, H, W)


def _reference(x_nchw, weight_oihw):
    Cout = weight_oihw.shape[0]
    Cin = weight_oihw.shape[1]
    return jnp.einsum(
        "nchw,oc->nohw",
        x_nchw,
        weight_oihw.reshape(Cout, Cin),
        precision=lax.Precision.HIGHEST,
    )


if __name__ == "__main__":
    key = jax.random.PRNGKey(0)
    k_x, k_w, k_x2, k_w2 = jax.random.split(key, 4)

    # --- Primary check: exact shapes implied by the module. ---
    # Conv2d(768, 192, 1x1) on x of shape (1, 768, 12, 12).
    N, Cin, H, W, Cout = 1, 768, 12, 12, 192
    x = jax.random.normal(k_x, (N, Cin, H, W), dtype=jnp.float32)
    bound = 1.0 / (Cin ** 0.5)
    weight = jax.random.uniform(
        k_w, (Cout, Cin, 1, 1), minval=-bound, maxval=bound, dtype=jnp.float32
    )

    out = conv2d_1x1(x, weight)
    out = jax.block_until_ready(out)
    ref = _reference(x, weight)
    assert out.shape == (N, Cout, H, W)
    assert jnp.allclose(out, ref, atol=1e-4, rtol=1e-4)

    # --- Secondary check: batch tiling + ragged tail (N=5, Bt=2 -> pad to 6). ---
    N2, Cin2, H2, W2, Cout2 = 5, 256, 8, 8, 64
    x2 = jax.random.normal(k_x2, (N2, Cin2, H2, W2), dtype=jnp.float32)
    w2 = jax.random.uniform(
        k_w2, (Cout2, Cin2, 1, 1), minval=-bound, maxval=bound, dtype=jnp.float32
    )
    out2 = conv2d_1x1(x2, w2, batch_tile=2)
    out2 = jax.block_until_ready(out2)
    ref2 = _reference(x2, w2)
    assert out2.shape == (N2, Cout2, H2, W2)
    assert jnp.allclose(out2, ref2, atol=1e-4, rtol=1e-4)

    print("KERNEL_OK")
</pallas_src>

<mosaic_0001>
module attributes {stable_mosaic.version = 11 : i64} {
  func.func @_conv1x1_kernel(%arg0: i32, %arg1: i32, %arg2: memref<96x768xf32, #tpu.memory_space<vmem>>, %arg3: memref<1x768x144xf32, #tpu.memory_space<vmem>>, %arg4: memref<1x96x144xf32, #tpu.memory_space<vmem>>) attributes {dimension_semantics = [#tpu.dimension_semantics<parallel>, #tpu.dimension_semantics<parallel>], iteration_bounds = array<i64: 1, 2>, scalar_prefetch = 0 : i64, scratch_operands = 0 : i64, tpu.core_type = #tpu.core_type<tc>, window_params = [{transform_indices = @transform_0, window_bounds = array<i64: 96, 768>}, {transform_indices = @transform_1, window_bounds = array<i64: 1, 768, 144>}, {transform_indices = @transform_2, window_bounds = array<i64: 1, 96, 144>}]} {
    %c0 = arith.constant 0 : index
    %c0_0 = arith.constant 0 : index
    %0 = vector.load %arg2[%c0, %c0_0] : memref<96x768xf32, #tpu.memory_space<vmem>>, vector<96x768xf32>
    %c0_1 = arith.constant 0 : index
    %c0_2 = arith.constant 0 : index
    %c0_3 = arith.constant 0 : index
    %1 = vector.load %arg3[%c0_1, %c0_2, %c0_3] : memref<1x768x144xf32, #tpu.memory_space<vmem>>, vector<1x768x144xf32>
    %2 = vector.shape_cast %1 : vector<1x768x144xf32> to vector<768x144xf32>
    %cst = arith.constant dense<0.000000e+00> : vector<96x144xf32>
    %3 = tpu.matmul %0, %2, %cst {dimension_numbers = #tpu.dot_dimension_numbers<[1], [0], [0], [1], [0, 0, 1, 1], [], []>, precision = #tpu.contract_precision<fp32>} : vector<96x768xf32>, vector<768x144xf32>, vector<96x144xf32> -> vector<96x144xf32>
    %c0_4 = arith.constant 0 : index
    %c0_5 = arith.constant 0 : index
    %c0_6 = arith.constant 0 : index
    %4 = vector.load %arg4[%c0_4, %c0_5, %c0_6] : memref<1x96x144xf32, #tpu.memory_space<vmem>>, vector<1x96x144xf32>
    %5 = vector.shape_cast %4 : vector<1x96x144xf32> to vector<96x144xf32>
    %6 = vector.shape_cast %3 : vector<96x144xf32> to vector<1x96x144xf32>
    tpu.vector_store %arg4[%c0_4, %c0_5, %c0_6], %6 {strides = array<i32>} : memref<1x96x144xf32, #tpu.memory_space<vmem>>, vector<1x96x144xf32>,
    return
  }
  func.func @transform_0(%arg0: i32, %arg1: i32) -> (i32, i32) {
    %c0_i32 = arith.constant 0 : i32
    %c0_i32_0 = arith.constant 0 : i32
    return %arg1, %c0_i32 : i32, i32
  }
  func.func @transform_1(%arg0: i32, %arg1: i32) -> (i32, i32, i32) {
    %c0_i32 = arith.constant 0 : i32
    %c0_i32_0 = arith.constant 0 : i32
    %c0_i32_1 = arith.constant 0 : i32
    return %arg0, %c0_i32, %c0_i32_0 : i32, i32, i32
  }
  func.func @transform_2(%arg0: i32, %arg1: i32) -> (i32, i32, i32) {
    %c0_i32 = arith.constant 0 : i32
    %c0_i32_0 = arith.constant 0 : i32
    return %arg0, %arg1, %c0_i32 : i32, i32, i32
  }
}

</mosaic_0001>

<llo_original>
// kernel: tpu_custom_call.1
$region0: #{tpu_custom_call.1}
  #allocation0 [shape = 'u32[]', space=smem, size = 0x4, offset = 0x4, fixed_abs, tag = 'smem constant byte address 0x4 - core index']
  #allocation1 [shape = 'u32[144,128]{1,0:T(1,128)}', space=vmem, size = 0x12000, scoped, tag = 'internal scratch']
  %s0 = inlined_call_operand.vmem [shape: f32[192,768], index: 0, kind: input, shape index: {}]
  %s1 = inlined_call_operand.vmem [shape: f32[1,768,144], index: 1, kind: input, shape index: {}]
  %s2 = inlined_call_operand.vmem [shape: f32[1,192,144], index: 2, kind: output, shape index: {}]
  %s3 = sld [smem:[#allocation0]]
  $region41: #{tpu_custom_call.1} parent=0
    _
  %s5 = ssub.s32 1, %s3
  %s6 = scalar_select 0, %s5, %s3
  loop: start=0, step=1, limit=4
  $region2: #{tpu_custom_call.1} parent=0 // loop_pre_header
    _
  $region3: #{tpu_custom_call.1} parent=0 // loop_header
    %s8 = sphi 0, %s12
    %p9 = scmp.ge.s32.totalorder %s8, 4
    %s15 = sphi 0, %s27
    %s16 = sphi 0, %s23
    %s17 = sphi 0, %s15
    %s18 = sphi 0, %s16
    %s19 = sphi 0, %s17
    %s20 = sphi 0, %s18
    %s30 = sphi 0, %s32
    %s33 = sphi 0, %s30
    %s34 = sphi 0, %s33
    %s50 = sphi 0, %s34
    %s56 = sphi 0, %s58
    %s59 = sphi 0, %s56
    %s60 = sphi 0, %s59
    %s76 = sphi 0, %s60
    %s84 = sphi 0, %s86
    %s87 = sphi 0, %s84
    %s88 = sphi 0, %s87
    %s104 = sphi 0, %s88
  $region4: #{tpu_custom_call.1} parent=0 // loop_header_branch
    %11 = sbr.rel (%p9) target = $region8
  $region5: #{tpu_custom_call.1} parent=0 // loop_body
    %s13 = ssub.s32 %s8, 1
    %s14 = ssub.s32 %s8, 2
    %s21 = sadd.s32 1, %s16
    %p22 = scmp.ge.s32.totalorder %s21, 2
    %s23 = scalar_select %p22, 0, %s21
    %s24 = sadd.s32 1, %s15
    %s25 = scalar_select %p22, %s24, %s15
    %p26 = scmp.ge.s32.totalorder %s25, 1
    %s27 = scalar_select %p26, 0, %s25
    %s28 = ssub.s32 %s16, %s23
    %p29 = scmp.eq.s32.totalorder %s28, 0
    %s31 = sadd.s32 %s30, 1
    %s32 = scalar_select %p29, %s30, %s31
    %p35 = pneg %p29
    %p36 = scmp.eq.s32.totalorder %s8, 1
    %p37 = por %p35, %p36
    %p38 = scmp.ne.s32.totalorder %s30, %s33
    %p39 = scmp.eq.s32.totalorder %s8, 0
    %p40 = por %p38, %p39
    %p41 = scmp.ne.s32.totalorder %s30, %s33
    %p42 = scmp.eq.s32.totalorder %s13, 1
    %p43 = por %p41, %p42
    %p44 = scmp.ne.s32.totalorder %s33, %s34
    %p45 = scmp.eq.s32.totalorder %s13, 0
    %p46 = por %p44, %p45
    %p47 = scmp.ne.s32.totalorder %s33, %s34
    %p48 = scmp.eq.s32.totalorder %s14, 1
    %p49 = por %p47, %p48
    %p51 = scmp.ne.s32.totalorder %s34, %s50
    %p52 = scmp.eq.s32.totalorder %s14, 0
    %p53 = por %p51, %p52
    %s54 = ssub.s32 %s15, %s27
    %p55 = scmp.eq.s32.totalorder %s54, 0
    %s57 = sadd.s32 %s56, 1
    %s58 = scalar_select %p55, %s56, %s57
    %p61 = pneg %p55
    %p62 = scmp.eq.s32.totalorder %s8, 1
    %p63 = por %p61, %p62
    %p64 = scmp.ne.s32.totalorder %s56, %s59
    %p65 = scmp.eq.s32.totalorder %s8, 0
    %p66 = por %p64, %p65
    %p67 = scmp.ne.s32.totalorder %s56, %s59
    %p68 = scmp.eq.s32.totalorder %s13, 1
    %p69 = por %p67, %p68
    %p70 = scmp.ne.s32.totalorder %s59, %s60
    %p71 = scmp.eq.s32.totalorder %s13, 0
    %p72 = por %p70, %p71
    %p73 = scmp.ne.s32.totalorder %s59, %s60
    %p74 = scmp.eq.s32.totalorder %s14, 1
    %p75 = por %p73, %p74
    %p77 = scmp.ne.s32.totalorder %s60, %s76
    %p78 = scmp.eq.s32.totalorder %s14, 0
    %p79 = por %p77, %p78
    %s80 = ssub.s32 %s15, %s27
    %s81 = ssub.s32 %s16, %s23
    %s82 = sor.u32 %s80, %s81
    %p83 = scmp.eq.s32.totalorder %s82, 0
    %s85 = sadd.s32 %s84, 1
    %s86 = scalar_select %p83, %s84, %s85
    %p89 = pneg %p83
    %p90 = scmp.eq.s32.totalorder %s8, 1
    %p91 = por %p89, %p90
    %p92 = scmp.ne.s32.totalorder %s84, %s87
    %p93 = scmp.eq.s32.totalorder %s8, 0
    %p94 = por %p92, %p93
    %p95 = scmp.ne.s32.totalorder %s84, %s87
    %p96 = scmp.eq.s32.totalorder %s13, 1
    %p97 = por %p95, %p96
    %p98 = scmp.ne.s32.totalorder %s87, %s88
    %p99 = scmp.eq.s32.totalorder %s13, 0
    %p100 = por %p98, %p99
    %p101 = scmp.ne.s32.totalorder %s87, %s88
    %p102 = scmp.eq.s32.totalorder %s14, 1
    %p103 = por %p101, %p102
    %p105 = scmp.ne.s32.totalorder %s88, %s104
    %p106 = scmp.eq.s32.totalorder %s14, 0
    %p107 = por %p105, %p106
    %p108 = scmp.le.s32.totalorder 1, %s8
    %p109 = scmp.lt.s32.totalorder %s8, 3
    %p110 = pnand %p108, %p109
    %p111 = pneg %p110
    // Predicated region
    $region9: #{tpu_custom_call.1} parent=5 // pred_check
      _
    $region10: #{tpu_custom_call.1} parent=5 // pred_check_branch
      %113 = sbr.rel (%p110) target = $region12
    $region11: #{tpu_custom_call.1} parent=5 // pred_region
      %s114 = ssub.s32 %s8, 1
      // Predicated region
      $region13: #{tpu_custom_call.1} parent=11 // pred_check
        %p115 = pneg %p72
      $region14: #{tpu_custom_call.1} parent=11 // pred_check_branch
        %117 = sbr.rel (%p115) target = $region16
      $region15: #{tpu_custom_call.1} parent=11 // pred_region
        %p118 = scmp.lt.s32.totalorder %s17, 0
        %s119 = scalar_select %p118, %s17, 0
        %s120 = smul.addr %s119, 192
        %s121 = smul.addr %s120, 8
        %s122 = scalar_lea.vmem %s1, %s121
      $region16: #{tpu_custom_call.1} parent=11 // pred_fallthru
        _
    $region12: #{tpu_custom_call.1} parent=5 // pred_fallthru
      _
    %p123 = scmp.lt.s32.totalorder %s8, 2
    // Predicated region
    $region17: #{tpu_custom_call.1} parent=5 // pred_check
      %p124 = pneg %p123
    $region18: #{tpu_custom_call.1} parent=5 // pred_check_branch
      %126 = sbr.rel (%p124) target = $region20
    $region19: #{tpu_custom_call.1} parent=5 // pred_region
      // Predicated region
      $region21: #{tpu_custom_call.1} parent=19 // pred_check
        %p127 = pneg %p40
      $region22: #{tpu_custom_call.1} parent=19 // pred_check_branch
        %129 = sbr.rel (%p127) target = $region24
      $region23: #{tpu_custom_call.1} parent=19 // pred_region
        %s130 = smul.u32 12, %s16
        %p131 = scmp.lt.s32.totalorder %s130, 23
        %s132 = scalar_select %p131, %s130, 23
        %s133 = smul.addr %s132, 6
        %s134 = smul.addr %s133, 8
        %s135 = scalar_lea.vmem %s0, %s134
        %s136 = smul.u32 12, %s16
      $region24: #{tpu_custom_call.1} parent=19 // pred_fallthru
        _
    $region20: #{tpu_custom_call.1} parent=5 // pred_fallthru
      _
    %p137 = scmp.le.s32.totalorder 1, %s8
    %p138 = scmp.lt.s32.totalorder %s8, 3
    %p139 = pnand %p137, %p138
    %p140 = pneg %p139
    // Predicated region
    $region25: #{tpu_custom_call.1} parent=5 // pred_check
      _
    $region26: #{tpu_custom_call.1} parent=5 // pred_check_branch
      %142 = sbr.rel (%p139) target = $region28
    $region27: #{tpu_custom_call.1} parent=5 // pred_region
      %s143 = ssub.s32 %s8, 1
      %s144 = smul.u32 12, %s18
      %p145 = scmp.lt.s32.totalorder %s144, 23
      %s146 = scalar_select %p145, %s144, 23
      %s147 = smul.addr %s146, 6
      %s148 = smul.addr %s147, 8
      %s149 = scalar_lea.vmem %s0, %s148
      %p150 = pneg %p46
      %p151 = pneg %p43
      %p152 = scmp.lt.s32.totalorder %s17, 0
      %s153 = scalar_select %p152, %s17, 0
      %s154 = smul.addr %s153, 192
      %s155 = smul.addr %s154, 8
      %s156 = scalar_lea.vmem %s1, %s155
      %p157 = pneg %p72
      %p158 = pneg %p69
      %p159 = pneg %p100
      %p160 = pneg %p97
      %s161 = smul.u32 12, %s18
      %p162 = scmp.lt.s32.totalorder %s17, 0
      %s163 = scalar_select %p162, %s17, 0
      %p164 = scmp.lt.s32.totalorder %s161, 23
      %s165 = scalar_select %p164, %s161, 23
      %s166 = smul.addr %s165, 2
      %s167 = smul.addr %s163, 48
      %s168 = sadd.s32 %s166, %s167
      %s169 = smul.addr %s168, 8
      %s170 = scalar_lea.vmem %s2, %s169
      %s171 = smul.u32 12, %s18
      %p172 = scmp.lt.s32.totalorder %s171, 23
      %s173 = scalar_select %p172, %s171, 23
      %s174 = smul.addr %s173, 6
      %s175 = smul.addr %s174, 8
      %s176 = scalar_lea.vmem %s0, %s175
      %s177 = smul.u32 12, %s18
      %p178 = scmp.lt.s32.totalorder %s17, 0
      %s179 = scalar_select %p178, %s17, 0
      %s180 = smul.addr %s179, 192
      %s181 = smul.addr %s180, 8
      %s182 = scalar_lea.vmem %s1, %s181
      %s183 = smul.u32 12, %s18
      %p184 = scmp.lt.s32.totalorder %s17, 0
      %s185 = scalar_select %p184, %s17, 0
      %p186 = scmp.lt.s32.totalorder %s183, 23
      %s187 = scalar_select %p186, %s183, 23
      %s188 = smul.addr %s187, 2
      %s189 = smul.addr %s185, 48
      %s190 = sadd.s32 %s188, %s189
      %s191 = smul.addr %s190, 8
      %s192 = scalar_lea.vmem %s2, %s191
      %s193 = smul.u32 12, %s18
      %v194 = vld [vmem:[%s176] sm:$0xff]
      %v195 = vld [vmem:[%s176 + $0x8] sm:$0xff]
      %v196 = vld [vmem:[%s176 + $0x10] sm:$0xff]
      %v197 = vld [vmem:[%s176 + $0x18] sm:$0xff]
      %v198 = vld [vmem:[%s176 + $0x20] sm:$0xff]
      %v199 = vld [vmem:[%s176 + $0x28] sm:$0xff]
      %v200 = vld [vmem:[%s176 + $0x30] sm:$0xff]
      %v201 = vld [vmem:[%s176 + $0x38] sm:$0xff]
      %v202 = vld [vmem:[%s176 + $0x40] sm:$0xff]
      %v203 = vld [vmem:[%s176 + $0x48] sm:$0xff]
      %v204 = vld [vmem:[%s176 + $0x50] sm:$0xff]
      %v205 = vld [vmem:[%s176 + $0x58] sm:$0xff]
      %v206 = vld [vmem:[%s176 + $0x60] sm:$0xff]
      %v207 = vld [vmem:[%s176 + $0x68] sm:$0xff]
      %v208 = vld [vmem:[%s176 + $0x70] sm:$0xff]
      %v209 = vld [vmem:[%s176 + $0x78] sm:$0xff]
      %v210 = vld [vmem:[%s176 + $0x80] sm:$0xff]
      %v211 = vld [vmem:[%s176 + $0x88] sm:$0xff]
      %v212 = vld [vmem:[%s176 + $0x90] sm:$0xff]
      %v213 = vld [vmem:[%s176 + $0x98] sm:$0xff]
      %v214 = vld [vmem:[%s176 + $0xa0] sm:$0xff]
      %v215 = vld [vmem:[%s176 + $0xa8] sm:$0xff]
      %v216 = vld [vmem:[%s176 + $0xb0] sm:$0xff]
      %v217 = vld [vmem:[%s176 + $0xb8] sm:$0xff]
      %v218 = vld [vmem:[%s176 + $0xc0] sm:$0xff]
      %v219 = vld [vmem:[%s176 + $0xc8] sm:$0xff]
      %v220 = vld [vmem:[%s176 + $0xd0] sm:$0xff]
      %v221 = vld [vmem:[%s176 + $0xd8] sm:$0xff]
      %v222 = vld [vmem:[%s176 + $0xe0] sm:$0xff]
      %v223 = vld [vmem:[%s176 + $0xe8] sm:$0xff]
      %v224 = vld [vmem:[%s176 + $0xf0] sm:$0xff]
      %v225 = vld [vmem:[%s176 + $0xf8] sm:$0xff]
      %v226 = vld [vmem:[%s176 + $0x100] sm:$0xff]
      %v227 = vld [vmem:[%s176 + $0x108] sm:$0xff]
      %v228 = vld [vmem:[%s176 + $0x110] sm:$0xff]
      %v229 = vld [vmem:[%s176 + $0x118] sm:$0xff]
      %v230 = vld [vmem:[%s176 + $0x120] sm:$0xff]
      %v231 = vld [vmem:[%s176 + $0x128] sm:$0xff]
      %v232 = vld [vmem:[%s176 + $0x130] sm:$0xff]
      %v233 = vld [vmem:[%s176 + $0x138] sm:$0xff]
      %v234 = vld [vmem:[%s176 + $0x140] sm:$0xff]
      %v235 = vld [vmem:[%s176 + $0x148] sm:$0xff]
      %v236 = vld [vmem:[%s176 + $0x150] sm:$0xff]
      %v237 = vld [vmem:[%s176 + $0x158] sm:$0xff]
      %v238 = vld [vmem:[%s176 + $0x160] sm:$0xff]
      %v239 = vld [vmem:[%s176 + $0x168] sm:$0xff]
      %v240 = vld [vmem:[%s176 + $0x170] sm:$0xff]
      %v241 = vld [vmem:[%s176 + $0x178] sm:$0xff]
      %v242 = vld [vmem:[%s176 + $0x180] sm:$0xff]
      %v243 = vld [vmem:[%s176 + $0x188] sm:$0xff]
      %v244 = vld [vmem:[%s176 + $0x190] sm:$0xff]
      %v245 = vld [vmem:[%s176 + $0x198] sm:$0xff]
      %v246 = vld [vmem:[%s176 + $0x1a0] sm:$0xff]
      %v247 = vld [vmem:[%s176 + $0x1a8] sm:$0xff]
      %v248 = vld [vmem:[%s176 + $0x1b0] sm:$0xff]
      %v249 = vld [vmem:[%s176 + $0x1b8] sm:$0xff]
      %v250 = vld [vmem:[%s176 + $0x1c0] sm:$0xff]
      %v251 = vld [vmem:[%s176 + $0x1c8] sm:$0xff]
      %v252 = vld [vmem:[%s176 + $0x1d0] sm:$0xff]
      %v253 = vld [vmem:[%s176 + $0x1d8] sm:$0xff]
      %v254 = vld [vmem:[%s176 + $0x1e0] sm:$0xff]
      %v255 = vld [vmem:[%s176 + $0x1e8] sm:$0xff]
      %v256 = vld [vmem:[%s176 + $0x1f0] sm:$0xff]
      %v257 = vld [vmem:[%s176 + $0x1f8] sm:$0xff]
      %v258 = vld [vmem:[%s176 + $0x200] sm:$0xff]
      %v259 = vld [vmem:[%s176 + $0x208] sm:$0xff]
      %v260 = vld [vmem:[%s176 + $0x210] sm:$0xff]
      %v261 = vld [vmem:[%s176 + $0x218] sm:$0xff]
      %v262 = vld [vmem:[%s176 + $0x220] sm:$0xff]
      %v263 = vld [vmem:[%s176 + $0x228] sm:$0xff]
      %v264 = vld [vmem:[%s176 + $0x230] sm:$0xff]
      %v265 = vld [vmem:[%s176 + $0x238] sm:$0xff]
      %v266 = vld [vmem:[%s182] sm:$0xff]
      %v267 = vld [vmem:[%s182 + $0x8] sm:$0xff]
      %v268 = vld [vmem:[%s182 + $0x10] sm:$0xff]
      %v269 = vld [vmem:[%s182 + $0x18] sm:$0xff]
      %v270 = vld [vmem:[%s182 + $0x20] sm:$0xff]
      %v271 = vld [vmem:[%s182 + $0x28] sm:$0xff]
      %v272 = vld [vmem:[%s182 + $0x30] sm:$0xff]
      %v273 = vld [vmem:[%s182 + $0x38] sm:$0xff]
      %v274 = vld [vmem:[%s182 + $0x40] sm:$0xff]
      %v275 = vld [vmem:[%s182 + $0x48] sm:$0xff]
      %v276 = vld [vmem:[%s182 + $0x50] sm:$0xff]
      %v277 = vld [vmem:[%s182 + $0x58] sm:$0xff]
      %v278 = vld [vmem:[%s182 + $0x60] sm:$0xff]
      %v279 = vld [vmem:[%s182 + $0x68] sm:$0xff]
      %v280 = vld [vmem:[%s182 + $0x70] sm:$0xff]
      %v281 = vld [vmem:[%s182 + $0x78] sm:$0xff]
      %v282 = vld [vmem:[%s182 + $0x80] sm:$0xff]
      %v283 = vld [vmem:[%s182 + $0x88] sm:$0xff]
      %v284 = vld [vmem:[%s182 + $0x90] sm:$0xff]
      %v285 = vld [vmem:[%s182 + $0x98] sm:$0xff]
      %v286 = vld [vmem:[%s182 + $0xa0] sm:$0xff]
      %v287 = vld [vmem:[%s182 + $0xa8] sm:$0xff]
      %v288 = vld [vmem:[%s182 + $0xb0] sm:$0xff]
      %v289 = vld [vmem:[%s182 + $0xb8] sm:$0xff]
      %v290 = vld [vmem:[%s182 + $0xc0] sm:$0xff]
      %v291 = vld [vmem:[%s182 + $0xc8] sm:$0xff]
      %v292 = vld [vmem:[%s182 + $0xd0] sm:$0xff]
      %v293 = vld [vmem:[%s182 + $0xd8] sm:$0xff]
      %v294 = vld [vmem:[%s182 + $0xe0] sm:$0xff]
      %v295 = vld [vmem:[%s182 + $0xe8] sm:$0xff]
      %v296 = vld [vmem:[%s182 + $0xf0] sm:$0xff]
      %v297 = vld [vmem:[%s182 + $0xf8] sm:$0xff]
      %v298 = vld [vmem:[%s182 + $0x100] sm:$0xff]
      %v299 = vld [vmem:[%s182 + $0x108] sm:$0xff]
      %v300 = vld [vmem:[%s182 + $0x110] sm:$0xff]
      %v301 = vld [vmem:[%s182 + $0x118] sm:$0xff]
      %v302 = vld [vmem:[%s182 + $0x120] sm:$0xff]
      %v303 = vld [vmem:[%s182 + $0x128] sm:$0xff]
      %v304 = vld [vmem:[%s182 + $0x130] sm:$0xff]
      %v305 = vld [vmem:[%s182 + $0x138] sm:$0xff]
      %v306 = vld [vmem:[%s182 + $0x140] sm:$0xff]
      %v307 = vld [vmem:[%s182 + $0x148] sm:$0xff]
      %v308 = vld [vmem:[%s182 + $0x150] sm:$0xff]
      %v309 = vld [vmem:[%s182 + $0x158] sm:$0xff]
      %v310 = vld [vmem:[%s182 + $0x160] sm:$0xff]
      %v311 = vld [vmem:[%s182 + $0x168] sm:$0xff]
      %v312 = vld [vmem:[%s182 + $0x170] sm:$0xff]
      %v313 = vld [vmem:[%s182 + $0x178] sm:$0xff]
      %v314 = vld [vmem:[%s182 + $0x180] sm:$0xff]
      %v315 = vld [vmem:[%s182 + $0x188] sm:$0xff]
      %v316 = vld [vmem:[%s182 + $0x190] sm:$0xff]
      %v317 = vld [vmem:[%s182 + $0x198] sm:$0xff]
      %v318 = vld [vmem:[%s182 + $0x1a0] sm:$0xff]
      %v319 = vld [vmem:[%s182 + $0x1a8] sm:$0xff]
      %v320 = vld [vmem:[%s182 + $0x1b0] sm:$0xff]
      %v321 = vld [vmem:[%s182 + $0x1b8] sm:$0xff]
      %v322 = vld [vmem:[%s182 + $0x1c0] sm:$0xff]
      %v323 = vld [vmem:[%s182 + $0x1c8] sm:$0xff]
      %v324 = vld [vmem:[%s182 + $0x1d0] sm:$0xff]
      %v325 = vld [vmem:[%s182 + $0x1d8] sm:$0xff]
      %v326 = vld [vmem:[%s182 + $0x1e0] sm:$0xff]
      %v327 = vld [vmem:[%s182 + $0x1e8] sm:$0xff]
      %v328 = vld [vmem:[%s182 + $0x1f0] sm:$0xff]
      %v329 = vld [vmem:[%s182 + $0x1f8] sm:$0xff]
      %v330 = vld [vmem:[%s182 + $0x200] sm:$0xff]
      %v331 = vld [vmem:[%s182 + $0x208] sm:$0xff]
      %v332 = vld [vmem:[%s182 + $0x210] sm:$0xff]
      %v333 = vld [vmem:[%s182 + $0x218] sm:$0xff]
      %v334 = vld [vmem:[%s182 + $0x220] sm:$0xff]
      %v335 = vld [vmem:[%s182 + $0x228] sm:$0xff]
      %v336 = vld [vmem:[%s182 + $0x230] sm:$0xff]
      %v337 = vld [vmem:[%s182 + $0x238] sm:$0xff]
      %v338 = vld [vmem:[%s182 + $0x240] sm:$0xff]
      %v339 = vld [vmem:[%s182 + $0x248] sm:$0xff]
      %v340 = vld [vmem:[%s182 + $0x250] sm:$0xff]
      %v341 = vld [vmem:[%s182 + $0x258] sm:$0xff]
      %v342 = vld [vmem:[%s182 + $0x260] sm:$0xff]
      %v343 = vld [vmem:[%s182 + $0x268] sm:$0xff]
      %v344 = vld [vmem:[%s182 + $0x270] sm:$0xff]
      %v345 = vld [vmem:[%s182 + $0x278] sm:$0xff]
      %v346 = vld [vmem:[%s182 + $0x280] sm:$0xff]
      %v347 = vld [vmem:[%s182 + $0x288] sm:$0xff]
      %v348 = vld [vmem:[%s182 + $0x290] sm:$0xff]
      %v349 = vld [vmem:[%s182 + $0x298] sm:$0xff]
      %v350 = vld [vmem:[%s182 + $0x2a0] sm:$0xff]
      %v351 = vld [vmem:[%s182 + $0x2a8] sm:$0xff]
      %v352 = vld [vmem:[%s182 + $0x2b0] sm:$0xff]
      %v353 = vld [vmem:[%s182 + $0x2b8] sm:$0xff]
      %v354 = vld [vmem:[%s182 + $0x2c0] sm:$0xff]
      %v355 = vld [vmem:[%s182 + $0x2c8] sm:$0xff]
      %v356 = vld [vmem:[%s182 + $0x2d0] sm:$0xff]
      %v357 = vld [vmem:[%s182 + $0x2d8] sm:$0xff]
      %v358 = vld [vmem:[%s182 + $0x2e0] sm:$0xff]
      %v359 = vld [vmem:[%s182 + $0x2e8] sm:$0xff]
      %v360 = vld [vmem:[%s182 + $0x2f0] sm:$0xff]
      %v361 = vld [vmem:[%s182 + $0x2f8] sm:$0xff]
      %v362 = vld [vmem:[%s182 + $0x300] sm:$0xff]
      %v363 = vld [vmem:[%s182 + $0x308] sm:$0xff]
      %v364 = vld [vmem:[%s182 + $0x310] sm:$0xff]
      %v365 = vld [vmem:[%s182 + $0x318] sm:$0xff]
      %v366 = vld [vmem:[%s182 + $0x320] sm:$0xff]
      %v367 = vld [vmem:[%s182 + $0x328] sm:$0xff]
      %v368 = vld [vmem:[%s182 + $0x330] sm:$0xff]
      %v369 = vld [vmem:[%s182 + $0x338] sm:$0xff]
      %v370 = vld [vmem:[%s182 + $0x340] sm:$0xff]
      %v371 = vld [vmem:[%s182 + $0x348] sm:$0xff]
      %v372 = vld [vmem:[%s182 + $0x350] sm:$0xff]
      %v373 = vld [vmem:[%s182 + $0x358] sm:$0xff]
      %v374 = vld [vmem:[%s182 + $0x360] sm:$0xff]
      %v375 = vld [vmem:[%s182 + $0x368] sm:$0xff]
      %v376 = vld [vmem:[%s182 + $0x370] sm:$0xff]
      %v377 = vld [vmem:[%s182 + $0x378] sm:$0xff]
      %v378 = vld [vmem:[%s182 + $0x380] sm:$0xff]
      %v379 = vld [vmem:[%s182 + $0x388] sm:$0xff]
      %v380 = vld [vmem:[%s182 + $0x390] sm:$0xff]
      %v381 = vld [vmem:[%s182 + $0x398] sm:$0xff]
      %v382 = vld [vmem:[%s182 + $0x3a0] sm:$0xff]
      %v383 = vld [vmem:[%s182 + $0x3a8] sm:$0xff]
      %v384 = vld [vmem:[%s182 + $0x3b0] sm:$0xff]
      %v385 = vld [vmem:[%s182 + $0x3b8] sm:$0xff]
      %v386 = vld [vmem:[%s182 + $0x3c0] sm:$0xff]
      %v387 = vld [vmem:[%s182 + $0x3c8] sm:$0xff]
      %v388 = vld [vmem:[%s182 + $0x3d0] sm:$0xff]
      %v389 = vld [vmem:[%s182 + $0x3d8] sm:$0xff]
      %v390 = vld [vmem:[%s182 + $0x3e0] sm:$0xff]
      %v391 = vld [vmem:[%s182 + $0x3e8] sm:$0xff]
      %v392 = vld [vmem:[%s182 + $0x3f0] sm:$0xff]
      %v393 = vld [vmem:[%s182 + $0x3f8] sm:$0xff]
      %v394 = vld [vmem:[%s182 + $0x400] sm:$0xff]
      %v395 = vld [vmem:[%s182 + $0x408] sm:$0xff]
      %v396 = vld [vmem:[%s182 + $0x410] sm:$0xff]
      %v397 = vld [vmem:[%s182 + $0x418] sm:$0xff]
      %v398 = vld [vmem:[%s182 + $0x420] sm:$0xff]
      %v399 = vld [vmem:[%s182 + $0x428] sm:$0xff]
      %v400 = vld [vmem:[%s182 + $0x430] sm:$0xff]
      %v401 = vld [vmem:[%s182 + $0x438] sm:$0xff]
      %v402 = vld [vmem:[%s182 + $0x440] sm:$0xff]
      %v403 = vld [vmem:[%s182 + $0x448] sm:$0xff]
      %v404 = vld [vmem:[%s182 + $0x450] sm:$0xff]
      %v405 = vld [vmem:[%s182 + $0x458] sm:$0xff]
      %v406 = vld [vmem:[%s182 + $0x460] sm:$0xff]
      %v407 = vld [vmem:[%s182 + $0x468] sm:$0xff]
      %v408 = vld [vmem:[%s182 + $0x470] sm:$0xff]
      %v409 = vld [vmem:[%s182 + $0x478] sm:$0xff]
      %v410 = vld [vmem:[%s182 + $0x480] sm:$0xff]
      %v411 = vld [vmem:[%s182 + $0x488] sm:$0xff]
      %v412 = vld [vmem:[%s182 + $0x490] sm:$0xff]
      %v413 = vld [vmem:[%s182 + $0x498] sm:$0xff]
      %v414 = vld [vmem:[%s182 + $0x4a0] sm:$0xff]
      %v415 = vld [vmem:[%s182 + $0x4a8] sm:$0xff]
      %v416 = vld [vmem:[%s182 + $0x4b0] sm:$0xff]
      %v417 = vld [vmem:[%s182 + $0x4b8] sm:$0xff]
      %v418 = vld [vmem:[%s182 + $0x4c0] sm:$0xff]
      %v419 = vld [vmem:[%s182 + $0x4c8] sm:$0xff]
      %v420 = vld [vmem:[%s182 + $0x4d0] sm:$0xff]
      %v421 = vld [vmem:[%s182 + $0x4d8] sm:$0xff]
      %v422 = vld [vmem:[%s182 + $0x4e0] sm:$0xff]
      %v423 = vld [vmem:[%s182 + $0x4e8] sm:$0xff]
      %v424 = vld [vmem:[%s182 + $0x4f0] sm:$0xff]
      %v425 = vld [vmem:[%s182 + $0x4f8] sm:$0xff]
      %v426 = vld [vmem:[%s182 + $0x500] sm:$0xff]
      %v427 = vld [vmem:[%s182 + $0x508] sm:$0xff]
      %v428 = vld [vmem:[%s182 + $0x510] sm:$0xff]
      %v429 = vld [vmem:[%s182 + $0x518] sm:$0xff]
      %v430 = vld [vmem:[%s182 + $0x520] sm:$0xff]
      %v431 = vld [vmem:[%s182 + $0x528] sm:$0xff]
      %v432 = vld [vmem:[%s182 + $0x530] sm:$0xff]
      %v433 = vld [vmem:[%s182 + $0x538] sm:$0xff]
      %v434 = vld [vmem:[%s182 + $0x540] sm:$0xff]
      %v435 = vld [vmem:[%s182 + $0x548] sm:$0xff]
      %v436 = vld [vmem:[%s182 + $0x550] sm:$0xff]
      %v437 = vld [vmem:[%s182 + $0x558] sm:$0xff]
      %v438 = vld [vmem:[%s182 + $0x560] sm:$0xff]
      %v439 = vld [vmem:[%s182 + $0x568] sm:$0xff]
      %v440 = vld [vmem:[%s182 + $0x570] sm:$0xff]
      %v441 = vld [vmem:[%s182 + $0x578] sm:$0xff]
      %v442 = vld [vmem:[%s182 + $0x580] sm:$0xff]
      %v443 = vld [vmem:[%s182 + $0x588] sm:$0xff]
      %v444 = vld [vmem:[%s182 + $0x590] sm:$0xff]
      %v445 = vld [vmem:[%s182 + $0x598] sm:$0xff]
      %v446 = vld [vmem:[%s182 + $0x5a0] sm:$0xff]
      %v447 = vld [vmem:[%s182 + $0x5a8] sm:$0xff]
      %v448 = vld [vmem:[%s182 + $0x5b0] sm:$0xff]
      %v449 = vld [vmem:[%s182 + $0x5b8] sm:$0xff]
      %v450 = vld [vmem:[%s182 + $0x5c0] sm:$0xff]
      %v451 = vld [vmem:[%s182 + $0x5c8] sm:$0xff]
      %v452 = vld [vmem:[%s182 + $0x5d0] sm:$0xff]
      %v453 = vld [vmem:[%s182 + $0x5d8] sm:$0xff]
      %v454 = vld [vmem:[%s182 + $0x5e0] sm:$0xff]
      %v455 = vld [vmem:[%s182 + $0x5e8] sm:$0xff]
      %v456 = vld [vmem:[%s182 + $0x5f0] sm:$0xff]
      %v457 = vld [vmem:[%s182 + $0x5f8] sm:$0xff]
      %v458 = vand.u32 %v267, 4294901760
      %459 = vmatprep.subr.mxu0 %v458
      %v460 = vand.u32 %v266, 4294901760
      %461 = vmatpush1.msra.mxu0 %v460
      %v462 = vand.u32 %v269, 4294901760
      %463 = vmatprep.subr.mxu0 %v462
      %v464 = vand.u32 %v268, 4294901760
      %465 = vmatpush1.msra.mxu0 %v464
      %v466 = vand.u32 %v271, 4294901760
      %467 = vmatprep.subr.mxu0 %v466
      %v468 = vand.u32 %v270, 4294901760
      %469 = vmatpush1.msra.mxu0 %v468
      %v470 = vand.u32 %v273, 4294901760
      %471 = vmatprep.subr.mxu0 %v470
      %v472 = vand.u32 %v272, 4294901760
      %473 = vmatpush1.msra.mxu0 %v472
      %v474 = vand.u32 %v275, 4294901760
      %475 = vmatprep.subr.mxu0 %v474
      %v476 = vand.u32 %v274, 4294901760
      %477 = vmatpush1.msra.mxu0 %v476
      %v478 = vand.u32 %v277, 4294901760
      %479 = vmatprep.subr.mxu0 %v478
      %v480 = vand.u32 %v276, 4294901760
      %481 = vmatpush1.msra.mxu0 %v480
      %v482 = vand.u32 %v279, 4294901760
      %483 = vmatprep.subr.mxu0 %v482
      %v484 = vand.u32 %v278, 4294901760
      %485 = vmatpush1.msra.mxu0 %v484
      %v486 = vand.u32 %v281, 4294901760
      %487 = vmatprep.subr.mxu0 %v486
      %v488 = vand.u32 %v280, 4294901760
      %489 = vmatpush1.msra.mxu0 %v488
      %v490 = vand.u32 %v283, 4294901760
      %491 = vmatprep.subr.mxu0 %v490
      %v492 = vand.u32 %v282, 4294901760
      %493 = vmatpush1.msra.mxu0 %v492
      %v494 = vand.u32 %v285, 4294901760
      %495 = vmatprep.subr.mxu0 %v494
      %v496 = vand.u32 %v284, 4294901760
      %497 = vmatpush1.msra.mxu0 %v496
      %v498 = vand.u32 %v287, 4294901760
      %499 = vmatprep.subr.mxu0 %v498
      %v500 = vand.u32 %v286, 4294901760
      %501 = vmatpush1.msra.mxu0 %v500
      %v502 = vand.u32 %v289, 4294901760
      %503 = vmatprep.subr.mxu0 %v502
      %v504 = vand.u32 %v288, 4294901760
      %505 = vmatpush1.msra.mxu0 %v504
      %v506 = vand.u32 %v291, 4294901760
      %507 = vmatprep.subr.mxu0 %v506
      %v508 = vand.u32 %v290, 4294901760
      %509 = vmatpush1.msra.mxu0 %v508
      %v510 = vand.u32 %v293, 4294901760
      %511 = vmatprep.subr.mxu0 %v510
      %v512 = vand.u32 %v292, 4294901760
      %513 = vmatpush1.msra.mxu0 %v512
      %v514 = vand.u32 %v295, 4294901760
      %515 = vmatprep.subr.mxu0 %v514
      %v516 = vand.u32 %v294, 4294901760
      %517 = vmatpush1.msra.mxu0 %v516
      %v518 = vand.u32 %v297, 4294901760
      %519 = vmatprep.subr.mxu0 %v518
      %v520 = vand.u32 %v296, 4294901760
      %521 = vmatpush1.msra.mxu0 %v520
      %v522 = vand.u32 %v299, 4294901760
      %523 = vmatprep.subr.mxu0 %v522
      %v524 = vand.u32 %v298, 4294901760
      %525 = vmatpush1.msra.mxu0 %v524
      %v526 = vand.u32 %v301, 4294901760
      %527 = vmatprep.subr.mxu0 %v526
      %v528 = vand.u32 %v300, 4294901760
      %529 = vmatpush1.msra.mxu0 %v528
      %v530 = vand.u32 %v303, 4294901760
      %531 = vmatprep.subr.mxu0 %v530
      %v532 = vand.u32 %v302, 4294901760
      %533 = vmatpush1.msra.mxu0 %v532
      %v534 = vand.u32 %v305, 4294901760
      %535 = vmatprep.subr.mxu0 %v534
      %v536 = vand.u32 %v304, 4294901760
      %537 = vmatpush1.msra.mxu0 %v536
      %v538 = vand.u32 %v307, 4294901760
      %539 = vmatprep.subr.mxu0 %v538
      %v540 = vand.u32 %v306, 4294901760
      %541 = vmatpush1.msra.mxu0 %v540
      %v542 = vand.u32 %v309, 4294901760
      %543 = vmatprep.subr.mxu0 %v542
      %v544 = vand.u32 %v308, 4294901760
      %545 = vmatpush1.msra.mxu0 %v544
      %v546 = vand.u32 %v311, 4294901760
      %547 = vmatprep.subr.mxu0 %v546
      %v548 = vand.u32 %v310, 4294901760
      %549 = vmatpush1.msra.mxu0 %v548
      %v550 = vand.u32 %v313, 4294901760
      %551 = vmatprep.subr.mxu0 %v550
      %v552 = vand.u32 %v312, 4294901760
      %553 = vmatpush1.msra.mxu0 %v552
      %v554 = vand.u32 %v315, 4294901760
      %555 = vmatprep.subr.mxu0 %v554
      %v556 = vand.u32 %v314, 4294901760
      %557 = vmatpush1.msra.mxu0 %v556
      %v558 = vand.u32 %v317, 4294901760
      %559 = vmatprep.subr.mxu0 %v558
      %v560 = vand.u32 %v316, 4294901760
      %561 = vmatpush1.msra.mxu0 %v560
      %v562 = vand.u32 %v319, 4294901760
      %563 = vmatprep.subr.mxu0 %v562
      %v564 = vand.u32 %v318, 4294901760
      %565 = vmatpush1.msra.mxu0 %v564
      %v566 = vand.u32 %v321, 4294901760
      %567 = vmatprep.subr.mxu0 %v566
      %v568 = vand.u32 %v320, 4294901760
      %569 = vmatpush1.msra.mxu0 %v568
      %v570 = vand.u32 %v323, 4294901760
      %571 = vmatprep.subr.mxu0 %v570
      %v572 = vand.u32 %v322, 4294901760
      %573 = vmatpush1.msra.mxu0 %v572
      %v574 = vand.u32 %v325, 4294901760
      %575 = vmatprep.subr.mxu0 %v574
      %v576 = vand.u32 %v324, 4294901760
      %577 = vmatpush1.msra.mxu0 %v576
      %v578 = vand.u32 %v327, 4294901760
      %579 = vmatprep.subr.mxu0 %v578
      %v580 = vand.u32 %v326, 4294901760
      %581 = vmatpush1.msra.mxu0 %v580
      %v582 = vand.u32 %v329, 4294901760
      %583 = vmatprep.subr.mxu0 %v582
      %v584 = vand.u32 %v328, 4294901760
      %585 = vmatpush1.msra.mxu0 %v584
      %v586 = vand.u32 %v195, 4294901760
      %v587 = vsub.f32 %v195, %v586
      %v588 = vand.u32 %v587, 4294901760
      %v589 = vsub.f32 %v587, %v588
      %v590 = vand.u32 %v589, 4294901760
      %591 = vmatprep.mubr.f32.mxu0 %v590
      %v592 = vand.u32 %v194, 4294901760
      %v593 = vsub.f32 %v194, %v592
      %v594 = vand.u32 %v593, 4294901760
      %v595 = vsub.f32 %v593, %v594
      %v596 = vand.u32 %v595, 4294901760
      %597 = vmatmul.mubr.f32.gmra.mrb[0].mxu0 %v596
      %v598 = vpop.f32.mrb[0].mxu0
      %v599 = vadd.f32 0.0, %v598
      %v600 = vpop.f32.mrb[0].mxu0
      %v601 = vadd.f32 0.0, %v600
      %v602 = vand.u32 %v201, 4294901760
      %v603 = vsub.f32 %v201, %v602
      %v604 = vand.u32 %v603, 4294901760
      %v605 = vsub.f32 %v603, %v604
      %v606 = vand.u32 %v605, 4294901760
      %607 = vmatprep.mubr.f32.mxu0 %v606
      %v608 = vand.u32 %v200, 4294901760
      %v609 = vsub.f32 %v200, %v608
      %v610 = vand.u32 %v609, 4294901760
      %v611 = vsub.f32 %v609, %v610
      %v612 = vand.u32 %v611, 4294901760
      %613 = vmatmul.mubr.f32.gmra.mrb[0].mxu0 %v612
      %v614 = vpop.f32.mrb[0].mxu0
      %v615 = vadd.f32 0.0, %v614
      %v616 = vpop.f32.mrb[0].mxu0
      %v617 = vadd.f32 0.0, %v616
      %v618 = vand.u32 %v207, 4294901760
      %v619 = vsub.f32 %v207, %v618
      %v620 = vand.u32 %v619, 4294901760
      %v621 = vsub.f32 %v619, %v620
      %v622 = vand.u32 %v621, 4294901760
      %623 = vmatprep.mubr.f32.mxu0 %v622
      %v624 = vand.u32 %v206, 4294901760
      %v625 = vsub.f32 %v206, %v624
      %v626 = vand.u32 %v625, 4294901760
      %v627 = vsub.f32 %v625, %v626
      %v628 = vand.u32 %v627, 4294901760
      %629 = vmatmul.mubr.f32.gmra.mrb[0].mxu0 %v628
      %v630 = vpop.f32.mrb[0].mxu0
      %v631 = vadd.f32 0.0, %v630
      %v632 = vpop.f32.mrb[0].mxu0
      %v633 = vadd.f32 0.0, %v632
      %v634 = vand.u32 %v213, 4294901760
      %v635 = vsub.f32 %v213, %v634
      %v636 = vand.u32 %v635, 4294901760
      %v637 = vsub.f32 %v635, %v636
      %v638 = vand.u32 %v637, 4294901760
      %639 = vmatprep.mubr.f32.mxu0 %v638
      %v640 = vand.u32 %v212, 4294901760
      %v641 = vsub.f32 %v212, %v640
      %v642 = vand.u32 %v641, 4294901760
      %v643 = vsub.f32 %v641, %v642
      %v644 = vand.u32 %v643, 4294901760
      %645 = vmatmul.mubr.f32.gmra.mrb[0].mxu0 %v644
      %v646 = vpop.f32.mrb[0].mxu0
      %v647 = vadd.f32 0.0, %v646
      %v648 = vpop.f32.mrb[0].mxu0
      %v649 = vadd.f32 0.0, %v648
      %v650 = vand.u32 %v219, 4294901760
      %v651 = vsub.f32 %v219, %v650
      %v652 = vand.u32 %v651, 4294901760
      %v653 = vsub.f32 %v651, %v652
      %v654 = vand.u32 %v653, 4294901760
      %655 = vmatprep.mubr.f32.mxu0 %v654
      %v656 = vand.u32 %v218, 4294901760
      %v657 = vsub.f32 %v218, %v656
      %v658 = vand.u32 %v657, 4294901760
      %v659 = vsub.f32 %v657, %v658
      %v660 = vand.u32 %v659, 4294901760
      %661 = vmatmul.mubr.f32.gmra.mrb[0].mxu0 %v660
      %v662 = vpop.f32.mrb[0].mxu0
      %v663 = vadd.f32 0.0, %v662
      %v664 = vpop.f32.mrb[0].mxu0
      %v665 = vadd.f32 0.0, %v664
      %v666 = vand.u32 %v225, 4294901760
      %v667 = vsub.f32 %v225, %v666
      %v668 = vand.u32 %v667, 4294901760
      %v669 = vsub.f32 %v667, %v668
      %v670 = vand.u32 %v669, 4294901760
      %671 = vmatprep.mubr.f32.mxu0 %v670
      %v672 = vand.u32 %v224, 4294901760
      %v673 = vsub.f32 %v224, %v672
      %v674 = vand.u32 %v673, 4294901760
      %v675 = vsub.f32 %v673, %v674
      %v676 = vand.u32 %v675, 4294901760
      %677 = vmatmul.mubr.f32.gmra.mrb[0].mxu0 %v676
      %v678 = vpop.f32.mrb[0].mxu0
      %v679 = vadd.f32 0.0, %v678
      %v680 = vpop.f32.mrb[0].mxu0
      %v681 = vadd.f32 0.0, %v680
      %v682 = vand.u32 %v231, 4294901760
      %v683 = vsub.f32 %v231, %v682
      %v684 = vand.u32 %v683, 4294901760
      %v685 = vsub.f32 %v683, %v684
      %v686 = vand.u32 %v685, 4294901760
      %687 = vmatprep.mubr.f32.mxu0 %v686
      %v688 = vand.u32 %v230, 4294901760
      %v689 = vsub.f32 %v230, %v688
      %v690 = vand.u32 %v689, 4294901760
      %v691 = vsub.f32 %v689, %v690
      %v692 = vand.u32 %v691, 4294901760
      %693 = vmatmul.mubr.f32.gmra.mrb[0].mxu0 %v692
      %v694 = vpop.f32.mrb[0].mxu0
      %v695 = vadd.f32 0.0, %v694
      %v696 = vpop.f32.mrb[0].mxu0
      %v697 = vadd.f32 0.0, %v696
      %v698 = vand.u32 %v237, 4294901760
      %v699 = vsub.f32 %v237, %v698
      %v700 = vand.u32 %v699, 4294901760
      %v701 = vsub.f32 %v699, %v700
      %v702 = vand.u32 %v701, 4294901760
      %703 = vmatprep.mubr.f32.mxu0 %v702
      %v704 = vand.u32 %v236, 4294901760
      %v705 = vsub.f32 %v236, %v704
      %v706 = vand.u32 %v705, 4294901760
      %v707 = vsub.f32 %v705, %v706
      %v708 = vand.u32 %v707, 4294901760
      %709 = vmatmul.mubr.f32.gmra.mrb[0].mxu0 %v708
      %v710 = vpop.f32.mrb[0].mxu0
      %v711 = vadd.f32 0.0, %v710
      %v712 = vpop.f32.mrb[0].mxu0
      %v713 = vadd.f32 0.0, %v712
      %v714 = vand.u32 %v243, 4294901760
      %v715 = vsub.f32 %v243, %v714
      %v716 = vand.u32 %v715, 4294901760
      %v717 = vsub.f32 %v715, %v716
      %v718 = vand.u32 %v717, 4294901760
      %719 = vmatprep.mubr.f32.mxu0 %v718
      %v720 = vand.u32 %v242, 4294901760
      %v721 = vsub.f32 %v242, %v720
      %v722 = vand.u32 %v721, 4294901760
      %v723 = vsub.f32 %v721, %v722
      %v724 = vand.u32 %v723, 4294901760
      %725 = vmatmul.mubr.f32.gmra.mrb[0].mxu0 %v724
      %v726 = vpop.f32.mrb[0].mxu0
      %v727 = vadd.f32 0.0, %v726
      %v728 = vpop.f32.mrb[0].mxu0
      %v729 = vadd.f32 0.0, %v728
      %v730 = vand.u32 %v249, 4294901760
      %v731 = vsub.f32 %v249, %v730
      %v732 = vand.u32 %v731, 4294901760
      %v733 = vsub.f32 %v731, %v732
      %v734 = vand.u32 %v733, 4294901760
      %735 = vmatprep.mubr.f32.mxu0 %v734
      %v736 = vand.u32 %v248, 4294901760
      %v737 = vsub.f32 %v248, %v736
      %v738 = vand.u32 %v737, 4294901760
      %v739 = vsub.f32 %v737, %v738
      %v740 = vand.u32 %v739, 4294901760
      %741 = vmatmul.mubr.f32.gmra.mrb[0].mxu0 %v740
      %v742 = vpop.f32.mrb[0].mxu0
      %v743 = vadd.f32 0.0, %v742
      %v744 = vpop.f32.mrb[0].mxu0
      %v745 = vadd.f32 0.0, %v744
      %v746 = vand.u32 %v255, 4294901760
      %v747 = vsub.f32 %v255, %v746
      %v748 = vand.u32 %v747, 4294901760
      %v749 = vsub.f32 %v747, %v748
      %v750 = vand.u32 %v749, 4294901760
      %751 = vmatprep.mubr.f32.mxu0 %v750
      %v752 = vand.u32 %v254, 4294901760
      %v753 = vsub.f32 %v254, %v752
      %v754 = vand.u32 %v753, 4294901760
      %v755 = vsub.f32 %v753, %v754
      %v756 = vand.u32 %v755, 4294901760
      %757 = vmatmul.mubr.f32.gmra.mrb[0].mxu0 %v756
      %v758 = vpop.f32.mrb[0].mxu0
      %v759 = vadd.f32 0.0, %v758
      %v760 = vpop.f32.mrb[0].mxu0
      %v761 = vadd.f32 0.0, %v760
      %v762 = vand.u32 %v261, 4294901760
      %v763 = vsub.f32 %v261, %v762
      %v764 = vand.u32 %v763, 4294901760
      %v765 = vsub.f32 %v763, %v764
      %v766 = vand.u32 %v765, 4294901760
      %767 = vmatprep.mubr.f32.mxu0 %v766
      %v768 = vand.u32 %v260, 4294901760
      %v769 = vsub.f32 %v260, %v768
      %v770 = vand.u32 %v769, 4294901760
      %v771 = vsub.f32 %v769, %v770
      %v772 = vand.u32 %v771, 4294901760
      %773 = vmatmul.mubr.f32.gmra.mrb[0].mxu0 %v772
      %v774 = vpop.f32.mrb[0].mxu0
      %v775 = vadd.f32 0.0, %v774
      %v776 = vpop.f32.mrb[0].mxu0
      %v777 = vadd.f32 0.0, %v776
      %778 = vdwg.mxu0
      %v779 = vand.u32 %v267, 4294901760
      %v780 = vsub.f32 %v267, %v779
      %v781 = vand.u32 %v780, 4294901760
      %v782 = vsub.f32 %v780, %v781
      %v783 = vand.u32 %v782, 4294901760
      %784 = vmatprep.subr.mxu0 %v783
      %v785 = vand.u32 %v266, 4294901760
      %v786 = vsub.f32 %v266, %v785
      %v787 = vand.u32 %v786, 4294901760
      %v788 = vsub.f32 %v786, %v787
      %v789 = vand.u32 %v788, 4294901760
      %790 = vmatpush1.msra.mxu0 %v789
      %v791 = vand.u32 %v269, 4294901760
      %v792 = vsub.f32 %v269, %v791
      %v793 = vand.u32 %v792, 4294901760
      %v794 = vsub.f32 %v792, %v793
      %v795 = vand.u32 %v794, 4294901760
      %796 = vmatprep.subr.mxu0 %v795
      %v797 = vand.u32 %v268, 4294901760
      %v798 = vsub.f32 %v268, %v797
      %v799 = vand.u32 %v798, 4294901760
      %v800 = vsub.f32 %v798, %v799
      %v801 = vand.u32 %v800, 4294901760
      %802 = vmatpush1.msra.mxu0 %v801
      %v803 = vand.u32 %v271, 4294901760
      %v804 = vsub.f32 %v271, %v803
      %v805 = vand.u32 %v804, 4294901760
      %v806 = vsub.f32 %v804, %v805
      %v807 = vand.u32 %v806, 4294901760
      %808 = vmatprep.subr.mxu0 %v807
      %v809 = vand.u32 %v270, 4294901760
      %v810 = vsub.f32 %v270, %v809
      %v811 = vand.u32 %v810, 4294901760
      %v812 = vsub.f32 %v810, %v811
      %v813 = vand.u32 %v812, 4294901760
      %814 = vmatpush1.msra.mxu0 %v813
      %v815 = vand.u32 %v273, 4294901760
      %v816 = vsub.f32 %v273, %v815
      %v817 = vand.u32 %v816, 4294901760
      %v818 = vsub.f32 %v816, %v817
      %v819 = vand.u32 %v818, 4294901760
      %820 = vmatprep.subr.mxu0 %v819
      %v821 = vand.u32 %v272, 4294901760
      %v822 = vsub.f32 %v272, %v821
      %v823 = vand.u32 %v822, 4294901760
      %v824 = vsub.f32 %v822, %v823
      %v825 = vand.u32 %v824, 4294901760
      %826 = vmatpush1.msra.mxu0 %v825
      %v827 = vand.u32 %v275, 4294901760
      %v828 = vsub.f32 %v275, %v827
      %v829 = vand.u32 %v828, 4294901760
      %v830 = vsub.f32 %v828, %v829
      %v831 = vand.u32 %v830, 4294901760
      %832 = vmatprep.subr.mxu0 %v831
      %v833 = vand.u32 %v274, 4294901760
      %v834 = vsub.f32 %v274, %v833
      %v835 = vand.u32 %v834, 4294901760
      %v836 = vsub.f32 %v834, %v835
      %v837 = vand.u32 %v836, 4294901760
      %838 = vmatpush1.msra.mxu0 %v837
      %v839 = vand.u32 %v277, 4294901760
      %v840 = vsub.f32 %v277, %v839
      %v841 = vand.u32 %v840, 4294901760
      %v842 = vsub.f32 %v840, %v841
      %v843 = vand.u32 %v842, 4294901760
      %844 = vmatprep.subr.mxu0 %v843
      %v845 = vand.u32 %v276, 4294901760
      %v846 = vsub.f32 %v276, %v845
      %v847 = vand.u32 %v846, 4294901760
      %v848 = vsub.f32 %v846, %v847
      %v849 = vand.u32 %v848, 4294901760
      %850 = vmatpush1.msra.mxu0 %v849
      %v851 = vand.u32 %v279, 4294901760
      %v852 = vsub.f32 %v279, %v851
      %v853 = vand.u32 %v852, 4294901760
      %v854 = vsub.f32 %v852, %v853
      %v855 = vand.u32 %v854, 4294901760
      %856 = vmatprep.subr.mxu0 %v855
      %v857 = vand.u32 %v278, 4294901760
      %v858 = vsub.f32 %v278, %v857
      %v859 = vand.u32 %v858, 4294901760
      %v860 = vsub.f32 %v858, %v859
      %v861 = vand.u32 %v860, 4294901760
      %862 = vmatpush1.msra.mxu0 %v861
      %v863 = vand.u32 %v281, 4294901760
      %v864 = vsub.f32 %v281, %v863
      %v865 = vand.u32 %v864, 4294901760
      %v866 = vsub.f32 %v864, %v865
      %v867 = vand.u32 %v866, 4294901760
      %868 = vmatprep.subr.mxu0 %v867
      %v869 = vand.u32 %v280, 4294901760
      %v870 = vsub.f32 %v280, %v869
      %v871 = vand.u32 %v870, 4294901760
      %v872 = vsub.f32 %v870, %v871
      %v873 = vand.u32 %v872, 4294901760
      %874 = vmatpush1.msra.mxu0 %v873
      %v875 = vand.u32 %v283, 4294901760
      %v876 = vsub.f32 %v283, %v875
      %v877 = vand.u32 %v876, 4294901760
      %v878 = vsub.f32 %v876, %v877
      %v879 = vand.u32 %v878, 4294901760
      %880 = vmatprep.subr.mxu0 %v879
      %v881 = vand.u32 %v282, 4294901760
      %v882 = vsub.f32 %v282, %v881
      %v883 = vand.u32 %v882, 4294901760
      %v884 = vsub.f32 %v882, %v883
      %v885 = vand.u32 %v884, 4294901760
      %886 = vmatpush1.msra.mxu0 %v885
      %v887 = vand.u32 %v285, 4294901760
      %v888 = vsub.f32 %v285, %v887
      %v889 = vand.u32 %v888, 4294901760
      %v890 = vsub.f32 %v888, %v889
      %v891 = vand.u32 %v890, 4294901760
      %892 = vmatprep.subr.mxu0 %v891
      %v893 = vand.u32 %v284, 4294901760
      %v894 = vsub.f32 %v284, %v893
      %v895 = vand.u32 %v894, 4294901760
      %v896 = vsub.f32 %v894, %v895
      %v897 = vand.u32 %v896, 4294901760
      %898 = vmatpush1.msra.mxu0 %v897
      %v899 = vand.u32 %v287, 4294901760
      %v900 = vsub.f32 %v287, %v899
      %v901 = vand.u32 %v900, 4294901760
      %v902 = vsub.f32 %v900, %v901
      %v903 = vand.u32 %v902, 4294901760
      %904 = vmatprep.subr.mxu0 %v903
      %v905 = vand.u32 %v286, 4294901760
      %v906 = vsub.f32 %v286, %v905
      %v907 = vand.u32 %v906, 4294901760
      %v908 = vsub.f32 %v906, %v907
      %v909 = vand.u32 %v908, 4294901760
      %910 = vmatpush1.msra.mxu0 %v909
      %v911 = vand.u32 %v289, 4294901760
      %v912 = vsub.f32 %v289, %v911
      %v913 = vand.u32 %v912, 4294901760
      %v914 = vsub.f32 %v912, %v913
      %v915 = vand.u32 %v914, 4294901760
      %916 = vmatprep.subr.mxu0 %v915
      %v917 = vand.u32 %v288, 4294901760
      %v918 = vsub.f32 %v288, %v917
      %v919 = vand.u32 %v918, 4294901760
      %v920 = vsub.f32 %v918, %v919
      %v921 = vand.u32 %v920, 4294901760
      %922 = vmatpush1.msra.mxu0 %v921
      %v923 = vand.u32 %v291, 4294901760
      %v924 = vsub.f32 %v291, %v923
      %v925 = vand.u32 %v924, 4294901760
      %v926 = vsub.f32 %v924, %v925
      %v927 = vand.u32 %v926, 4294901760
      %928 = vmatprep.subr.mxu0 %v927
      %v929 = vand.u32 %v290, 4294901760
      %v930 = vsub.f32 %v290, %v929
      %v931 = vand.u32 %v930, 4294901760
      %v932 = vsub.f32 %v930, %v931
      %v933 = vand.u32 %v932, 4294901760
      %934 = vmatpush1.msra.mxu0 %v933
      %v935 = vand.u32 %v293, 4294901760
      %v936 = vsub.f32 %v293, %v935
      %v937 = vand.u32 %v936, 4294901760
      %v938 = vsub.f32 %v936, %v937
      %v939 = vand.u32 %v938, 4294901760
      %940 = vmatprep.subr.mxu0 %v939
      %v941 = vand.u32 %v292, 4294901760
      %v942 = vsub.f32 %v292, %v941
      %v943 = vand.u32 %v942, 4294901760
      %v944 = vsub.f32 %v942, %v943
      %v945 = vand.u32 %v944, 4294901760
      %946 = vmatpush1.msra.mxu0 %v945
      %v947 = vand.u32 %v295, 4294901760
      %v948 = vsub.f32 %v295, %v947
      %v949 = vand.u32 %v948, 4294901760
      %v950 = vsub.f32 %v948, %v949
      %v951 = vand.u32 %v950, 4294901760
      %952 = vmatprep.subr.mxu0 %v951
      %v953 = vand.u32 %v294, 4294901760
      %v954 = vsub.f32 %v294, %v953
      %v955 = vand.u32 %v954, 4294901760
      %v956 = vsub.f32 %v954, %v955
      %v957 = vand.u32 %v956, 4294901760
      %958 = vmatpush1.msra.mxu0 %v957
      %v959 = vand.u32 %v297, 4294901760
      %v960 = vsub.f32 %v297, %v959
      %v961 = vand.u32 %v960, 4294901760
      %v962 = vsub.f32 %v960, %v961
      %v963 = vand.u32 %v962, 4294901760
      %964 = vmatprep.subr.mxu0 %v963
      %v965 = vand.u32 %v296, 4294901760
      %v966 = vsub.f32 %v296, %v965
      %v967 = vand.u32 %v966, 4294901760
      %v968 = vsub.f32 %v966, %v967
      %v969 = vand.u32 %v968, 4294901760
      %970 = vmatpush1.msra.mxu0 %v969
      %v971 = vand.u32 %v299, 4294901760
      %v972 = vsub.f32 %v299, %v971
      %v973 = vand.u32 %v972, 4294901760
      %v974 = vsub.f32 %v972, %v973
      %v975 = vand.u32 %v974, 4294901760
      %976 = vmatprep.subr.mxu0 %v975
      %v977 = vand.u32 %v298, 4294901760
      %v978 = vsub.f32 %v298, %v977
      %v979 = vand.u32 %v978, 4294901760
      %v980 = vsub.f32 %v978, %v979
      %v981 = vand.u32 %v980, 4294901760
      %982 = vmatpush1.msra.mxu0 %v981
      %v983 = vand.u32 %v301, 4294901760
      %v984 = vsub.f32 %v301, %v983
      %v985 = vand.u32 %v984, 4294901760
      %v986 = vsub.f32 %v984, %v985
      %v987 = vand.u32 %v986, 4294901760
      %988 = vmatprep.subr.mxu0 %v987
      %v989 = vand.u32 %v300, 4294901760
      %v990 = vsub.f32 %v300, %v989
      %v991 = vand.u32 %v990, 4294901760
      %v992 = vsub.f32 %v990, %v991
      %v993 = vand.u32 %v992, 4294901760
      %994 = vmatpush1.msra.mxu0 %v993
      %v995 = vand.u32 %v303, 4294901760
      %v996 = vsub.f32 %v303, %v995
      %v997 = vand.u32 %v996, 4294901760
      %v998 = vsub.f32 %v996, %v997
      %v999 = vand.u32 %v998, 4294901760
      %1000 = vmatprep.subr.mxu0 %v999
      %v1001 = vand.u32 %v302, 4294901760
      %v1002 = vsub.f32 %v302, %v1001
      %v1003 = vand.u32 %v1002, 4294901760
      %v1004 = vsub.f32 %v1002, %v1003
      %v1005 = vand.u32 %v1004, 4294901760
      %1006 = vmatpush1.msra.mxu0 %v1005
      %v1007 = vand.u32 %v305, 4294901760
      %v1008 = vsub.f32 %v305, %v1007
      %v1009 = vand.u32 %v1008, 4294901760
      %v1010 = vsub.f32 %v1008, %v1009
      %v1011 = vand.u32 %v1010, 4294901760
      %1012 = vmatprep.subr.mxu0 %v1011
      %v1013 = vand.u32 %v304, 4294901760
      %v1014 = vsub.f32 %v304, %v1013
      %v1015 = vand.u32 %v1014, 4294901760
      %v1016 = vsub.f32 %v1014, %v1015
      %v1017 = vand.u32 %v1016, 4294901760
      %1018 = vmatpush1.msra.mxu0 %v1017
      %v1019 = vand.u32 %v307, 4294901760
      %v1020 = vsub.f32 %v307, %v1019
      %v1021 = vand.u32 %v1020, 4294901760
      %v1022 = vsub.f32 %v1020, %v1021
      %v1023 = vand.u32 %v1022, 4294901760
      %1024 = vmatprep.subr.mxu0 %v1023
      %v1025 = vand.u32 %v306, 4294901760
      %v1026 = vsub.f32 %v306, %v1025
      %v1027 = vand.u32 %v1026, 4294901760
      %v1028 = vsub.f32 %v1026, %v1027
      %v1029 = vand.u32 %v1028, 4294901760
      %1030 = vmatpush1.msra.mxu0 %v1029
      %v1031 = vand.u32 %v309, 4294901760
      %v1032 = vsub.f32 %v309, %v1031
      %v1033 = vand.u32 %v1032, 4294901760
      %v1034 = vsub.f32 %v1032, %v1033
      %v1035 = vand.u32 %v1034, 4294901760
      %1036 = vmatprep.subr.mxu0 %v1035
      %v1037 = vand.u32 %v308, 4294901760
      %v1038 = vsub.f32 %v308, %v1037
      %v1039 = vand.u32 %v1038, 4294901760
      %v1040 = vsub.f32 %v1038, %v1039
      %v1041 = vand.u32 %v1040, 4294901760
      %1042 = vmatpush1.msra.mxu0 %v1041
      %v1043 = vand.u32 %v311, 4294901760
      %v1044 = vsub.f32 %v311, %v1043
      %v1045 = vand.u32 %v1044, 4294901760
      %v1046 = vsub.f32 %v1044, %v1045
      %v1047 = vand.u32 %v1046, 4294901760
      %1048 = vmatprep.subr.mxu0 %v1047
      %v1049 = vand.u32 %v310, 4294901760
      %v1050 = vsub.f32 %v310, %v1049
      %v1051 = vand.u32 %v1050, 4294901760
      %v1052 = vsub.f32 %v1050, %v1051
      %v1053 = vand.u32 %v1052, 4294901760
      %1054 = vmatpush1.msra.mxu0 %v1053
      %v1055 = vand.u32 %v313, 4294901760
      %v1056 = vsub.f32 %v313, %v1055
      %v1057 = vand.u32 %v1056, 4294901760
      %v1058 = vsub.f32 %v1056, %v1057
      %v1059 = vand.u32 %v1058, 4294901760
      %1060 = vmatprep.subr.mxu0 %v1059
      %v1061 = vand.u32 %v312, 4294901760
      %v1062 = vsub.f32 %v312, %v1061
      %v1063 = vand.u32 %v1062, 4294901760
      %v1064 = vsub.f32 %v1062, %v1063
      %v1065 = vand.u32 %v1064, 4294901760
      %1066 = vmatpush1.msra.mxu0 %v1065
      %v1067 = vand.u32 %v315, 4294901760
      %v1068 = vsub.f32 %v315, %v1067
      %v1069 = vand.u32 %v1068, 4294901760
      %v1070 = vsub.f32 %v1068, %v1069
      %v1071 = vand.u32 %v1070, 4294901760
      %1072 = vmatprep.subr.mxu0 %v1071
      %v1073 = vand.u32 %v314, 4294901760
      %v1074 = vsub.f32 %v314, %v1073
      %v1075 = vand.u32 %v1074, 4294901760
      %v1076 = vsub.f32 %v1074, %v1075
      %v1077 = vand.u32 %v1076, 4294901760
      %1078 = vmatpush1.msra.mxu0 %v1077
      %v1079 = vand.u32 %v317, 4294901760
      %v1080 = vsub.f32 %v317, %v1079
      %v1081 = vand.u32 %v1080, 4294901760
      %v1082 = vsub.f32 %v1080, %v1081
      %v1083 = vand.u32 %v1082, 4294901760
      %1084 = vmatprep.subr.mxu0 %v1083
      %v1085 = vand.u32 %v316, 4294901760
      %v1086 = vsub.f32 %v316, %v1085
      %v1087 = vand.u32 %v1086, 4294901760
      %v1088 = vsub.f32 %v1086, %v1087
      %v1089 = vand.u32 %v1088, 4294901760
      %1090 = vmatpush1.msra.mxu0 %v1089
      %v1091 = vand.u32 %v319, 4294901760
      %v1092 = vsub.f32 %v319, %v1091
      %v1093 = vand.u32 %v1092, 4294901760
      %v1094 = vsub.f32 %v1092, %v1093
      %v1095 = vand.u32 %v1094, 4294901760
      %1096 = vmatprep.subr.mxu0 %v1095
      %v1097 = vand.u32 %v318, 4294901760
      %v1098 = vsub.f32 %v318, %v1097
      %v1099 = vand.u32 %v1098, 4294901760
      %v1100 = vsub.f32 %v1098, %v1099
      %v1101 = vand.u32 %v1100, 4294901760
      %1102 = vmatpush1.msra.mxu0 %v1101
      %v1103 = vand.u32 %v321, 4294901760
      %v1104 = vsub.f32 %v321, %v1103
      %v1105 = vand.u32 %v1104, 4294901760
      %v1106 = vsub.f32 %v1104, %v1105
      %v1107 = vand.u32 %v1106, 4294901760
      %1108 = vmatprep.subr.mxu0 %v1107
      %v1109 = vand.u32 %v320, 4294901760
      %v1110 = vsub.f32 %v320, %v1109
      %v1111 = vand.u32 %v1110, 4294901760
      %v1112 = vsub.f32 %v1110, %v1111
      %v1113 = vand.u32 %v1112, 4294901760
      %1114 = vmatpush1.msra.mxu0 %v1113
      %v1115 = vand.u32 %v323, 4294901760
      %v1116 = vsub.f32 %v323, %v1115
      %v1117 = vand.u32 %v1116, 4294901760
      %v1118 = vsub.f32 %v1116, %v1117
      %v1119 = vand.u32 %v1118, 4294901760
      %1120 = vmatprep.subr.mxu0 %v1119
      %v1121 = vand.u32 %v322, 4294901760
      %v1122 = vsub.f32 %v322, %v1121
      %v1123 = vand.u32 %v1122, 4294901760
      %v1124 = vsub.f32 %v1122, %v1123
      %v1125 = vand.u32 %v1124, 4294901760
      %1126 = vmatpush1.msra.mxu0 %v1125
      %v1127 = vand.u32 %v325, 4294901760
      %v1128 = vsub.f32 %v325, %v1127
      %v1129 = vand.u32 %v1128, 4294901760
      %v1130 = vsub.f32 %v1128, %v1129
      %v1131 = vand.u32 %v1130, 4294901760
      %1132 = vmatprep.subr.mxu0 %v1131
      %v1133 = vand.u32 %v324, 4294901760
      %v1134 = vsub.f32 %v324, %v1133
      %v1135 = vand.u32 %v1134, 4294901760
      %v1136 = vsub.f32 %v1134, %v1135
      %v1137 = vand.u32 %v1136, 4294901760
      %1138 = vmatpush1.msra.mxu0 %v1137
      %v1139 = vand.u32 %v327, 4294901760
      %v1140 = vsub.f32 %v327, %v1139
      %v1141 = vand.u32 %v1140, 4294901760
      %v1142 = vsub.f32 %v1140, %v1141
      %v1143 = vand.u32 %v1142, 4294901760
      %1144 = vmatprep.subr.mxu0 %v1143
      %v1145 = vand.u32 %v326, 4294901760
      %v1146 = vsub.f32 %v326, %v1145
      %v1147 = vand.u32 %v1146, 4294901760
      %v1148 = vsub.f32 %v1146, %v1147
      %v1149 = vand.u32 %v1148, 4294901760
      %1150 = vmatpush1.msra.mxu0 %v1149
      %v1151 = vand.u32 %v329, 4294901760
      %v1152 = vsub.f32 %v329, %v1151
      %v1153 = vand.u32 %v1152, 4294901760
      %v1154 = vsub.f32 %v1152, %v1153
      %v1155 = vand.u32 %v1154, 4294901760
      %1156 = vmatprep.subr.mxu0 %v1155
      %v1157 = vand.u32 %v328, 4294901760
      %v1158 = vsub.f32 %v328, %v1157
      %v1159 = vand.u32 %v1158, 4294901760
      %v1160 = vsub.f32 %v1158, %v1159
      %v1161 = vand.u32 %v1160, 4294901760
      %1162 = vmatpush1.msra.mxu0 %v1161
      %v1163 = vand.u32 %v195, 4294901760
      %1164 = vmatprep.mubr.f32.mxu0 %v1163
      %v1165 = vand.u32 %v194, 4294901760
      %1166 = vmatmul.mubr.f32.gmra.mrb[0].mxu0 %v1165
      %v1167 = vpop.f32.mrb[0].mxu0
      %v1168 = vadd.f32 %v599, %v1167
      %v1169 = vpop.f32.mrb[0].mxu0
      %v1170 = vadd.f32 %v601, %v1169
      %v1171 = vand.u32 %v201, 4294901760
      %1172 = vmatprep.mubr.f32.mxu0 %v1171
      %v1173 = vand.u32 %v200, 4294901760
      %1174 = vmatmul.mubr.f32.gmra.mrb[0].mxu0 %v1173
      %v1175 = vpop.f32.mrb[0].mxu0
      %v1176 = vadd.f32 %v615, %v1175
      %v1177 = vpop.f32.mrb[0].mxu0
      %v1178 = vadd.f32 %v617, %v1177
      %v1179 = vand.u32 %v207, 4294901760
      %1180 = vmatprep.mubr.f32.mxu0 %v1179
      %v1181 = vand.u32 %v206, 4294901760
      %1182 = vmatmul.mubr.f32.gmra.mrb[0].mxu0 %v1181
      %v1183 = vpop.f32.mrb[0].mxu0
      %v1184 = vadd.f32 %v631, %v1183
      %v1185 = vpop.f32.mrb[0].mxu0
      %v1186 = vadd.f32 %v633, %v1185
      %v1187 = vand.u32 %v213, 4294901760
      %1188 = vmatprep.mubr.f32.mxu0 %v1187
      %v1189 = vand.u32 %v212, 4294901760
      %1190 = vmatmul.mubr.f32.gmra.mrb[0].mxu0 %v1189
      %v1191 = vpop.f32.mrb[0].mxu0
      %v1192 = vadd.f32 %v647, %v1191
      %v1193 = vpop.f32.mrb[0].mxu0
      %v1194 = vadd.f32 %v649, %v1193
      %v1195 = vand.u32 %v219, 4294901760
      %1196 = vmatprep.mubr.f32.mxu0 %v1195
      %v1197 = vand.u32 %v218, 4294901760
      %1198 = vmatmul.mubr.f32.gmra.mrb[0].mxu0 %v1197
      %v1199 = vpop.f32.mrb[0].mxu0
      %v1200 = vadd.f32 %v663, %v1199
      %v1201 = vpop.f32.mrb[0].mxu0
      %v1202 = vadd.f32 %v665, %v1201
      %v1203 = vand.u32 %v225, 4294901760
      %1204 = vmatprep.mubr.f32.mxu0 %v1203
      %v1205 = vand.u32 %v224, 4294901760
      %1206 = vmatmul.mubr.f32.gmra.mrb[0].mxu0 %v1205
      %v1207 = vpop.f32.mrb[0].mxu0
      %v1208 = vadd.f32 %v679, %v1207
      %v1209 = vpop.f32.mrb[0].mxu0
      %v1210 = vadd.f32 %v681, %v1209
      %v1211 = vand.u32 %v231, 4294901760
      %1212 = vmatprep.mubr.f32.mxu0 %v1211
      %v1213 = vand.u32 %v230, 4294901760
      %1214 = vmatmul.mubr.f32.gmra.mrb[0].mxu0 %v1213
      %v1215 = vpop.f32.mrb[0].mxu0
      %v1216 = vadd.f32 %v695, %v1215
      %v1217 = vpop.f32.mrb[0].mxu0
      %v1218 = vadd.f32 %v697, %v1217
      %v1219 = vand.u32 %v237, 4294901760
      %1220 = vmatprep.mubr.f32.mxu0 %v1219
      %v1221 = vand.u32 %v236, 4294901760
      %1222 = vmatmul.mubr.f32.gmra.mrb[0].mxu0 %v1221
      %v1223 = vpop.f32.mrb[0].mxu0
      %v1224 = vadd.f32 %v711, %v1223
      %v1225 = vpop.f32.mrb[0].mxu0
      %v1226 = vadd.f32 %v713, %v1225
      %v1227 = vand.u32 %v243, 4294901760
      %1228 = vmatprep.mubr.f32.mxu0 %v1227
      %v1229 = vand.u32 %v242, 4294901760
      %1230 = vmatmul.mubr.f32.gmra.mrb[0].mxu0 %v1229
      %v1231 = vpop.f32.mrb[0].mxu0
      %v1232 = vadd.f32 %v727, %v1231
      %v1233 = vpop.f32.mrb[0].mxu0
      %v1234 = vadd.f32 %v729, %v1233
      %v1235 = vand.u32 %v249, 4294901760
      %1236 = vmatprep.mubr.f32.mxu0 %v1235
      %v1237 = vand.u32 %v248, 4294901760
      %1238 = vmatmul.mubr.f32.gmra.mrb[0].mxu0 %v1237
      %v1239 = vpop.f32.mrb[0].mxu0
      %v1240 = vadd.f32 %v743, %v1239
      %v1241 = vpop.f32.mrb[0].mxu0
      %v1242 = vadd.f32 %v745, %v1241
      %v1243 = vand.u32 %v255, 4294901760
      %1244 = vmatprep.mubr.f32.mxu0 %v1243
      %v1245 = vand.u32 %v254, 4294901760
      %1246 = vmatmul.mubr.f32.gmra.mrb[0].mxu0 %v1245
      %v1247 = vpop.f32.mrb[0].mxu0
      %v1248 = vadd.f32 %v759, %v1247
      %v1249 = vpop.f32.mrb[0].mxu0
      %v1250 = vadd.f32 %v761, %v1249
      %v1251 = vand.u32 %v261, 4294901760
      %1252 = vmatprep.mubr.f32.mxu0 %v1251
      %v1253 = vand.u32 %v260, 4294901760
      %1254 = vmatmul.mubr.f32.gmra.mrb[0].mxu0 %v1253
      %v1255 = vpop.f32.mrb[0].mxu0
      %v1256 = vadd.f32 %v775, %v1255
      %v1257 = vpop.f32.mrb[0].mxu0
      %v1258 = vadd.f32 %v777, %v1257
      %1259 = vdwg.mxu0
      %v1260 = vand.u32 %v267, 4294901760
      %v1261 = vsub.f32 %v267, %v1260
      %1262 = vmatprep.subr.mxu0 %v1261
      %v1263 = vand.u32 %v266, 4294901760
      %v1264 = vsub.f32 %v266, %v1263
      %1265 = vmatpush1.msra.mxu0 %v1264
      %v1266 = vand.u32 %v269, 4294901760
      %v1267 = vsub.f32 %v269, %v1266
      %1268 = vmatprep.subr.mxu0 %v1267
      %v1269 = vand.u32 %v268, 4294901760
      %v1270 = vsub.f32 %v268, %v1269
      %1271 = vmatpush1.msra.mxu0 %v1270
      %v1272 = vand.u32 %v271, 4294901760
      %v1273 = vsub.f32 %v271, %v1272
      %1274 = vmatprep.subr.mxu0 %v1273
      %v1275 = vand.u32 %v270, 4294901760
      %v1276 = vsub.f32 %v270, %v1275
      %1277 = vmatpush1.msra.mxu0 %v1276
      %v1278 = vand.u32 %v273, 4294901760
      %v1279 = vsub.f32 %v273, %v1278
      %1280 = vmatprep.subr.mxu0 %v1279
      %v1281 = vand.u32 %v272, 4294901760
      %v1282 = vsub.f32 %v272, %v1281
      %1283 = vmatpush1.msra.mxu0 %v1282
      %v1284 = vand.u32 %v275, 4294901760
      %v1285 = vsub.f32 %v275, %v1284
      %1286 = vmatprep.subr.mxu0 %v1285
      %v1287 = vand.u32 %v274, 4294901760
      %v1288 = vsub.f32 %v274, %v1287
      %1289 = vmatpush1.msra.mxu0 %v1288
      %v1290 = vand.u32 %v277, 4294901760
      %v1291 = vsub.f32 %v277, %v1290
      %1292 = vmatprep.subr.mxu0 %v1291
      %v1293 = vand.u32 %v276, 4294901760
      %v1294 = vsub.f32 %v276, %v1293
      %1295 = vmatpush1.msra.mxu0 %v1294
      %v1296 = vand.u32 %v279, 4294901760
      %v1297 = vsub.f32 %v279, %v1296
      %1298 = vmatprep.subr.mxu0 %v1297
      %v1299 = vand.u32 %v278, 4294901760
      %v1300 = vsub.f32 %v278, %v1299
      %1301 = vmatpush1.msra.mxu0 %v1300
      %v1302 = vand.u32 %v281, 4294901760
      %v1303 = vsub.f32 %v281, %v1302
      %1304 = vmatprep.subr.mxu0 %v1303
      %v1305 = vand.u32 %v280, 4294901760
      %v1306 = vsub.f32 %v280, %v1305
      %1307 = vmatpush1.msra.mxu0 %v1306
      %v1308 = vand.u32 %v283, 4294901760
      %v1309 = vsub.f32 %v283, %v1308
      %1310 = vmatprep.subr.mxu0 %v1309
      %v1311 = vand.u32 %v282, 4294901760
      %v1312 = vsub.f32 %v282, %v1311
      %1313 = vmatpush1.msra.mxu0 %v1312
      %v1314 = vand.u32 %v285, 4294901760
      %v1315 = vsub.f32 %v285, %v1314
      %1316 = vmatprep.subr.mxu0 %v1315
      %v1317 = vand.u32 %v284, 4294901760
      %v1318 = vsub.f32 %v284, %v1317
      %1319 = vmatpush1.msra.mxu0 %v1318
      %v1320 = vand.u32 %v287, 4294901760
      %v1321 = vsub.f32 %v287, %v1320
      %1322 = vmatprep.subr.mxu0 %v1321
      %v1323 = vand.u32 %v286, 4294901760
      %v1324 = vsub.f32 %v286, %v1323
      %1325 = vmatpush1.msra.mxu0 %v1324
      %v1326 = vand.u32 %v289, 4294901760
      %v1327 = vsub.f32 %v289, %v1326
      %1328 = vmatprep.subr.mxu0 %v1327
      %v1329 = vand.u32 %v288, 4294901760
      %v1330 = vsub.f32 %v288, %v1329
      %1331 = vmatpush1.msra.mxu0 %v1330
      %v1332 = vand.u32 %v291, 4294901760
      %v1333 = vsub.f32 %v291, %v1332
      %1334 = vmatprep.subr.mxu0 %v1333
      %v1335 = vand.u32 %v290, 4294901760
      %v1336 = vsub.f32 %v290, %v1335
      %1337 = vmatpush1.msra.mxu0 %v1336
      %v1338 = vand.u32 %v293, 4294901760
      %v1339 = vsub.f32 %v293, %v1338
      %1340 = vmatprep.subr.mxu0 %v1339
      %v1341 = vand.u32 %v292, 4294901760
      %v1342 = vsub.f32 %v292, %v1341
      %1343 = vmatpush1.msra.mxu0 %v1342
      %v1344 = vand.u32 %v295, 4294901760
      %v1345 = vsub.f32 %v295, %v1344
      %1346 = vmatprep.subr.mxu0 %v1345
      %v1347 = vand.u32 %v294, 4294901760
      %v1348 = vsub.f32 %v294, %v1347
      %1349 = vmatpush1.msra.mxu0 %v1348
      %v1350 = vand.u32 %v297, 4294901760
      %v1351 = vsub.f32 %v297, %v1350
      %1352 = vmatprep.subr.mxu0 %v1351
      %v1353 = vand.u32 %v296, 4294901760
      %v1354 = vsub.f32 %v296, %v1353
      %1355 = vmatpush1.msra.mxu0 %v1354
      %v1356 = vand.u32 %v299, 4294901760
      %v1357 = vsub.f32 %v299, %v1356
      %1358 = vmatprep.subr.mxu0 %v1357
      %v1359 = vand.u32 %v298, 4294901760
      %v1360 = vsub.f32 %v298, %v1359
      %1361 = vmatpush1.msra.mxu0 %v1360
      %v1362 = vand.u32 %v301, 4294901760
      %v1363 = vsub.f32 %v301, %v1362
      %1364 = vmatprep.subr.mxu0 %v1363
      %v1365 = vand.u32 %v300, 4294901760
      %v1366 = vsub.f32 %v300, %v1365
      %1367 = vmatpush1.msra.mxu0 %v1366
      %v1368 = vand.u32 %v303, 4294901760
      %v1369 = vsub.f32 %v303, %v1368
      %1370 = vmatprep.subr.mxu0 %v1369
      %v1371 = vand.u32 %v302, 4294901760
      %v1372 = vsub.f32 %v302, %v1371
      %1373 = vmatpush1.msra.mxu0 %v1372
      %v1374 = vand.u32 %v305, 4294901760
      %v1375 = vsub.f32 %v305, %v1374
      %1376 = vmatprep.subr.mxu0 %v1375
      %v1377 = vand.u32 %v304, 4294901760
      %v1378 = vsub.f32 %v304, %v1377
      %1379 = vmatpush1.msra.mxu0 %v1378
      %v1380 = vand.u32 %v307, 4294901760
      %v1381 = vsub.f32 %v307, %v1380
      %1382 = vmatprep.subr.mxu0 %v1381
      %v1383 = vand.u32 %v306, 4294901760
      %v1384 = vsub.f32 %v306, %v1383
      %1385 = vmatpush1.msra.mxu0 %v1384
      %v1386 = vand.u32 %v309, 4294901760
      %v1387 = vsub.f32 %v309, %v1386
      %1388 = vmatprep.subr.mxu0 %v1387
      %v1389 = vand.u32 %v308, 4294901760
      %v1390 = vsub.f32 %v308, %v1389
      %1391 = vmatpush1.msra.mxu0 %v1390
      %v1392 = vand.u32 %v311, 4294901760
      %v1393 = vsub.f32 %v311, %v1392
      %1394 = vmatprep.subr.mxu0 %v1393
      %v1395 = vand.u32 %v310, 4294901760
      %v1396 = vsub.f32 %v310, %v1395
      %1397 = vmatpush1.msra.mxu0 %v1396
      %v1398 = vand.u32 %v313, 4294901760
      %v1399 = vsub.f32 %v313, %v1398
      %1400 = vmatprep.subr.mxu0 %v1399
      %v1401 = vand.u32 %v312, 4294901760
      %v1402 = vsub.f32 %v312, %v1401
      %1403 = vmatpush1.msra.mxu0 %v1402
      %v1404 = vand.u32 %v315, 4294901760
      %v1405 = vsub.f32 %v315, %v1404
      %1406 = vmatprep.subr.mxu0 %v1405
      %v1407 = vand.u32 %v314, 4294901760
      %v1408 = vsub.f32 %v314, %v1407
      %1409 = vmatpush1.msra.mxu0 %v1408
      %v1410 = vand.u32 %v317, 4294901760
      %v1411 = vsub.f32 %v317, %v1410
      %1412 = vmatprep.subr.mxu0 %v1411
      %v1413 = vand.u32 %v316, 4294901760
      %v1414 = vsub.f32 %v316, %v1413
      %1415 = vmatpush1.msra.mxu0 %v1414
      %v1416 = vand.u32 %v319, 4294901760
      %v1417 = vsub.f32 %v319, %v1416
      %1418 = vmatprep.subr.mxu0 %v1417
      %v1419 = vand.u32 %v318, 4294901760
      %v1420 = vsub.f32 %v318, %v1419
      %1421 = vmatpush1.msra.mxu0 %v1420
      %v1422 = vand.u32 %v321, 4294901760
      %v1423 = vsub.f32 %v321, %v1422
      %1424 = vmatprep.subr.mxu0 %v1423
      %v1425 = vand.u32 %v320, 4294901760
      %v1426 = vsub.f32 %v320, %v1425
      %1427 = vmatpush1.msra.mxu0 %v1426
      %v1428 = vand.u32 %v323, 4294901760
      %v1429 = vsub.f32 %v323, %v1428
      %1430 = vmatprep.subr.mxu0 %v1429
      %v1431 = vand.u32 %v322, 4294901760
      %v1432 = vsub.f32 %v322, %v1431
      %1433 = vmatpush1.msra.mxu0 %v1432
      %v1434 = vand.u32 %v325, 4294901760
      %v1435 = vsub.f32 %v325, %v1434
      %1436 = vmatprep.subr.mxu0 %v1435
      %v1437 = vand.u32 %v324, 4294901760
      %v1438 = vsub.f32 %v324, %v1437
      %1439 = vmatpush1.msra.mxu0 %v1438
      %v1440 = vand.u32 %v327, 4294901760
      %v1441 = vsub.f32 %v327, %v1440
      %1442 = vmatprep.subr.mxu0 %v1441
      %v1443 = vand.u32 %v326, 4294901760
      %v1444 = vsub.f32 %v326, %v1443
      %1445 = vmatpush1.msra.mxu0 %v1444
      %v1446 = vand.u32 %v329, 4294901760
      %v1447 = vsub.f32 %v329, %v1446
      %1448 = vmatprep.subr.mxu0 %v1447
      %v1449 = vand.u32 %v328, 4294901760
      %v1450 = vsub.f32 %v328, %v1449
      %1451 = vmatpush1.msra.mxu0 %v1450
      %v1452 = vand.u32 %v195, 4294901760
      %v1453 = vsub.f32 %v195, %v1452
      %1454 = vmatprep.mubr.f32.mxu0 %v1453
      %v1455 = vand.u32 %v194, 4294901760
      %v1456 = vsub.f32 %v194, %v1455
      %1457 = vmatmul.mubr.f32.gmra.mrb[0].mxu0 %v1456
      %v1458 = vpop.f32.mrb[0].mxu0
      %v1459 = vadd.f32 %v1168, %v1458
      %v1460 = vpop.f32.mrb[0].mxu0
      %v1461 = vadd.f32 %v1170, %v1460
      %v1462 = vand.u32 %v201, 4294901760
      %v1463 = vsub.f32 %v201, %v1462
      %1464 = vmatprep.mubr.f32.mxu0 %v1463
      %v1465 = vand.u32 %v200, 4294901760
      %v1466 = vsub.f32 %v200, %v1465
      %1467 = vmatmul.mubr.f32.gmra.mrb[0].mxu0 %v1466
      %v1468 = vpop.f32.mrb[0].mxu0
      %v1469 = vadd.f32 %v1176, %v1468
      %v1470 = vpop.f32.mrb[0].mxu0
      %v1471 = vadd.f32 %v1178, %v1470
      %v1472 = vand.u32 %v207, 4294901760
      %v1473 = vsub.f32 %v207, %v1472
      %1474 = vmatprep.mubr.f32.mxu0 %v1473
      %v1475 = vand.u32 %v206, 4294901760
      %v1476 = vsub.f32 %v206, %v1475
      %1477 = vmatmul.mubr.f32.gmra.mrb[0].mxu0 %v1476
      %v1478 = vpop.f32.mrb[0].mxu0
      %v1479 = vadd.f32 %v1184, %v1478
      %v1480 = vpop.f32.mrb[0].mxu0
      %v1481 = vadd.f32 %v1186, %v1480
      %v1482 = vand.u32 %v213, 4294901760
      %v1483 = vsub.f32 %v213, %v1482
      %1484 = vmatprep.mubr.f32.mxu0 %v1483
      %v1485 = vand.u32 %v212, 4294901760
      %v1486 = vsub.f32 %v212, %v1485
      %1487 = vmatmul.mubr.f32.gmra.mrb[0].mxu0 %v1486
      %v1488 = vpop.f32.mrb[0].mxu0
      %v1489 = vadd.f32 %v1192, %v1488
      %v1490 = vpop.f32.mrb[0].mxu0
      %v1491 = vadd.f32 %v1194, %v1490
      %v1492 = vand.u32 %v219, 4294901760
      %v1493 = vsub.f32 %v219, %v1492
      %1494 = vmatprep.mubr.f32.mxu0 %v1493
      %v1495 = vand.u32 %v218, 4294901760
      %v1496 = vsub.f32 %v218, %v1495
      %1497 = vmatmul.mubr.f32.gmra.mrb[0].mxu0 %v1496
      %v1498 = vpop.f32.mrb[0].mxu0
      %v1499 = vadd.f32 %v1200, %v1498
      %v1500 = vpop.f32.mrb[0].mxu0
      %v1501 = vadd.f32 %v1202, %v1500
      %v1502 = vand.u32 %v225, 4294901760
      %v1503 = vsub.f32 %v225, %v1502
      %1504 = vmatprep.mubr.f32.mxu0 %v1503
      %v1505 = vand.u32 %v224, 4294901760
      %v1506 = vsub.f32 %v224, %v1505
      %1507 = vmatmul.mubr.f32.gmra.mrb[0].mxu0 %v1506
      %v1508 = vpop.f32.mrb[0].mxu0
      %v1509 = vadd.f32 %v1208, %v1508
      %v1510 = vpop.f32.mrb[0].mxu0
      %v1511 = vadd.f32 %v1210, %v1510
      %v1512 = vand.u32 %v231, 4294901760
      %v1513 = vsub.f32 %v231, %v1512
      %1514 = vmatprep.mubr.f32.mxu0 %v1513
      %v1515 = vand.u32 %v230, 4294901760
      %v1516 = vsub.f32 %v230, %v1515
      %1517 = vmatmul.mubr.f32.gmra.mrb[0].mxu0 %v1516
      %v1518 = vpop.f32.mrb[0].mxu0
      %v1519 = vadd.f32 %v1216, %v1518
      %v1520 = vpop.f32.mrb[0].mxu0
      %v1521 = vadd.f32 %v1218, %v1520
      %v1522 = vand.u32 %v237, 4294901760
      %v1523 = vsub.f32 %v237, %v1522
      %1524 = vmatprep.mubr.f32.mxu0 %v1523
      %v1525 = vand.u32 %v236, 4294901760
      %v1526 = vsub.f32 %v236, %v1525
      %1527 = vmatmul.mubr.f32.gmra.mrb[0].mxu0 %v1526
      %v1528 = vpop.f32.mrb[0].mxu0
      %v1529 = vadd.f32 %v1224, %v1528
      %v1530 = vpop.f32.mrb[0].mxu0
      %v1531 = vadd.f32 %v1226, %v1530
      %v1532 = vand.u32 %v243, 4294901760
      %v1533 = vsub.f32 %v243, %v1532
      %1534 = vmatprep.mubr.f32.mxu0 %v1533
      %v1535 = vand.u32 %v242, 4294901760
      %v1536 = vsub.f32 %v242, %v1535
      %1537 = vmatmul.mubr.f32.gmra.mrb[0].mxu0 %v1536
      %v1538 = vpop.f32.mrb[0].mxu0
      %v1539 = vadd.f32 %v1232, %v1538
      %v1540 = vpop.f32.mrb[0].mxu0
      %v1541 = vadd.f32 %v1234, %v1540
      %v1542 = vand.u32 %v249, 4294901760
      %v1543 = vsub.f32 %v249, %v1542
      %1544 = vmatprep.mubr.f32.mxu0 %v1543
      %v1545 = vand.u32 %v248, 4294901760
      %v1546 = vsub.f32 %v248, %v1545
      %1547 = vmatmul.mubr.f32.gmra.mrb[0].mxu0 %v1546
      %v1548 = vpop.f32.mrb[0].mxu0
      %v1549 = vadd.f32 %v1240, %v1548
      %v1550 = vpop.f32.mrb[0].mxu0
      %v1551 = vadd.f32 %v1242, %v1550
      %v1552 = vand.u32 %v255, 4294901760
      %v1553 = vsub.f32 %v255, %v1552
      %1554 = vmatprep.mubr.f32.mxu0 %v1553
      %v1555 = vand.u32 %v254, 4294901760
      %v1556 = vsub.f32 %v254, %v1555
      %1557 = vmatmul.mubr.f32.gmra.mrb[0].mxu0 %v1556
      %v1558 = vpop.f32.mrb[0].mxu0
      %v1559 = vadd.f32 %v1248, %v1558
      %v1560 = vpop.f32.mrb[0].mxu0
      %v1561 = vadd.f32 %v1250, %v1560
      %v1562 = vand.u32 %v261, 4294901760
      %v1563 = vsub.f32 %v261, %v1562
      %1564 = vmatprep.mubr.f32.mxu0 %v1563
      %v1565 = vand.u32 %v260, 4294901760
      %v1566 = vsub.f32 %v260, %v1565
      %1567 = vmatmul.mubr.f32.gmra.mrb[0].mxu0 %v1566
      %v1568 = vpop.f32.mrb[0].mxu0
      %v1569 = vadd.f32 %v1256, %v1568
      %v1570 = vpop.f32.mrb[0].mxu0
      %v1571 = vadd.f32 %v1258, %v1570
      %1572 = vdwg.mxu0
      %v1573 = vand.u32 %v267, 4294901760
      %1574 = vmatprep.subr.mxu0 %v1573
      %v1575 = vand.u32 %v266, 4294901760
      %1576 = vmatpush1.msra.mxu0 %v1575
      %v1577 = vand.u32 %v269, 4294901760
      %1578 = vmatprep.subr.mxu0 %v1577
      %v1579 = vand.u32 %v268, 4294901760
      %1580 = vmatpush1.msra.mxu0 %v1579
      %v1581 = vand.u32 %v271, 4294901760
      %1582 = vmatprep.subr.mxu0 %v1581
      %v1583 = vand.u32 %v270, 4294901760
      %1584 = vmatpush1.msra.mxu0 %v1583
      %v1585 = vand.u32 %v273, 4294901760
      %1586 = vmatprep.subr.mxu0 %v1585
      %v1587 = vand.u32 %v272, 4294901760
      %1588 = vmatpush1.msra.mxu0 %v1587
      %v1589 = vand.u32 %v275, 4294901760
      %1590 = vmatprep.subr.mxu0 %v1589
      %v1591 = vand.u32 %v274, 4294901760
      %1592 = vmatpush1.msra.mxu0 %v1591
      %v1593 = vand.u32 %v277, 4294901760
      %1594 = vmatprep.subr.mxu0 %v1593
      %v1595 = vand.u32 %v276, 4294901760
      %1596 = vmatpush1.msra.mxu0 %v1595
      %v1597 = vand.u32 %v279, 4294901760
      %1598 = vmatprep.subr.mxu0 %v1597
      %v1599 = vand.u32 %v278, 4294901760
      %1600 = vmatpush1.msra.mxu0 %v1599
      %v1601 = vand.u32 %v281, 4294901760
      %1602 = vmatprep.subr.mxu0 %v1601
      %v1603 = vand.u32 %v280, 4294901760
      %1604 = vmatpush1.msra.mxu0 %v1603
      %v1605 = vand.u32 %v283, 4294901760
      %1606 = vmatprep.subr.mxu0 %v1605
      %v1607 = vand.u32 %v282, 4294901760
      %1608 = vmatpush1.msra.mxu0 %v1607
      %v1609 = vand.u32 %v285, 4294901760
      %1610 = vmatprep.subr.mxu0 %v1609
      %v1611 = vand.u32 %v284, 4294901760
      %1612 = vmatpush1.msra.mxu0 %v1611
      %v1613 = vand.u32 %v287, 4294901760
      %1614 = vmatprep.subr.mxu0 %v1613
      %v1615 = vand.u32 %v286, 4294901760
      %1616 = vmatpush1.msra.mxu0 %v1615
      %v1617 = vand.u32 %v289, 4294901760
      %1618 = vmatprep.subr.mxu0 %v1617
      %v1619 = vand.u32 %v288, 4294901760
      %1620 = vmatpush1.msra.mxu0 %v1619
      %v1621 = vand.u32 %v291, 4294901760
      %1622 = vmatprep.subr.mxu0 %v1621
      %v1623 = vand.u32 %v290, 4294901760
      %1624 = vmatpush1.msra.mxu0 %v1623
      %v1625 = vand.u32 %v293, 4294901760
      %1626 = vmatprep.subr.mxu0 %v1625
      %v1627 = vand.u32 %v292, 4294901760
      %1628 = vmatpush1.msra.mxu0 %v1627
      %v1629 = vand.u32 %v295, 4294901760
      %1630 = vmatprep.subr.mxu0 %v1629
      %v1631 = vand.u32 %v294, 4294901760
      %1632 = vmatpush1.msra.mxu0 %v1631
      %v1633 = vand.u32 %v297, 4294901760
      %1634 = vmatprep.subr.mxu0 %v1633
      %v1635 = vand.u32 %v296, 4294901760
      %1636 = vmatpush1.msra.mxu0 %v1635
      %v1637 = vand.u32 %v299, 4294901760
      %1638 = vmatprep.subr.mxu0 %v1637
      %v1639 = vand.u32 %v298, 4294901760
      %1640 = vmatpush1.msra.mxu0 %v1639
      %v1641 = vand.u32 %v301, 4294901760
      %1642 = vmatprep.subr.mxu0 %v1641
      %v1643 = vand.u32 %v300, 4294901760
      %1644 = vmatpush1.msra.mxu0 %v1643
      %v1645 = vand.u32 %v303, 4294901760
      %1646 = vmatprep.subr.mxu0 %v1645
      %v1647 = vand.u32 %v302, 4294901760
      %1648 = vmatpush1.msra.mxu0 %v1647
      %v1649 = vand.u32 %v305, 4294901760
      %1650 = vmatprep.subr.mxu0 %v1649
      %v1651 = vand.u32 %v304, 4294901760
      %1652 = vmatpush1.msra.mxu0 %v1651
      %v1653 = vand.u32 %v307, 4294901760
      %1654 = vmatprep.subr.mxu0 %v1653
      %v1655 = vand.u32 %v306, 4294901760
      %1656 = vmatpush1.msra.mxu0 %v1655
      %v1657 = vand.u32 %v309, 4294901760
      %1658 = vmatprep.subr.mxu0 %v1657
      %v1659 = vand.u32 %v308, 4294901760
      %1660 = vmatpush1.msra.mxu0 %v1659
      %v1661 = vand.u32 %v311, 4294901760
      %1662 = vmatprep.subr.mxu0 %v1661
      %v1663 = vand.u32 %v310, 4294901760
      %1664 = vmatpush1.msra.mxu0 %v1663
      %v1665 = vand.u32 %v313, 4294901760
      %1666 = vmatprep.subr.mxu0 %v1665
      %v1667 = vand.u32 %v312, 4294901760
      %1668 = vmatpush1.msra.mxu0 %v1667
      %v1669 = vand.u32 %v315, 4294901760
      %1670 = vmatprep.subr.mxu0 %v1669
      %v1671 = vand.u32 %v314, 4294901760
      %1672 = vmatpush1.msra.mxu0 %v1671
      %v1673 = vand.u32 %v317, 4294901760
      %1674 = vmatprep.subr.mxu0 %v1673
      %v1675 = vand.u32 %v316, 4294901760
      %1676 = vmatpush1.msra.mxu0 %v1675
      %v1677 = vand.u32 %v319, 4294901760
      %1678 = vmatprep.subr.mxu0 %v1677
      %v1679 = vand.u32 %v318, 4294901760
      %1680 = vmatpush1.msra.mxu0 %v1679
      %v1681 = vand.u32 %v321, 4294901760
      %1682 = vmatprep.subr.mxu0 %v1681
      %v1683 = vand.u32 %v320, 4294901760
      %1684 = vmatpush1.msra.mxu0 %v1683
      %v1685 = vand.u32 %v323, 4294901760
      %1686 = vmatprep.subr.mxu0 %v1685
      %v1687 = vand.u32 %v322, 4294901760
      %1688 = vmatpush1.msra.mxu0 %v1687
      %v1689 = vand.u32 %v325, 4294901760
      %1690 = vmatprep.subr.mxu0 %v1689
      %v1691 = vand.u32 %v324, 4294901760
      %1692 = vmatpush1.msra.mxu0 %v1691
      %v1693 = vand.u32 %v327, 4294901760
      %1694 = vmatprep.subr.mxu0 %v1693
      %v1695 = vand.u32 %v326, 4294901760
      %1696 = vmatpush1.msra.mxu0 %v1695
      %v1697 = vand.u32 %v329, 4294901760
      %1698 = vmatprep.subr.mxu0 %v1697
      %v1699 = vand.u32 %v328, 4294901760
      %1700 = vmatpush1.msra.mxu0 %v1699
      %v1701 = vand.u32 %v195, 4294901760
      %v1702 = vsub.f32 %v195, %v1701
      %v1703 = vand.u32 %v1702, 4294901760
      %1704 = vmatprep.mubr.f32.mxu0 %v1703
      %v1705 = vand.u32 %v194, 4294901760
      %v1706 = vsub.f32 %v194, %v1705
      %v1707 = vand.u32 %v1706, 4294901760
      %1708 = vmatmul.mubr.f32.gmra.mrb[0].mxu0 %v1707
      %v1709 = vpop.f32.mrb[0].mxu0
      %v1710 = vadd.f32 %v1459, %v1709
      %v1711 = vpop.f32.mrb[0].mxu0
      %v1712 = vadd.f32 %v1461, %v1711
      %v1713 = vand.u32 %v201, 4294901760
      %v1714 = vsub.f32 %v201, %v1713
      %v1715 = vand.u32 %v1714, 4294901760
      %1716 = vmatprep.mubr.f32.mxu0 %v1715
      %v1717 = vand.u32 %v200, 4294901760
      %v1718 = vsub.f32 %v200, %v1717
      %v1719 = vand.u32 %v1718, 4294901760
      %1720 = vmatmul.mubr.f32.gmra.mrb[0].mxu0 %v1719
      %v1721 = vpop.f32.mrb[0].mxu0
      %v1722 = vadd.f32 %v1469, %v1721
      %v1723 = vpop.f32.mrb[0].mxu0
      %v1724 = vadd.f32 %v1471, %v1723
      %v1725 = vand.u32 %v207, 4294901760
      %v1726 = vsub.f32 %v207, %v1725
      %v1727 = vand.u32 %v1726, 4294901760
      %1728 = vmatprep.mubr.f32.mxu0 %v1727
      %v1729 = vand.u32 %v206, 4294901760
      %v1730 = vsub.f32 %v206, %v1729
      %v1731 = vand.u32 %v1730, 4294901760
      %1732 = vmatmul.mubr.f32.gmra.mrb[0].mxu0 %v1731
      %v1733 = vpop.f32.mrb[0].mxu0
      %v1734 = vadd.f32 %v1479, %v1733
      %v1735 = vpop.f32.mrb[0].mxu0
      %v1736 = vadd.f32 %v1481, %v1735
      %v1737 = vand.u32 %v213, 4294901760
      %v1738 = vsub.f32 %v213, %v1737
      %v1739 = vand.u32 %v1738, 4294901760
      %1740 = vmatprep.mubr.f32.mxu0 %v1739
      %v1741 = vand.u32 %v212, 4294901760
      %v1742 = vsub.f32 %v212, %v1741
      %v1743 = vand.u32 %v1742, 4294901760
      %1744 = vmatmul.mubr.f32.gmra.mrb[0].mxu0 %v1743
      %v1745 = vpop.f32.mrb[0].mxu0
      %v1746 = vadd.f32 %v1489, %v1745
      %v1747 = vpop.f32.mrb[0].mxu0
      %v1748 = vadd.f32 %v1491, %v1747
      %v1749 = vand.u32 %v219, 4294901760
      %v1750 = vsub.f32 %v219, %v1749
      %v1751 = vand.u32 %v1750, 4294901760
      %1752 = vmatprep.mubr.f32.mxu0 %v1751
      %v1753 = vand.u32 %v218, 4294901760
      %v1754 = vsub.f32 %v218, %v1753
      %v1755 = vand.u32 %v1754, 4294901760
      %1756 = vmatmul.mubr.f32.gmra.mrb[0].mxu0 %v1755
      %v1757 = vpop.f32.mrb[0].mxu0
      %v1758 = vadd.f32 %v1499, %v1757
      %v1759 = vpop.f32.mrb[0].mxu0
      %v1760 = vadd.f32 %v1501, %v1759
      %v1761 = vand.u32 %v225, 4294901760
      %v1762 = vsub.f32 %v225, %v1761
      %v1763 = vand.u32 %v1762, 4294901760
      %1764 = vmatprep.mubr.f32.mxu0 %v1763
      %v1765 = vand.u32 %v224, 4294901760
      %v1766 = vsub.f32 %v224, %v1765
      %v1767 = vand.u32 %v1766, 4294901760
      %1768 = vmatmul.mubr.f32.gmra.mrb[0].mxu0 %v1767
      %v1769 = vpop.f32.mrb[0].mxu0
      %v1770 = vadd.f32 %v1509, %v1769
      %v1771 = vpop.f32.mrb[0].mxu0
      %v1772 = vadd.f32 %v1511, %v1771
      %v1773 = vand.u32 %v231, 4294901760
      %v1774 = vsub.f32 %v231, %v1773
      %v1775 = vand.u32 %v1774, 4294901760
      %1776 = vmatprep.mubr.f32.mxu0 %v1775
      %v1777 = vand.u32 %v230, 4294901760
      %v1778 = vsub.f32 %v230, %v1777
      %v1779 = vand.u32 %v1778, 4294901760
      %1780 = vmatmul.mubr.f32.gmra.mrb[0].mxu0 %v1779
      %v1781 = vpop.f32.mrb[0].mxu0
      %v1782 = vadd.f32 %v1519, %v1781
      %v1783 = vpop.f32.mrb[0].mxu0
      %v1784 = vadd.f32 %v1521, %v1783
      %v1785 = vand.u32 %v237, 4294901760
      %v1786 = vsub.f32 %v237, %v1785
      %v1787 = vand.u32 %v1786, 4294901760
      %1788 = vmatprep.mubr.f32.mxu0 %v1787
      %v1789 = vand.u32 %v236, 4294901760
      %v1790 = vsub.f32 %v236, %v1789
      %v1791 = vand.u32 %v1790, 4294901760
      %1792 = vmatmul.mubr.f32.gmra.mrb[0].mxu0 %v1791
      %v1793 = vpop.f32.mrb[0].mxu0
      %v1794 = vadd.f32 %v1529, %v1793
      %v1795 = vpop.f32.mrb[0].mxu0
      %v1796 = vadd.f32 %v1531, %v1795
      %v1797 = vand.u32 %v243, 4294901760
      %v1798 = vsub.f32 %v243, %v1797
      %v1799 = vand.u32 %v1798, 4294901760
      %1800 = vmatprep.mubr.f32.mxu0 %v1799
      %v1801 = vand.u32 %v242, 4294901760
      %v1802 = vsub.f32 %v242, %v1801
      %v1803 = vand.u32 %v1802, 4294901760
      %1804 = vmatmul.mubr.f32.gmra.mrb[0].mxu0 %v1803
      %v1805 = vpop.f32.mrb[0].mxu0
      %v1806 = vadd.f32 %v1539, %v1805
      %v1807 = vpop.f32.mrb[0].mxu0
      %v1808 = vadd.f32 %v1541, %v1807
      %v1809 = vand.u32 %v249, 4294901760
      %v1810 = vsub.f32 %v249, %v1809
      %v1811 = vand.u32 %v1810, 4294901760
      %1812 = vmatprep.mubr.f32.mxu0 %v1811
      %v1813 = vand.u32 %v248, 4294901760
      %v1814 = vsub.f32 %v248, %v1813
      %v1815 = vand.u32 %v1814, 4294901760
      %1816 = vmatmul.mubr.f32.gmra.mrb[0].mxu0 %v1815
      %v1817 = vpop.f32.mrb[0].mxu0
      %v1818 = vadd.f32 %v1549, %v1817
      %v1819 = vpop.f32.mrb[0].mxu0
      %v1820 = vadd.f32 %v1551, %v1819
      %v1821 = vand.u32 %v255, 4294901760
      %v1822 = vsub.f32 %v255, %v1821
      %v1823 = vand.u32 %v1822, 4294901760
      %1824 = vmatprep.mubr.f32.mxu0 %v1823
      %v1825 = vand.u32 %v254, 4294901760
      %v1826 = vsub.f32 %v254, %v1825
      %v1827 = vand.u32 %v1826, 4294901760
      %1828 = vmatmul.mubr.f32.gmra.mrb[0].mxu0 %v1827
      %v1829 = vpop.f32.mrb[0].mxu0
      %v1830 = vadd.f32 %v1559, %v1829
      %v1831 = vpop.f32.mrb[0].mxu0
      %v1832 = vadd.f32 %v1561, %v1831
      %v1833 = vand.u32 %v261, 4294901760
      %v1834 = vsub.f32 %v261, %v1833
      %v1835 = vand.u32 %v1834, 4294901760
      %1836 = vmatprep.mubr.f32.mxu0 %v1835
      %v1837 = vand.u32 %v260, 4294901760
      %v1838 = vsub.f32 %v260, %v1837
      %v1839 = vand.u32 %v1838, 4294901760
      %1840 = vmatmul.mubr.f32.gmra.mrb[0].mxu0 %v1839
      %v1841 = vpop.f32.mrb[0].mxu0
      %v1842 = vadd.f32 %v1569, %v1841
      %v1843 = vpop.f32.mrb[0].mxu0
      %v1844 = vadd.f32 %v1571, %v1843
      %1845 = vdwg.mxu0
      %v1846 = vand.u32 %v267, 4294901760
      %v1847 = vsub.f32 %v267, %v1846
      %v1848 = vand.u32 %v1847, 4294901760
      %1849 = vmatprep.subr.mxu0 %v1848
      %v1850 = vand.u32 %v266, 4294901760
      %v1851 = vsub.f32 %v266, %v1850
      %v1852 = vand.u32 %v1851, 4294901760
      %1853 = vmatpush1.msra.mxu0 %v1852
      %v1854 = vand.u32 %v269, 4294901760
      %v1855 = vsub.f32 %v269, %v1854
      %v1856 = vand.u32 %v1855, 4294901760
      %1857 = vmatprep.subr.mxu0 %v1856
      %v1858 = vand.u32 %v268, 4294901760
      %v1859 = vsub.f32 %v268, %v1858
      %v1860 = vand.u32 %v1859, 4294901760
      %1861 = vmatpush1.msra.mxu0 %v1860
      %v1862 = vand.u32 %v271, 4294901760
      %v1863 = vsub.f32 %v271, %v1862
      %v1864 = vand.u32 %v1863, 4294901760
      %1865 = vmatprep.subr.mxu0 %v1864
      %v1866 = vand.u32 %v270, 4294901760
      %v1867 = vsub.f32 %v270, %v1866
      %v1868 = vand.u32 %v1867, 4294901760
      %1869 = vmatpush1.msra.mxu0 %v1868
      %v1870 = vand.u32 %v273, 4294901760
      %v1871 = vsub.f32 %v273, %v1870
      %v1872 = vand.u32 %v1871, 4294901760
      %1873 = vmatprep.subr.mxu0 %v1872
      %v1874 = vand.u32 %v272, 4294901760
      %v1875 = vsub.f32 %v272, %v1874
      %v1876 = vand.u32 %v1875, 4294901760
      %1877 = vmatpush1.msra.mxu0 %v1876
      %v1878 = vand.u32 %v275, 4294901760
      %v1879 = vsub.f32 %v275, %v1878
      %v1880 = vand.u32 %v1879, 4294901760
      %1881 = vmatprep.subr.mxu0 %v1880
      %v1882 = vand.u32 %v274, 4294901760
      %v1883 = vsub.f32 %v274, %v1882
      %v1884 = vand.u32 %v1883, 4294901760
      %1885 = vmatpush1.msra.mxu0 %v1884
      %v1886 = vand.u32 %v277, 4294901760
      %v1887 = vsub.f32 %v277, %v1886
      %v1888 = vand.u32 %v1887, 4294901760
      %1889 = vmatprep.subr.mxu0 %v1888
      %v1890 = vand.u32 %v276, 4294901760
      %v1891 = vsub.f32 %v276, %v1890
      %v1892 = vand.u32 %v1891, 4294901760
      %1893 = vmatpush1.msra.mxu0 %v1892
      %v1894 = vand.u32 %v279, 4294901760
      %v1895 = vsub.f32 %v279, %v1894
      %v1896 = vand.u32 %v1895, 4294901760
      %1897 = vmatprep.subr.mxu0 %v1896
      %v1898 = vand.u32 %v278, 4294901760
      %v1899 = vsub.f32 %v278, %v1898
      %v1900 = vand.u32 %v1899, 4294901760
      %1901 = vmatpush1.msra.mxu0 %v1900
      %v1902 = vand.u32 %v281, 4294901760
      %v1903 = vsub.f32 %v281, %v1902
      %v1904 = vand.u32 %v1903, 4294901760
      %1905 = vmatprep.subr.mxu0 %v1904
      %v1906 = vand.u32 %v280, 4294901760
      %v1907 = vsub.f32 %v280, %v1906
      %v1908 = vand.u32 %v1907, 4294901760
      %1909 = vmatpush1.msra.mxu0 %v1908
      %v1910 = vand.u32 %v283, 4294901760
      %v1911 = vsub.f32 %v283, %v1910
      %v1912 = vand.u32 %v1911, 4294901760
      %1913 = vmatprep.subr.mxu0 %v1912
      %v1914 = vand.u32 %v282, 4294901760
      %v1915 = vsub.f32 %v282, %v1914
      %v1916 = vand.u32 %v1915, 4294901760
      %1917 = vmatpush1.msra.mxu0 %v1916
      %v1918 = vand.u32 %v285, 4294901760
      %v1919 = vsub.f32 %v285, %v1918
      %v1920 = vand.u32 %v1919, 4294901760
      %1921 = vmatprep.subr.mxu0 %v1920
      %v1922 = vand.u32 %v284, 4294901760
      %v1923 = vsub.f32 %v284, %v1922
      %v1924 = vand.u32 %v1923, 4294901760
      %1925 = vmatpush1.msra.mxu0 %v1924
      %v1926 = vand.u32 %v287, 4294901760
      %v1927 = vsub.f32 %v287, %v1926
      %v1928 = vand.u32 %v1927, 4294901760
      %1929 = vmatprep.subr.mxu0 %v1928
      %v1930 = vand.u32 %v286, 4294901760
      %v1931 = vsub.f32 %v286, %v1930
      %v1932 = vand.u32 %v1931, 4294901760
      %1933 = vmatpush1.msra.mxu0 %v1932
      %v1934 = vand.u32 %v289, 4294901760
      %v1935 = vsub.f32 %v289, %v1934
      %v1936 = vand.u32 %v1935, 4294901760
      %1937 = vmatprep.subr.mxu0 %v1936
      %v1938 = vand.u32 %v288, 4294901760
      %v1939 = vsub.f32 %v288, %v1938
      %v1940 = vand.u32 %v1939, 4294901760
      %1941 = vmatpush1.msra.mxu0 %v1940
      %v1942 = vand.u32 %v291, 4294901760
      %v1943 = vsub.f32 %v291, %v1942
      %v1944 = vand.u32 %v1943, 4294901760
      %1945 = vmatprep.subr.mxu0 %v1944
      %v1946 = vand.u32 %v290, 4294901760
      %v1947 = vsub.f32 %v290, %v1946
      %v1948 = vand.u32 %v1947, 4294901760
      %1949 = vmatpush1.msra.mxu0 %v1948
      %v1950 = vand.u32 %v293, 4294901760
      %v1951 = vsub.f32 %v293, %v1950
      %v1952 = vand.u32 %v1951, 4294901760
      %1953 = vmatprep.subr.mxu0 %v1952
      %v1954 = vand.u32 %v292, 4294901760
      %v1955 = vsub.f32 %v292, %v1954
      %v1956 = vand.u32 %v1955, 4294901760
      %1957 = vmatpush1.msra.mxu0 %v1956
      %v1958 = vand.u32 %v295, 4294901760
      %v1959 = vsub.f32 %v295, %v1958
      %v1960 = vand.u32 %v1959, 4294901760
      %1961 = vmatprep.subr.mxu0 %v1960
      %v1962 = vand.u32 %v294, 4294901760
      %v1963 = vsub.f32 %v294, %v1962
      %v1964 = vand.u32 %v1963, 4294901760
      %1965 = vmatpush1.msra.mxu0 %v1964
      %v1966 = vand.u32 %v297, 4294901760
      %v1967 = vsub.f32 %v297, %v1966
      %v1968 = vand.u32 %v1967, 4294901760
      %1969 = vmatprep.subr.mxu0 %v1968
      %v1970 = vand.u32 %v296, 4294901760
      %v1971 = vsub.f32 %v296, %v1970
      %v1972 = vand.u32 %v1971, 4294901760
      %1973 = vmatpush1.msra.mxu0 %v1972
      %v1974 = vand.u32 %v299, 4294901760
      %v1975 = vsub.f32 %v299, %v1974
      %v1976 = vand.u32 %v1975, 4294901760
      %1977 = vmatprep.subr.mxu0 %v1976
      %v1978 = vand.u32 %v298, 4294901760
      %v1979 = vsub.f32 %v298, %v1978
      %v1980 = vand.u32 %v1979, 4294901760
      %1981 = vmatpush1.msra.mxu0 %v1980
      %v1982 = vand.u32 %v301, 4294901760
      %v1983 = vsub.f32 %v301, %v1982
      %v1984 = vand.u32 %v1983, 4294901760
      %1985 = vmatprep.subr.mxu0 %v1984
      %v1986 = vand.u32 %v300, 4294901760
      %v1987 = vsub.f32 %v300, %v1986
      %v1988 = vand.u32 %v1987, 4294901760
      %1989 = vmatpush1.msra.mxu0 %v1988
      %v1990 = vand.u32 %v303, 4294901760
      %v1991 = vsub.f32 %v303, %v1990
      %v1992 = vand.u32 %v1991, 4294901760
      %1993 = vmatprep.subr.mxu0 %v1992
      %v1994 = vand.u32 %v302, 4294901760
      %v1995 = vsub.f32 %v302, %v1994
      %v1996 = vand.u32 %v1995, 4294901760
      %1997 = vmatpush1.msra.mxu0 %v1996
      %v1998 = vand.u32 %v305, 4294901760
      %v1999 = vsub.f32 %v305, %v1998
      %v2000 = vand.u32 %v1999, 4294901760
      %2001 = vmatprep.subr.mxu0 %v2000
      %v2002 = vand.u32 %v304, 4294901760
      %v2003 = vsub.f32 %v304, %v2002
      %v2004 = vand.u32 %v2003, 4294901760
      %2005 = vmatpush1.msra.mxu0 %v2004
      %v2006 = vand.u32 %v307, 4294901760
      %v2007 = vsub.f32 %v307, %v2006
      %v2008 = vand.u32 %v2007, 4294901760
      %2009 = vmatprep.subr.mxu0 %v2008
      %v2010 = vand.u32 %v306, 4294901760
      %v2011 = vsub.f32 %v306, %v2010
      %v2012 = vand.u32 %v2011, 4294901760
      %2013 = vmatpush1.msra.mxu0 %v2012
      %v2014 = vand.u32 %v309, 4294901760
      %v2015 = vsub.f32 %v309, %v2014
      %v2016 = vand.u32 %v2015, 4294901760
      %2017 = vmatprep.subr.mxu0 %v2016
      %v2018 = vand.u32 %v308, 4294901760
      %v2019 = vsub.f32 %v308, %v2018
      %v2020 = vand.u32 %v2019, 4294901760
      %2021 = vmatpush1.msra.mxu0 %v2020
      %v2022 = vand.u32 %v311, 4294901760
      %v2023 = vsub.f32 %v311, %v2022
      %v2024 = vand.u32 %v2023, 4294901760
      %2025 = vmatprep.subr.mxu0 %v2024
      %v2026 = vand.u32 %v310, 4294901760
      %v2027 = vsub.f32 %v310, %v2026
      %v2028 = vand.u32 %v2027, 4294901760
      %2029 = vmatpush1.msra.mxu0 %v2028
      %v2030 = vand.u32 %v313, 4294901760
      %v2031 = vsub.f32 %v313, %v2030
      %v2032 = vand.u32 %v2031, 4294901760
      %2033 = vmatprep.subr.mxu0 %v2032
      %v2034 = vand.u32 %v312, 4294901760
      %v2035 = vsub.f32 %v312, %v2034
      %v2036 = vand.u32 %v2035, 4294901760
      %2037 = vmatpush1.msra.mxu0 %v2036
      %v2038 = vand.u32 %v315, 4294901760
      %v2039 = vsub.f32 %v315, %v2038
      %v2040 = vand.u32 %v2039, 4294901760
      %2041 = vmatprep.subr.mxu0 %v2040
      %v2042 = vand.u32 %v314, 4294901760
      %v2043 = vsub.f32 %v314, %v2042
      %v2044 = vand.u32 %v2043, 4294901760
      %2045 = vmatpush1.msra.mxu0 %v2044
      %v2046 = vand.u32 %v317, 4294901760
      %v2047 = vsub.f32 %v317, %v2046
      %v2048 = vand.u32 %v2047, 4294901760
      %2049 = vmatprep.subr.mxu0 %v2048
      %v2050 = vand.u32 %v316, 4294901760
      %v2051 = vsub.f32 %v316, %v2050
      %v2052 = vand.u32 %v2051, 4294901760
      %2053 = vmatpush1.msra.mxu0 %v2052
      %v2054 = vand.u32 %v319, 4294901760
      %v2055 = vsub.f32 %v319, %v2054
      %v2056 = vand.u32 %v2055, 4294901760
      %2057 = vmatprep.subr.mxu0 %v2056
      %v2058 = vand.u32 %v318, 4294901760
      %v2059 = vsub.f32 %v318, %v2058
      %v2060 = vand.u32 %v2059, 4294901760
      %2061 = vmatpush1.msra.mxu0 %v2060
      %v2062 = vand.u32 %v321, 4294901760
      %v2063 = vsub.f32 %v321, %v2062
      %v2064 = vand.u32 %v2063, 4294901760
      %2065 = vmatprep.subr.mxu0 %v2064
      %v2066 = vand.u32 %v320, 4294901760
      %v2067 = vsub.f32 %v320, %v2066
      %v2068 = vand.u32 %v2067, 4294901760
      %2069 = vmatpush1.msra.mxu0 %v2068
      %v2070 = vand.u32 %v323, 4294901760
      %v2071 = vsub.f32 %v323, %v2070
      %v2072 = vand.u32 %v2071, 4294901760
      %2073 = vmatprep.subr.mxu0 %v2072
      %v2074 = vand.u32 %v322, 4294901760
      %v2075 = vsub.f32 %v322, %v2074
      %v2076 = vand.u32 %v2075, 4294901760
      %2077 = vmatpush1.msra.mxu0 %v2076
      %v2078 = vand.u32 %v325, 4294901760
      %v2079 = vsub.f32 %v325, %v2078
      %v2080 = vand.u32 %v2079, 4294901760
      %2081 = vmatprep.subr.mxu0 %v2080
      %v2082 = vand.u32 %v324, 4294901760
      %v2083 = vsub.f32 %v324, %v2082
      %v2084 = vand.u32 %v2083, 4294901760
      %2085 = vmatpush1.msra.mxu0 %v2084
      %v2086 = vand.u32 %v327, 4294901760
      %v2087 = vsub.f32 %v327, %v2086
      %v2088 = vand.u32 %v2087, 4294901760
      %2089 = vmatprep.subr.mxu0 %v2088
      %v2090 = vand.u32 %v326, 4294901760
      %v2091 = vsub.f32 %v326, %v2090
      %v2092 = vand.u32 %v2091, 4294901760
      %2093 = vmatpush1.msra.mxu0 %v2092
      %v2094 = vand.u32 %v329, 4294901760
      %v2095 = vsub.f32 %v329, %v2094
      %v2096 = vand.u32 %v2095, 4294901760
      %2097 = vmatprep.subr.mxu0 %v2096
      %v2098 = vand.u32 %v328, 4294901760
      %v2099 = vsub.f32 %v328, %v2098
      %v2100 = vand.u32 %v2099, 4294901760
      %2101 = vmatpush1.msra.mxu0 %v2100
      %v2102 = vand.u32 %v195, 4294901760
      %2103 = vmatprep.mubr.f32.mxu0 %v2102
      %v2104 = vand.u32 %v194, 4294901760
      %2105 = vmatmul.mubr.f32.gmra.mrb[0].mxu0 %v2104
      %v2106 = vpop.f32.mrb[0].mxu0
      %v2107 = vadd.f32 %v1710, %v2106
      %v2108 = vpop.f32.mrb[0].mxu0
      %v2109 = vadd.f32 %v1712, %v2108
      %v2110 = vand.u32 %v201, 4294901760
      %2111 = vmatprep.mubr.f32.mxu0 %v2110
      %v2112 = vand.u32 %v200, 4294901760
      %2113 = vmatmul.mubr.f32.gmra.mrb[0].mxu0 %v2112
      %v2114 = vpop.f32.mrb[0].mxu0
      %v2115 = vadd.f32 %v1722, %v2114
      %v2116 = vpop.f32.mrb[0].mxu0
      %v2117 = vadd.f32 %v1724, %v2116
      %v2118 = vand.u32 %v207, 4294901760
      %2119 = vmatprep.mubr.f32.mxu0 %v2118
      %v2120 = vand.u32 %v206, 4294901760
      %2121 = vmatmul.mubr.f32.gmra.mrb[0].mxu0 %v2120
      %v2122 = vpop.f32.mrb[0].mxu0
      %v2123 = vadd.f32 %v1734, %v2122
      %v2124 = vpop.f32.mrb[0].mxu0
      %v2125 = vadd.f32 %v1736, %v2124
      %v2126 = vand.u32 %v213, 4294901760
      %2127 = vmatprep.mubr.f32.mxu0 %v2126
      %v2128 = vand.u32 %v212, 4294901760
      %2129 = vmatmul.mubr.f32.gmra.mrb[0].mxu0 %v2128
      %v2130 = vpop.f32.mrb[0].mxu0
      %v2131 = vadd.f32 %v1746, %v2130
      %v2132 = vpop.f32.mrb[0].mxu0
      %v2133 = vadd.f32 %v1748, %v2132
      %v2134 = vand.u32 %v219, 4294901760
      %2135 = vmatprep.mubr.f32.mxu0 %v2134
      %v2136 = vand.u32 %v218, 4294901760
      %2137 = vmatmul.mubr.f32.gmra.mrb[0].mxu0 %v2136
      %v2138 = vpop.f32.mrb[0].mxu0
      %v2139 = vadd.f32 %v1758, %v2138
      %v2140 = vpop.f32.mrb[0].mxu0
      %v2141 = vadd.f32 %v1760, %v2140
      %v2142 = vand.u32 %v225, 4294901760
      %2143 = vmatprep.mubr.f32.mxu0 %v2142
      %v2144 = vand.u32 %v224, 4294901760
      %2145 = vmatmul.mubr.f32.gmra.mrb[0].mxu0 %v2144
      %v2146 = vpop.f32.mrb[0].mxu0
      %v2147 = vadd.f32 %v1770, %v2146
      %v2148 = vpop.f32.mrb[0].mxu0
      %v2149 = vadd.f32 %v1772, %v2148
      %v2150 = vand.u32 %v231, 4294901760
      %2151 = vmatprep.mubr.f32.mxu0 %v2150
      %v2152 = vand.u32 %v230, 4294901760
      %2153 = vmatmul.mubr.f32.gmra.mrb[0].mxu0 %v2152
      %v2154 = vpop.f32.mrb[0].mxu0
      %v2155 = vadd.f32 %v1782, %v2154
      %v2156 = vpop.f32.mrb[0].mxu0
      %v2157 = vadd.f32 %v1784, %v2156
      %v2158 = vand.u32 %v237, 4294901760
      %2159 = vmatprep.mubr.f32.mxu0 %v2158
      %v2160 = vand.u32 %v236, 4294901760
      %2161 = vmatmul.mubr.f32.gmra.mrb[0].mxu0 %v2160
      %v2162 = vpop.f32.mrb[0].mxu0
      %v2163 = vadd.f32 %v1794, %v2162
      %v2164 = vpop.f32.mrb[0].mxu0
      %v2165 = vadd.f32 %v1796, %v2164
      %v2166 = vand.u32 %v243, 4294901760
      %2167 = vmatprep.mubr.f32.mxu0 %v2166
      %v2168 = vand.u32 %v242, 4294901760
      %2169 = vmatmul.mubr.f32.gmra.mrb[0].mxu0 %v2168
      %v2170 = vpop.f32.mrb[0].mxu0
      %v2171 = vadd.f32 %v1806, %v2170
      %v2172 = vpop.f32.mrb[0].mxu0
      %v2173 = vadd.f32 %v1808, %v2172
      %v2174 = vand.u32 %v249, 4294901760
      %2175 = vmatprep.mubr.f32.mxu0 %v2174
      %v2176 = vand.u32 %v248, 4294901760
      %2177 = vmatmul.mubr.f32.gmra.mrb[0].mxu0 %v2176
      %v2178 = vpop.f32.mrb[0].mxu0
      %v2179 = vadd.f32 %v1818, %v2178
      %v2180 = vpop.f32.mrb[0].mxu0
      %v2181 = vadd.f32 %v1820, %v2180
      %v2182 = vand.u32 %v255, 4294901760
      %2183 = vmatprep.mubr.f32.mxu0 %v2182
      %v2184 = vand.u32 %v254, 4294901760
      %2185 = vmatmul.mubr.f32.gmra.mrb[0].mxu0 %v2184
      %v2186 = vpop.f32.mrb[0].mxu0
      %v2187 = vadd.f32 %v1830, %v2186
      %v2188 = vpop.f32.mrb[0].mxu0
      %v2189 = vadd.f32 %v1832, %v2188
      %v2190 = vand.u32 %v261, 4294901760
      %2191 = vmatprep.mubr.f32.mxu0 %v2190
      %v2192 = vand.u32 %v260, 4294901760
      %2193 = vmatmul.mubr.f32.gmra.mrb[0].mxu0 %v2192
      %v2194 = vpop.f32.mrb[0].mxu0
      %v2195 = vadd.f32 %v1842, %v2194
      %v2196 = vpop.f32.mrb[0].mxu0
      %v2197 = vadd.f32 %v1844, %v2196
      %2198 = vdwg.mxu0
      %v2199 = vand.u32 %v267, 4294901760
      %2200 = vmatprep.subr.mxu0 %v2199
      %v2201 = vand.u32 %v266, 4294901760
      %2202 = vmatpush1.msra.mxu0 %v2201
      %v2203 = vand.u32 %v269, 4294901760
      %2204 = vmatprep.subr.mxu0 %v2203
      %v2205 = vand.u32 %v268, 4294901760
      %2206 = vmatpush1.msra.mxu0 %v2205
      %v2207 = vand.u32 %v271, 4294901760
      %2208 = vmatprep.subr.mxu0 %v2207
      %v2209 = vand.u32 %v270, 4294901760
      %2210 = vmatpush1.msra.mxu0 %v2209
      %v2211 = vand.u32 %v273, 4294901760
      %2212 = vmatprep.subr.mxu0 %v2211
      %v2213 = vand.u32 %v272, 4294901760
      %2214 = vmatpush1.msra.mxu0 %v2213
      %v2215 = vand.u32 %v275, 4294901760
      %2216 = vmatprep.subr.mxu0 %v2215
      %v2217 = vand.u32 %v274, 4294901760
      %2218 = vmatpush1.msra.mxu0 %v2217
      %v2219 = vand.u32 %v277, 4294901760
      %2220 = vmatprep.subr.mxu0 %v2219
      %v2221 = vand.u32 %v276, 4294901760
      %2222 = vmatpush1.msra.mxu0 %v2221
      %v2223 = vand.u32 %v279, 4294901760
      %2224 = vmatprep.subr.mxu0 %v2223
      %v2225 = vand.u32 %v278, 4294901760
      %2226 = vmatpush1.msra.mxu0 %v2225
      %v2227 = vand.u32 %v281, 4294901760
      %2228 = vmatprep.subr.mxu0 %v2227
      %v2229 = vand.u32 %v280, 4294901760
      %2230 = vmatpush1.msra.mxu0 %v2229
      %v2231 = vand.u32 %v283, 4294901760
      %2232 = vmatprep.subr.mxu0 %v2231
      %v2233 = vand.u32 %v282, 4294901760
      %2234 = vmatpush1.msra.mxu0 %v2233
      %v2235 = vand.u32 %v285, 4294901760
      %2236 = vmatprep.subr.mxu0 %v2235
      %v2237 = vand.u32 %v284, 4294901760
      %2238 = vmatpush1.msra.mxu0 %v2237
      %v2239 = vand.u32 %v287, 4294901760
      %2240 = vmatprep.subr.mxu0 %v2239
      %v2241 = vand.u32 %v286, 4294901760
      %2242 = vmatpush1.msra.mxu0 %v2241
      %v2243 = vand.u32 %v289, 4294901760
      %2244 = vmatprep.subr.mxu0 %v2243
      %v2245 = vand.u32 %v288, 4294901760
      %2246 = vmatpush1.msra.mxu0 %v2245
      %v2247 = vand.u32 %v291, 4294901760
      %2248 = vmatprep.subr.mxu0 %v2247
      %v2249 = vand.u32 %v290, 4294901760
      %2250 = vmatpush1.msra.mxu0 %v2249
      %v2251 = vand.u32 %v293, 4294901760
      %2252 = vmatprep.subr.mxu0 %v2251
      %v2253 = vand.u32 %v292, 4294901760
      %2254 = vmatpush1.msra.mxu0 %v2253
      %v2255 = vand.u32 %v295, 4294901760
      %2256 = vmatprep.subr.mxu0 %v2255
      %v2257 = vand.u32 %v294, 4294901760
      %2258 = vmatpush1.msra.mxu0 %v2257
      %v2259 = vand.u32 %v297, 4294901760
      %2260 = vmatprep.subr.mxu0 %v2259
      %v2261 = vand.u32 %v296, 4294901760
      %2262 = vmatpush1.msra.mxu0 %v2261
      %v2263 = vand.u32 %v299, 4294901760
      %2264 = vmatprep.subr.mxu0 %v2263
      %v2265 = vand.u32 %v298, 4294901760
      %2266 = vmatpush1.msra.mxu0 %v2265
      %v2267 = vand.u32 %v301, 4294901760
      %2268 = vmatprep.subr.mxu0 %v2267
      %v2269 = vand.u32 %v300, 4294901760
      %2270 = vmatpush1.msra.mxu0 %v2269
      %v2271 = vand.u32 %v303, 4294901760
      %2272 = vmatprep.subr.mxu0 %v2271
      %v2273 = vand.u32 %v302, 4294901760
      %2274 = vmatpush1.msra.mxu0 %v2273
      %v2275 = vand.u32 %v305, 4294901760
      %2276 = vmatprep.subr.mxu0 %v2275
      %v2277 = vand.u32 %v304, 4294901760
      %2278 = vmatpush1.msra.mxu0 %v2277
      %v2279 = vand.u32 %v307, 4294901760
      %2280 = vmatprep.subr.mxu0 %v2279
      %v2281 = vand.u32 %v306, 4294901760
      %2282 = vmatpush1.msra.mxu0 %v2281
      %v2283 = vand.u32 %v309, 4294901760
      %2284 = vmatprep.subr.mxu0 %v2283
      %v2285 = vand.u32 %v308, 4294901760
      %2286 = vmatpush1.msra.mxu0 %v2285
      %v2287 = vand.u32 %v311, 4294901760
      %2288 = vmatprep.subr.mxu0 %v2287
      %v2289 = vand.u32 %v310, 4294901760
      %2290 = vmatpush1.msra.mxu0 %v2289
      %v2291 = vand.u32 %v313, 4294901760
      %2292 = vmatprep.subr.mxu0 %v2291
      %v2293 = vand.u32 %v312, 4294901760
      %2294 = vmatpush1.msra.mxu0 %v2293
      %v2295 = vand.u32 %v315, 4294901760
      %2296 = vmatprep.subr.mxu0 %v2295
      %v2297 = vand.u32 %v314, 4294901760
      %2298 = vmatpush1.msra.mxu0 %v2297
      %v2299 = vand.u32 %v317, 4294901760
      %2300 = vmatprep.subr.mxu0 %v2299
      %v2301 = vand.u32 %v316, 4294901760
      %2302 = vmatpush1.msra.mxu0 %v2301
      %v2303 = vand.u32 %v319, 4294901760
      %2304 = vmatprep.subr.mxu0 %v2303
      %v2305 = vand.u32 %v318, 4294901760
      %2306 = vmatpush1.msra.mxu0 %v2305
      %v2307 = vand.u32 %v321, 4294901760
      %2308 = vmatprep.subr.mxu0 %v2307
      %v2309 = vand.u32 %v320, 4294901760
      %2310 = vmatpush1.msra.mxu0 %v2309
      %v2311 = vand.u32 %v323, 4294901760
      %2312 = vmatprep.subr.mxu0 %v2311
      %v2313 = vand.u32 %v322, 4294901760
      %2314 = vmatpush1.msra.mxu0 %v2313
      %v2315 = vand.u32 %v325, 4294901760
      %2316 = vmatprep.subr.mxu0 %v2315
      %v2317 = vand.u32 %v324, 4294901760
      %2318 = vmatpush1.msra.mxu0 %v2317
      %v2319 = vand.u32 %v327, 4294901760
      %2320 = vmatprep.subr.mxu0 %v2319
      %v2321 = vand.u32 %v326, 4294901760
      %2322 = vmatpush1.msra.mxu0 %v2321
      %v2323 = vand.u32 %v329, 4294901760
      %2324 = vmatprep.subr.mxu0 %v2323
      %v2325 = vand.u32 %v328, 4294901760
      %2326 = vmatpush1.msra.mxu0 %v2325
      %v2327 = vand.u32 %v195, 4294901760
      %2328 = vmatprep.mubr.f32.mxu0 %v2327
      %v2329 = vand.u32 %v194, 4294901760
      %2330 = vmatmul.mubr.f32.gmra.mrb[0].mxu0 %v2329
      %v2331 = vpop.f32.mrb[0].mxu0
      %v2332 = vadd.f32 %v2107, %v2331
      %v2333 = vpop.f32.mrb[0].mxu0
      %v2334 = vadd.f32 %v2109, %v2333
      %v2335 = vand.u32 %v201, 4294901760
      %2336 = vmatprep.mubr.f32.mxu0 %v2335
      %v2337 = vand.u32 %v200, 4294901760
      %2338 = vmatmul.mubr.f32.gmra.mrb[0].mxu0 %v2337
      %v2339 = vpop.f32.mrb[0].mxu0
      %v2340 = vadd.f32 %v2115, %v2339
      %v2341 = vpop.f32.mrb[0].mxu0
      %v2342 = vadd.f32 %v2117, %v2341
      %v2343 = vand.u32 %v207, 4294901760
      %2344 = vmatprep.mubr.f32.mxu0 %v2343
      %v2345 = vand.u32 %v206, 4294901760
      %2346 = vmatmul.mubr.f32.gmra.mrb[0].mxu0 %v2345
      %v2347 = vpop.f32.mrb[0].mxu0
      %v2348 = vadd.f32 %v2123, %v2347
      %v2349 = vpop.f32.mrb[0].mxu0
      %v2350 = vadd.f32 %v2125, %v2349
      %v2351 = vand.u32 %v213, 4294901760
      %2352 = vmatprep.mubr.f32.mxu0 %v2351
      %v2353 = vand.u32 %v212, 4294901760
      %2354 = vmatmul.mubr.f32.gmra.mrb[0].mxu0 %v2353
      %v2355 = vpop.f32.mrb[0].mxu0
      %v2356 = vadd.f32 %v2131, %v2355
      %v2357 = vpop.f32.mrb[0].mxu0
      %v2358 = vadd.f32 %v2133, %v2357
      %v2359 = vand.u32 %v219, 4294901760
      %2360 = vmatprep.mubr.f32.mxu0 %v2359
      %v2361 = vand.u32 %v218, 4294901760
      %2362 = vmatmul.mubr.f32.gmra.mrb[0].mxu0 %v2361
      %v2363 = vpop.f32.mrb[0].mxu0
      %v2364 = vadd.f32 %v2139, %v2363
      %v2365 = vpop.f32.mrb[0].mxu0
      %v2366 = vadd.f32 %v2141, %v2365
      %v2367 = vand.u32 %v225, 4294901760
      %2368 = vmatprep.mubr.f32.mxu0 %v2367
      %v2369 = vand.u32 %v224, 4294901760
      %2370 = vmatmul.mubr.f32.gmra.mrb[0].mxu0 %v2369
      %v2371 = vpop.f32.mrb[0].mxu0
      %v2372 = vadd.f32 %v2147, %v2371
      %v2373 = vpop.f32.mrb[0].mxu0
      %v2374 = vadd.f32 %v2149, %v2373
      %v2375 = vand.u32 %v231, 4294901760
      %2376 = vmatprep.mubr.f32.mxu0 %v2375
      %v2377 = vand.u32 %v230, 4294901760
      %2378 = vmatmul.mubr.f32.gmra.mrb[0].mxu0 %v2377
      %v2379 = vpop.f32.mrb[0].mxu0
      %v2380 = vadd.f32 %v2155, %v2379
      %v2381 = vpop.f32.mrb[0].mxu0
      %v2382 = vadd.f32 %v2157, %v2381
      %v2383 = vand.u32 %v237, 4294901760
      %2384 = vmatprep.mubr.f32.mxu0 %v2383
      %v2385 = vand.u32 %v236, 4294901760
      %2386 = vmatmul.mubr.f32.gmra.mrb[0].mxu0 %v2385
      %v2387 = vpop.f32.mrb[0].mxu0
      %v2388 = vadd.f32 %v2163, %v2387
      %v2389 = vpop.f32.mrb[0].mxu0
      %v2390 = vadd.f32 %v2165, %v2389
      %v2391 = vand.u32 %v243, 4294901760
      %2392 = vmatprep.mubr.f32.mxu0 %v2391
      %v2393 = vand.u32 %v242, 4294901760
      %2394 = vmatmul.mubr.f32.gmra.mrb[0].mxu0 %v2393
      %v2395 = vpop.f32.mrb[0].mxu0
      %v2396 = vadd.f32 %v2171, %v2395
      %v2397 = vpop.f32.mrb[0].mxu0
      %v2398 = vadd.f32 %v2173, %v2397
      %v2399 = vand.u32 %v249, 4294901760
      %2400 = vmatprep.mubr.f32.mxu0 %v2399
      %v2401 = vand.u32 %v248, 4294901760
      %2402 = vmatmul.mubr.f32.gmra.mrb[0].mxu0 %v2401
      %v2403 = vpop.f32.mrb[0].mxu0
      %v2404 = vadd.f32 %v2179, %v2403
      %v2405 = vpop.f32.mrb[0].mxu0
      %v2406 = vadd.f32 %v2181, %v2405
      %v2407 = vand.u32 %v255, 4294901760
      %2408 = vmatprep.mubr.f32.mxu0 %v2407
      %v2409 = vand.u32 %v254, 4294901760
      %2410 = vmatmul.mubr.f32.gmra.mrb[0].mxu0 %v2409
      %v2411 = vpop.f32.mrb[0].mxu0
      %v2412 = vadd.f32 %v2187, %v2411
      %v2413 = vpop.f32.mrb[0].mxu0
      %v2414 = vadd.f32 %v2189, %v2413
      %v2415 = vand.u32 %v261, 4294901760
      %2416 = vmatprep.mubr.f32.mxu0 %v2415
      %v2417 = vand.u32 %v260, 4294901760
      %2418 = vmatmul.mubr.f32.gmra.mrb[0].mxu0 %v2417
      %v2419 = vpop.f32.mrb[0].mxu0
      %v2420 = vadd.f32 %v2195, %v2419
      %v2421 = vpop.f32.mrb[0].mxu0
      %v2422 = vadd.f32 %v2197, %v2421
      %2423 = vdwg.mxu0
      %v2424 = vand.u32 %v331, 4294901760
      %2425 = vmatprep.subr.mxu0 %v2424
      %v2426 = vand.u32 %v330, 4294901760
      %2427 = vmatpush1.msra.mxu0 %v2426
      %v2428 = vand.u32 %v333, 4294901760
      %2429 = vmatprep.subr.mxu0 %v2428
      %v2430 = vand.u32 %v332, 4294901760
      %2431 = vmatpush1.msra.mxu0 %v2430
      %v2432 = vand.u32 %v335, 4294901760
      %2433 = vmatprep.subr.mxu0 %v2432
      %v2434 = vand.u32 %v334, 4294901760
      %2435 = vmatpush1.msra.mxu0 %v2434
      %v2436 = vand.u32 %v337, 4294901760
      %2437 = vmatprep.subr.mxu0 %v2436
      %v2438 = vand.u32 %v336, 4294901760
      %2439 = vmatpush1.msra.mxu0 %v2438
      %v2440 = vand.u32 %v339, 4294901760
      %2441 = vmatprep.subr.mxu0 %v2440
      %v2442 = vand.u32 %v338, 4294901760
      %2443 = vmatpush1.msra.mxu0 %v2442
      %v2444 = vand.u32 %v341, 4294901760
      %2445 = vmatprep.subr.mxu0 %v2444
      %v2446 = vand.u32 %v340, 4294901760
      %2447 = vmatpush1.msra.mxu0 %v2446
      %v2448 = vand.u32 %v343, 4294901760
      %2449 = vmatprep.subr.mxu0 %v2448
      %v2450 = vand.u32 %v342, 4294901760
      %2451 = vmatpush1.msra.mxu0 %v2450
      %v2452 = vand.u32 %v345, 4294901760
      %2453 = vmatprep.subr.mxu0 %v2452
      %v2454 = vand.u32 %v344, 4294901760
      %2455 = vmatpush1.msra.mxu0 %v2454
      %v2456 = vand.u32 %v347, 4294901760
      %2457 = vmatprep.subr.mxu0 %v2456
      %v2458 = vand.u32 %v346, 4294901760
      %2459 = vmatpush1.msra.mxu0 %v2458
      %v2460 = vand.u32 %v349, 4294901760
      %2461 = vmatprep.subr.mxu0 %v2460
      %v2462 = vand.u32 %v348, 4294901760
      %2463 = vmatpush1.msra.mxu0 %v2462
      %v2464 = vand.u32 %v351, 4294901760
      %2465 = vmatprep.subr.mxu0 %v2464
      %v2466 = vand.u32 %v350, 4294901760
      %2467 = vmatpush1.msra.mxu0 %v2466
      %v2468 = vand.u32 %v353, 4294901760
      %2469 = vmatprep.subr.mxu0 %v2468
      %v2470 = vand.u32 %v352, 4294901760
      %2471 = vmatpush1.msra.mxu0 %v2470
      %v2472 = vand.u32 %v355, 4294901760
      %2473 = vmatprep.subr.mxu0 %v2472
      %v2474 = vand.u32 %v354, 4294901760
      %2475 = vmatpush1.msra.mxu0 %v2474
      %v2476 = vand.u32 %v357, 4294901760
      %2477 = vmatprep.subr.mxu0 %v2476
      %v2478 = vand.u32 %v356, 4294901760
      %2479 = vmatpush1.msra.mxu0 %v2478
      %v2480 = vand.u32 %v359, 4294901760
      %2481 = vmatprep.subr.mxu0 %v2480
      %v2482 = vand.u32 %v358, 4294901760
      %2483 = vmatpush1.msra.mxu0 %v2482
      %v2484 = vand.u32 %v361, 4294901760
      %2485 = vmatprep.subr.mxu0 %v2484
      %v2486 = vand.u32 %v360, 4294901760
      %2487 = vmatpush1.msra.mxu0 %v2486
      %v2488 = vand.u32 %v363, 4294901760
      %2489 = vmatprep.subr.mxu0 %v2488
      %v2490 = vand.u32 %v362, 4294901760
      %2491 = vmatpush1.msra.mxu0 %v2490
      %v2492 = vand.u32 %v365, 4294901760
      %2493 = vmatprep.subr.mxu0 %v2492
      %v2494 = vand.u32 %v364, 4294901760
      %2495 = vmatpush1.msra.mxu0 %v2494
      %v2496 = vand.u32 %v367, 4294901760
      %2497 = vmatprep.subr.mxu0 %v2496
      %v2498 = vand.u32 %v366, 4294901760
      %2499 = vmatpush1.msra.mxu0 %v2498
      %v2500 = vand.u32 %v369, 4294901760
      %2501 = vmatprep.subr.mxu0 %v2500
      %v2502 = vand.u32 %v368, 4294901760
      %2503 = vmatpush1.msra.mxu0 %v2502
      %v2504 = vand.u32 %v371, 4294901760
      %2505 = vmatprep.subr.mxu0 %v2504
      %v2506 = vand.u32 %v370, 4294901760
      %2507 = vmatpush1.msra.mxu0 %v2506
      %v2508 = vand.u32 %v373, 4294901760
      %2509 = vmatprep.subr.mxu0 %v2508
      %v2510 = vand.u32 %v372, 4294901760
      %2511 = vmatpush1.msra.mxu0 %v2510
      %v2512 = vand.u32 %v375, 4294901760
      %2513 = vmatprep.subr.mxu0 %v2512
      %v2514 = vand.u32 %v374, 4294901760
      %2515 = vmatpush1.msra.mxu0 %v2514
      %v2516 = vand.u32 %v377, 4294901760
      %2517 = vmatprep.subr.mxu0 %v2516
      %v2518 = vand.u32 %v376, 4294901760
      %2519 = vmatpush1.msra.mxu0 %v2518
      %v2520 = vand.u32 %v379, 4294901760
      %2521 = vmatprep.subr.mxu0 %v2520
      %v2522 = vand.u32 %v378, 4294901760
      %2523 = vmatpush1.msra.mxu0 %v2522
      %v2524 = vand.u32 %v381, 4294901760
      %2525 = vmatprep.subr.mxu0 %v2524
      %v2526 = vand.u32 %v380, 4294901760
      %2527 = vmatpush1.msra.mxu0 %v2526
      %v2528 = vand.u32 %v383, 4294901760
      %2529 = vmatprep.subr.mxu0 %v2528
      %v2530 = vand.u32 %v382, 4294901760
      %2531 = vmatpush1.msra.mxu0 %v2530
      %v2532 = vand.u32 %v385, 4294901760
      %2533 = vmatprep.subr.mxu0 %v2532
      %v2534 = vand.u32 %v384, 4294901760
      %2535 = vmatpush1.msra.mxu0 %v2534
      %v2536 = vand.u32 %v387, 4294901760
      %2537 = vmatprep.subr.mxu0 %v2536
      %v2538 = vand.u32 %v386, 4294901760
      %2539 = vmatpush1.msra.mxu0 %v2538
      %v2540 = vand.u32 %v389, 4294901760
      %2541 = vmatprep.subr.mxu0 %v2540
      %v2542 = vand.u32 %v388, 4294901760
      %2543 = vmatpush1.msra.mxu0 %v2542
      %v2544 = vand.u32 %v391, 4294901760
      %2545 = vmatprep.subr.mxu0 %v2544
      %v2546 = vand.u32 %v390, 4294901760
      %2547 = vmatpush1.msra.mxu0 %v2546
      %v2548 = vand.u32 %v393, 4294901760
      %2549 = vmatprep.subr.mxu0 %v2548
      %v2550 = vand.u32 %v392, 4294901760
      %2551 = vmatpush1.msra.mxu0 %v2550
      %v2552 = vand.u32 %v197, 4294901760
      %v2553 = vsub.f32 %v197, %v2552
      %v2554 = vand.u32 %v2553, 4294901760
      %v2555 = vsub.f32 %v2553, %v2554
      %v2556 = vand.u32 %v2555, 4294901760
      %2557 = vmatprep.mubr.f32.mxu0 %v2556
      %v2558 = vand.u32 %v196, 4294901760
      %v2559 = vsub.f32 %v196, %v2558
      %v2560 = vand.u32 %v2559, 4294901760
      %v2561 = vsub.f32 %v2559, %v2560
      %v2562 = vand.u32 %v2561, 4294901760
      %2563 = vmatmul.mubr.f32.gmra.mrb[0].mxu0 %v2562
      %v2564 = vpop.f32.mrb[0].mxu0
      %v2565 = vadd.f32 %v2332, %v2564
      %v2566 = vpop.f32.mrb[0].mxu0
      %v2567 = vadd.f32 %v2334, %v2566
      %v2568 = vand.u32 %v203, 4294901760
      %v2569 = vsub.f32 %v203, %v2568
      %v2570 = vand.u32 %v2569, 4294901760
      %v2571 = vsub.f32 %v2569, %v2570
      %v2572 = vand.u32 %v2571, 4294901760
      %2573 = vmatprep.mubr.f32.mxu0 %v2572
      %v2574 = vand.u32 %v202, 4294901760
      %v2575 = vsub.f32 %v202, %v2574
      %v2576 = vand.u32 %v2575, 4294901760
      %v2577 = vsub.f32 %v2575, %v2576
      %v2578 = vand.u32 %v2577, 4294901760
      %2579 = vmatmul.mubr.f32.gmra.mrb[0].mxu0 %v2578
      %v2580 = vpop.f32.mrb[0].mxu0
      %v2581 = vadd.f32 %v2340, %v2580
      %v2582 = vpop.f32.mrb[0].mxu0
      %v2583 = vadd.f32 %v2342, %v2582
      %v2584 = vand.u32 %v209, 4294901760
      %v2585 = vsub.f32 %v209, %v2584
      %v2586 = vand.u32 %v2585, 4294901760
      %v2587 = vsub.f32 %v2585, %v2586
      %v2588 = vand.u32 %v2587, 4294901760
      %2589 = vmatprep.mubr.f32.mxu0 %v2588
      %v2590 = vand.u32 %v208, 4294901760
      %v2591 = vsub.f32 %v208, %v2590
      %v2592 = vand.u32 %v2591, 4294901760
      %v2593 = vsub.f32 %v2591, %v2592
      %v2594 = vand.u32 %v2593, 4294901760
      %2595 = vmatmul.mubr.f32.gmra.mrb[0].mxu0 %v2594
      %v2596 = vpop.f32.mrb[0].mxu0
      %v2597 = vadd.f32 %v2348, %v2596
      %v2598 = vpop.f32.mrb[0].mxu0
      %v2599 = vadd.f32 %v2350, %v2598
      %v2600 = vand.u32 %v215, 4294901760
      %v2601 = vsub.f32 %v215, %v2600
      %v2602 = vand.u32 %v2601, 4294901760
      %v2603 = vsub.f32 %v2601, %v2602
      %v2604 = vand.u32 %v2603, 4294901760
      %2605 = vmatprep.mubr.f32.mxu0 %v2604
      %v2606 = vand.u32 %v214, 4294901760
      %v2607 = vsub.f32 %v214, %v2606
      %v2608 = vand.u32 %v2607, 4294901760
      %v2609 = vsub.f32 %v2607, %v2608
      %v2610 = vand.u32 %v2609, 4294901760
      %2611 = vmatmul.mubr.f32.gmra.mrb[0].mxu0 %v2610
      %v2612 = vpop.f32.mrb[0].mxu0
      %v2613 = vadd.f32 %v2356, %v2612
      %v2614 = vpop.f32.mrb[0].mxu0
      %v2615 = vadd.f32 %v2358, %v2614
      %v2616 = vand.u32 %v221, 4294901760
      %v2617 = vsub.f32 %v221, %v2616
      %v2618 = vand.u32 %v2617, 4294901760
      %v2619 = vsub.f32 %v2617, %v2618
      %v2620 = vand.u32 %v2619, 4294901760
      %2621 = vmatprep.mubr.f32.mxu0 %v2620
      %v2622 = vand.u32 %v220, 4294901760
      %v2623 = vsub.f32 %v220, %v2622
      %v2624 = vand.u32 %v2623, 4294901760
      %v2625 = vsub.f32 %v2623, %v2624
      %v2626 = vand.u32 %v2625, 4294901760
      %2627 = vmatmul.mubr.f32.gmra.mrb[0].mxu0 %v2626
      %v2628 = vpop.f32.mrb[0].mxu0
      %v2629 = vadd.f32 %v2364, %v2628
      %v2630 = vpop.f32.mrb[0].mxu0
      %v2631 = vadd.f32 %v2366, %v2630
      %v2632 = vand.u32 %v227, 4294901760
      %v2633 = vsub.f32 %v227, %v2632
      %v2634 = vand.u32 %v2633, 4294901760
      %v2635 = vsub.f32 %v2633, %v2634
      %v2636 = vand.u32 %v2635, 4294901760
      %2637 = vmatprep.mubr.f32.mxu0 %v2636
      %v2638 = vand.u32 %v226, 4294901760
      %v2639 = vsub.f32 %v226, %v2638
      %v2640 = vand.u32 %v2639, 4294901760
      %v2641 = vsub.f32 %v2639, %v2640
      %v2642 = vand.u32 %v2641, 4294901760
      %2643 = vmatmul.mubr.f32.gmra.mrb[0].mxu0 %v2642
      %v2644 = vpop.f32.mrb[0].mxu0
      %v2645 = vadd.f32 %v2372, %v2644
      %v2646 = vpop.f32.mrb[0].mxu0
      %v2647 = vadd.f32 %v2374, %v2646
      %v2648 = vand.u32 %v233, 4294901760
      %v2649 = vsub.f32 %v233, %v2648
      %v2650 = vand.u32 %v2649, 4294901760
      %v2651 = vsub.f32 %v2649, %v2650
      %v2652 = vand.u32 %v2651, 4294901760
      %2653 = vmatprep.mubr.f32.mxu0 %v2652
      %v2654 = vand.u32 %v232, 4294901760
      %v2655 = vsub.f32 %v232, %v2654
      %v2656 = vand.u32 %v2655, 4294901760
      %v2657 = vsub.f32 %v2655, %v2656
      %v2658 = vand.u32 %v2657, 4294901760
      %2659 = vmatmul.mubr.f32.gmra.mrb[0].mxu0 %v2658
      %v2660 = vpop.f32.mrb[0].mxu0
      %v2661 = vadd.f32 %v2380, %v2660
      %v2662 = vpop.f32.mrb[0].mxu0
      %v2663 = vadd.f32 %v2382, %v2662
      %v2664 = vand.u32 %v239, 4294901760
      %v2665 = vsub.f32 %v239, %v2664
      %v2666 = vand.u32 %v2665, 4294901760
      %v2667 = vsub.f32 %v2665, %v2666
      %v2668 = vand.u32 %v2667, 4294901760
      %2669 = vmatprep.mubr.f32.mxu0 %v2668
      %v2670 = vand.u32 %v238, 4294901760
      %v2671 = vsub.f32 %v238, %v2670
      %v2672 = vand.u32 %v2671, 4294901760
      %v2673 = vsub.f32 %v2671, %v2672
      %v2674 = vand.u32 %v2673, 4294901760
      %2675 = vmatmul.mubr.f32.gmra.mrb[0].mxu0 %v2674
      %v2676 = vpop.f32.mrb[0].mxu0
      %v2677 = vadd.f32 %v2388, %v2676
      %v2678 = vpop.f32.mrb[0].mxu0
      %v2679 = vadd.f32 %v2390, %v2678
      %v2680 = vand.u32 %v245, 4294901760
      %v2681 = vsub.f32 %v245, %v2680
      %v2682 = vand.u32 %v2681, 4294901760
      %v2683 = vsub.f32 %v2681, %v2682
      %v2684 = vand.u32 %v2683, 4294901760
      %2685 = vmatprep.mubr.f32.mxu0 %v2684
      %v2686 = vand.u32 %v244, 4294901760
      %v2687 = vsub.f32 %v244, %v2686
      %v2688 = vand.u32 %v2687, 4294901760
      %v2689 = vsub.f32 %v2687, %v2688
      %v2690 = vand.u32 %v2689, 4294901760
      %2691 = vmatmul.mubr.f32.gmra.mrb[0].mxu0 %v2690
      %v2692 = vpop.f32.mrb[0].mxu0
      %v2693 = vadd.f32 %v2396, %v2692
      %v2694 = vpop.f32.mrb[0].mxu0
      %v2695 = vadd.f32 %v2398, %v2694
      %v2696 = vand.u32 %v251, 4294901760
      %v2697 = vsub.f32 %v251, %v2696
      %v2698 = vand.u32 %v2697, 4294901760
      %v2699 = vsub.f32 %v2697, %v2698
      %v2700 = vand.u32 %v2699, 4294901760
      %2701 = vmatprep.mubr.f32.mxu0 %v2700
      %v2702 = vand.u32 %v250, 4294901760
      %v2703 = vsub.f32 %v250, %v2702
      %v2704 = vand.u32 %v2703, 4294901760
      %v2705 = vsub.f32 %v2703, %v2704
      %v2706 = vand.u32 %v2705, 4294901760
      %2707 = vmatmul.mubr.f32.gmra.mrb[0].mxu0 %v2706
      %v2708 = vpop.f32.mrb[0].mxu0
      %v2709 = vadd.f32 %v2404, %v2708
      %v2710 = vpop.f32.mrb[0].mxu0
      %v2711 = vadd.f32 %v2406, %v2710
      %v2712 = vand.u32 %v257, 4294901760
      %v2713 = vsub.f32 %v257, %v2712
      %v2714 = vand.u32 %v2713, 4294901760
      %v2715 = vsub.f32 %v2713, %v2714
      %v2716 = vand.u32 %v2715, 4294901760
      %2717 = vmatprep.mubr.f32.mxu0 %v2716
      %v2718 = vand.u32 %v256, 4294901760
      %v2719 = vsub.f32 %v256, %v2718
      %v2720 = vand.u32 %v2719, 4294901760
      %v2721 = vsub.f32 %v2719, %v2720
      %v2722 = vand.u32 %v2721, 4294901760
      %2723 = vmatmul.mubr.f32.gmra.mrb[0].mxu0 %v2722
      %v2724 = vpop.f32.mrb[0].mxu0
      %v2725 = vadd.f32 %v2412, %v2724
      %v2726 = vpop.f32.mrb[0].mxu0
      %v2727 = vadd.f32 %v2414, %v2726
      %v2728 = vand.u32 %v263, 4294901760
      %v2729 = vsub.f32 %v263, %v2728
      %v2730 = vand.u32 %v2729, 4294901760
      %v2731 = vsub.f32 %v2729, %v2730
      %v2732 = vand.u32 %v2731, 4294901760
      %2733 = vmatprep.mubr.f32.mxu0 %v2732
      %v2734 = vand.u32 %v262, 4294901760
      %v2735 = vsub.f32 %v262, %v2734
      %v2736 = vand.u32 %v2735, 4294901760
      %v2737 = vsub.f32 %v2735, %v2736
      %v2738 = vand.u32 %v2737, 4294901760
      %2739 = vmatmul.mubr.f32.gmra.mrb[0].mxu0 %v2738
      %v2740 = vpop.f32.mrb[0].mxu0
      %v2741 = vadd.f32 %v2420, %v2740
      %v2742 = vpop.f32.mrb[0].mxu0
      %v2743 = vadd.f32 %v2422, %v2742
      %2744 = vdwg.mxu0
      %v2745 = vand.u32 %v331, 4294901760
      %v2746 = vsub.f32 %v331, %v2745
      %v2747 = vand.u32 %v2746, 4294901760
      %v2748 = vsub.f32 %v2746, %v2747
      %v2749 = vand.u32 %v2748, 4294901760
      %2750 = vmatprep.subr.mxu0 %v2749
      %v2751 = vand.u32 %v330, 4294901760
      %v2752 = vsub.f32 %v330, %v2751
      %v2753 = vand.u32 %v2752, 4294901760
      %v2754 = vsub.f32 %v2752, %v2753
      %v2755 = vand.u32 %v2754, 4294901760
      %2756 = vmatpush1.msra.mxu0 %v2755
      %v2757 = vand.u32 %v333, 4294901760
      %v2758 = vsub.f32 %v333, %v2757
      %v2759 = vand.u32 %v2758, 4294901760
      %v2760 = vsub.f32 %v2758, %v2759
      %v2761 = vand.u32 %v2760, 4294901760
      %2762 = vmatprep.subr.mxu0 %v2761
      %v2763 = vand.u32 %v332, 4294901760
      %v2764 = vsub.f32 %v332, %v2763
      %v2765 = vand.u32 %v2764, 4294901760
      %v2766 = vsub.f32 %v2764, %v2765
      %v2767 = vand.u32 %v2766, 4294901760
      %2768 = vmatpush1.msra.mxu0 %v2767
      %v2769 = vand.u32 %v335, 4294901760
      %v2770 = vsub.f32 %v335, %v2769
      %v2771 = vand.u32 %v2770, 4294901760
      %v2772 = vsub.f32 %v2770, %v2771
      %v2773 = vand.u32 %v2772, 4294901760
      %2774 = vmatprep.subr.mxu0 %v2773
      %v2775 = vand.u32 %v334, 4294901760
      %v2776 = vsub.f32 %v334, %v2775
      %v2777 = vand.u32 %v2776, 4294901760
      %v2778 = vsub.f32 %v2776, %v2777
      %v2779 = vand.u32 %v2778, 4294901760
      %2780 = vmatpush1.msra.mxu0 %v2779
      %v2781 = vand.u32 %v337, 4294901760
      %v2782 = vsub.f32 %v337, %v2781
      %v2783 = vand.u32 %v2782, 4294901760
      %v2784 = vsub.f32 %v2782, %v2783
      %v2785 = vand.u32 %v2784, 4294901760
      %2786 = vmatprep.subr.mxu0 %v2785
      %v2787 = vand.u32 %v336, 4294901760
      %v2788 = vsub.f32 %v336, %v2787
      %v2789 = vand.u32 %v2788, 4294901760
      %v2790 = vsub.f32 %v2788, %v2789
      %v2791 = vand.u32 %v2790, 4294901760
      %2792 = vmatpush1.msra.mxu0 %v2791
      %v2793 = vand.u32 %v339, 4294901760
      %v2794 = vsub.f32 %v339, %v2793
      %v2795 = vand.u32 %v2794, 4294901760
      %v2796 = vsub.f32 %v2794, %v2795
      %v2797 = vand.u32 %v2796, 4294901760
      %2798 = vmatprep.subr.mxu0 %v2797
      %v2799 = vand.u32 %v338, 4294901760
      %v2800 = vsub.f32 %v338, %v2799
      %v2801 = vand.u32 %v2800, 4294901760
      %v2802 = vsub.f32 %v2800, %v2801
      %v2803 = vand.u32 %v2802, 4294901760
      %2804 = vmatpush1.msra.mxu0 %v2803
      %v2805 = vand.u32 %v341, 4294901760
      %v2806 = vsub.f32 %v341, %v2805
      %v2807 = vand.u32 %v2806, 4294901760
      %v2808 = vsub.f32 %v2806, %v2807
      %v2809 = vand.u32 %v2808, 4294901760
      %2810 = vmatprep.subr.mxu0 %v2809
      %v2811 = vand.u32 %v340, 4294901760
      %v2812 = vsub.f32 %v340, %v2811
      %v2813 = vand.u32 %v2812, 4294901760
      %v2814 = vsub.f32 %v2812, %v2813
      %v2815 = vand.u32 %v2814, 4294901760
      %2816 = vmatpush1.msra.mxu0 %v2815
      %v2817 = vand.u32 %v343, 4294901760
      %v2818 = vsub.f32 %v343, %v2817
      %v2819 = vand.u32 %v2818, 4294901760
      %v2820 = vsub.f32 %v2818, %v2819
      %v2821 = vand.u32 %v2820, 4294901760
      %2822 = vmatprep.subr.mxu0 %v2821
      %v2823 = vand.u32 %v342, 4294901760
      %v2824 = vsub.f32 %v342, %v2823
      %v2825 = vand.u32 %v2824, 4294901760
      %v2826 = vsub.f32 %v2824, %v2825
      %v2827 = vand.u32 %v2826, 4294901760
      %2828 = vmatpush1.msra.mxu0 %v2827
      %v2829 = vand.u32 %v345, 4294901760
      %v2830 = vsub.f32 %v345, %v2829
      %v2831 = vand.u32 %v2830, 4294901760
      %v2832 = vsub.f32 %v2830, %v2831
      %v2833 = vand.u32 %v2832, 4294901760
      %2834 = vmatprep.subr.mxu0 %v2833
      %v2835 = vand.u32 %v344, 4294901760
      %v2836 = vsub.f32 %v344, %v2835
      %v2837 = vand.u32 %v2836, 4294901760
      %v2838 = vsub.f32 %v2836, %v2837
      %v2839 = vand.u32 %v2838, 4294901760
      %2840 = vmatpush1.msra.mxu0 %v2839
      %v2841 = vand.u32 %v347, 4294901760
      %v2842 = vsub.f32 %v347, %v2841
      %v2843 = vand.u32 %v2842, 4294901760
      %v2844 = vsub.f32 %v2842, %v2843
      %v2845 = vand.u32 %v2844, 4294901760
      %2846 = vmatprep.subr.mxu0 %v2845
      %v2847 = vand.u32 %v346, 4294901760
      %v2848 = vsub.f32 %v346, %v2847
      %v2849 = vand.u32 %v2848, 4294901760
      %v2850 = vsub.f32 %v2848, %v2849
      %v2851 = vand.u32 %v2850, 4294901760
      %2852 = vmatpush1.msra.mxu0 %v2851
      %v2853 = vand.u32 %v349, 4294901760
      %v2854 = vsub.f32 %v349, %v2853
      %v2855 = vand.u32 %v2854, 4294901760
      %v2856 = vsub.f32 %v2854, %v2855
      %v2857 = vand.u32 %v2856, 4294901760
      %2858 = vmatprep.subr.mxu0 %v2857
      %v2859 = vand.u32 %v348, 4294901760
      %v2860 = vsub.f32 %v348, %v2859
      %v2861 = vand.u32 %v2860, 4294901760
      %v2862 = vsub.f32 %v2860, %v2861
      %v2863 = vand.u32 %v2862, 4294901760
      %2864 = vmatpush1.msra.mxu0 %v2863
      %v2865 = vand.u32 %v351, 4294901760
      %v2866 = vsub.f32 %v351, %v2865
      %v2867 = vand.u32 %v2866, 4294901760
      %v2868 = vsub.f32 %v2866, %v2867
      %v2869 = vand.u32 %v2868, 4294901760
      %2870 = vmatprep.subr.mxu0 %v2869
      %v2871 = vand.u32 %v350, 4294901760
      %v2872 = vsub.f32 %v350, %v2871
      %v2873 = vand.u32 %v2872, 4294901760
      %v2874 = vsub.f32 %v2872, %v2873
      %v2875 = vand.u32 %v2874, 4294901760
      %2876 = vmatpush1.msra.mxu0 %v2875
      %v2877 = vand.u32 %v353, 4294901760
      %v2878 = vsub.f32 %v353, %v2877
      %v2879 = vand.u32 %v2878, 4294901760
      %v2880 = vsub.f32 %v2878, %v2879
      %v2881 = vand.u32 %v2880, 4294901760
      %2882 = vmatprep.subr.mxu0 %v2881
      %v2883 = vand.u32 %v352, 4294901760
      %v2884 = vsub.f32 %v352, %v2883
      %v2885 = vand.u32 %v2884, 4294901760
      %v2886 = vsub.f32 %v2884, %v2885
      %v2887 = vand.u32 %v2886, 4294901760
      %2888 = vmatpush1.msra.mxu0 %v2887
      %v2889 = vand.u32 %v355, 4294901760
      %v2890 = vsub.f32 %v355, %v2889
      %v2891 = vand.u32 %v2890, 4294901760
      %v2892 = vsub.f32 %v2890, %v2891
      %v2893 = vand.u32 %v2892, 4294901760
      %2894 = vmatprep.subr.mxu0 %v2893
      %v2895 = vand.u32 %v354, 4294901760
      %v2896 = vsub.f32 %v354, %v2895
      %v2897 = vand.u32 %v2896, 4294901760
      %v2898 = vsub.f32 %v2896, %v2897
      %v2899 = vand.u32 %v2898, 4294901760
      %2900 = vmatpush1.msra.mxu0 %v2899
      %v2901 = vand.u32 %v357, 4294901760
      %v2902 = vsub.f32 %v357, %v2901
      %v2903 = vand.u32 %v2902, 4294901760
      %v2904 = vsub.f32 %v2902, %v2903
      %v2905 = vand.u32 %v2904, 4294901760
      %2906 = vmatprep.subr.mxu0 %v2905
      %v2907 = vand.u32 %v356, 4294901760
      %v2908 = vsub.f32 %v356, %v2907
      %v2909 = vand.u32 %v2908, 4294901760
      %v2910 = vsub.f32 %v2908, %v2909
      %v2911 = vand.u32 %v2910, 4294901760
      %2912 = vmatpush1.msra.mxu0 %v2911
      %v2913 = vand.u32 %v359, 4294901760
      %v2914 = vsub.f32 %v359, %v2913
      %v2915 = vand.u32 %v2914, 4294901760
      %v2916 = vsub.f32 %v2914, %v2915
      %v2917 = vand.u32 %v2916, 4294901760
      %2918 = vmatprep.subr.mxu0 %v2917
      %v2919 = vand.u32 %v358, 4294901760
      %v2920 = vsub.f32 %v358, %v2919
      %v2921 = vand.u32 %v2920, 4294901760
      %v2922 = vsub.f32 %v2920, %v2921
      %v2923 = vand.u32 %v2922, 4294901760
      %2924 = vmatpush1.msra.mxu0 %v2923
      %v2925 = vand.u32 %v361, 4294901760
      %v2926 = vsub.f32 %v361, %v2925
      %v2927 = vand.u32 %v2926, 4294901760
      %v2928 = vsub.f32 %v2926, %v2927
      %v2929 = vand.u32 %v2928, 4294901760
      %2930 = vmatprep.subr.mxu0 %v2929
      %v2931 = vand.u32 %v360, 4294901760
      %v2932 = vsub.f32 %v360, %v2931
      %v2933 = vand.u32 %v2932, 4294901760
      %v2934 = vsub.f32 %v2932, %v2933
      %v2935 = vand.u32 %v2934, 4294901760
      %2936 = vmatpush1.msra.mxu0 %v2935
      %v2937 = vand.u32 %v363, 4294901760
      %v2938 = vsub.f32 %v363, %v2937
      %v2939 = vand.u32 %v2938, 4294901760
      %v2940 = vsub.f32 %v2938, %v2939
      %v2941 = vand.u32 %v2940, 4294901760
      %2942 = vmatprep.subr.mxu0 %v2941
      %v2943 = vand.u32 %v362, 4294901760
      %v2944 = vsub.f32 %v362, %v2943
      %v2945 = vand.u32 %v2944, 4294901760
      %v2946 = vsub.f32 %v2944, %v2945
      %v2947 = vand.u32 %v2946, 4294901760
      %2948 = vmatpush1.msra.mxu0 %v2947
      %v2949 = vand.u32 %v365, 4294901760
      %v2950 = vsub.f32 %v365, %v2949
      %v2951 = vand.u32 %v2950, 4294901760
      %v2952 = vsub.f32 %v2950, %v2951
      %v2953 = vand.u32 %v2952, 4294901760
      %2954 = vmatprep.subr.mxu0 %v2953
      %v2955 = vand.u32 %v364, 4294901760
      %v2956 = vsub.f32 %v364, %v2955
      %v2957 = vand.u32 %v2956, 4294901760
      %v2958 = vsub.f32 %v2956, %v2957
      %v2959 = vand.u32 %v2958, 4294901760
      %2960 = vmatpush1.msra.mxu0 %v2959
      %v2961 = vand.u32 %v367, 4294901760
      %v2962 = vsub.f32 %v367, %v2961
      %v2963 = vand.u32 %v2962, 4294901760
      %v2964 = vsub.f32 %v2962, %v2963
      %v2965 = vand.u32 %v2964, 4294901760
      %2966 = vmatprep.subr.mxu0 %v2965
      %v2967 = vand.u32 %v366, 4294901760
      %v2968 = vsub.f32 %v366, %v2967
      %v2969 = vand.u32 %v2968, 4294901760
      %v2970 = vsub.f32 %v2968, %v2969
      %v2971 = vand.u32 %v2970, 4294901760
      %2972 = vmatpush1.msra.mxu0 %v2971
      %v2973 = vand.u32 %v369, 4294901760
      %v2974 = vsub.f32 %v369, %v2973
      %v2975 = vand.u32 %v2974, 4294901760
      %v2976 = vsub.f32 %v2974, %v2975
      %v2977 = vand.u32 %v2976, 4294901760
      %2978 = vmatprep.subr.mxu0 %v2977
      %v2979 = vand.u32 %v368, 4294901760
      %v2980 = vsub.f32 %v368, %v2979
      %v2981 = vand.u32 %v2980, 4294901760
      %v2982 = vsub.f32 %v2980, %v2981
      %v2983 = vand.u32 %v2982, 4294901760
      %2984 = vmatpush1.msra.mxu0 %v2983
      %v2985 = vand.u32 %v371, 4294901760
      %v2986 = vsub.f32 %v371, %v2985
      %v2987 = vand.u32 %v2986, 4294901760
      %v2988 = vsub.f32 %v2986, %v2987
      %v2989 = vand.u32 %v2988, 4294901760
      %2990 = vmatprep.subr.mxu0 %v2989
      %v2991 = vand.u32 %v370, 4294901760
      %v2992 = vsub.f32 %v370, %v2991
      %v2993 = vand.u32 %v2992, 4294901760
      %v2994 = vsub.f32 %v2992, %v2993
      %v2995 = vand.u32 %v2994, 4294901760
      %2996 = vmatpush1.msra.mxu0 %v2995
      %v2997 = vand.u32 %v373, 4294901760
      %v2998 = vsub.f32 %v373, %v2997
      %v2999 = vand.u32 %v2998, 4294901760
      %v3000 = vsub.f32 %v2998, %v2999
      %v3001 = vand.u32 %v3000, 4294901760
      %3002 = vmatprep.subr.mxu0 %v3001
      %v3003 = vand.u32 %v372, 4294901760
      %v3004 = vsub.f32 %v372, %v3003
      %v3005 = vand.u32 %v3004, 4294901760
      %v3006 = vsub.f32 %v3004, %v3005
      %v3007 = vand.u32 %v3006, 4294901760
      %3008 = vmatpush1.msra.mxu0 %v3007
      %v3009 = vand.u32 %v375, 4294901760
      %v3010 = vsub.f32 %v375, %v3009
      %v3011 = vand.u32 %v3010, 4294901760
      %v3012 = vsub.f32 %v3010, %v3011
      %v3013 = vand.u32 %v3012, 4294901760
      %3014 = vmatprep.subr.mxu0 %v3013
      %v3015 = vand.u32 %v374, 4294901760
      %v3016 = vsub.f32 %v374, %v3015
      %v3017 = vand.u32 %v3016, 4294901760
      %v3018 = vsub.f32 %v3016, %v3017
      %v3019 = vand.u32 %v3018, 4294901760
      %3020 = vmatpush1.msra.mxu0 %v3019
      %v3021 = vand.u32 %v377, 4294901760
      %v3022 = vsub.f32 %v377, %v3021
      %v3023 = vand.u32 %v3022, 4294901760
      %v3024 = vsub.f32 %v3022, %v3023
      %v3025 = vand.u32 %v3024, 4294901760
      %3026 = vmatprep.subr.mxu0 %v3025
      %v3027 = vand.u32 %v376, 4294901760
      %v3028 = vsub.f32 %v376, %v3027
      %v3029 = vand.u32 %v3028, 4294901760
      %v3030 = vsub.f32 %v3028, %v3029
      %v3031 = vand.u32 %v3030, 4294901760
      %3032 = vmatpush1.msra.mxu0 %v3031
      %v3033 = vand.u32 %v379, 4294901760
      %v3034 = vsub.f32 %v379, %v3033
      %v3035 = vand.u32 %v3034, 4294901760
      %v3036 = vsub.f32 %v3034, %v3035
      %v3037 = vand.u32 %v3036, 4294901760
      %3038 = vmatprep.subr.mxu0 %v3037
      %v3039 = vand.u32 %v378, 4294901760
      %v3040 = vsub.f32 %v378, %v3039
      %v3041 = vand.u32 %v3040, 4294901760
      %v3042 = vsub.f32 %v3040, %v3041
      %v3043 = vand.u32 %v3042, 4294901760
      %3044 = vmatpush1.msra.mxu0 %v3043
      %v3045 = vand.u32 %v381, 4294901760
      %v3046 = vsub.f32 %v381, %v3045
      %v3047 = vand.u32 %v3046, 4294901760
      %v3048 = vsub.f32 %v3046, %v3047
      %v3049 = vand.u32 %v3048, 4294901760
      %3050 = vmatprep.subr.mxu0 %v3049
      %v3051 = vand.u32 %v380, 4294901760
      %v3052 = vsub.f32 %v380, %v3051
      %v3053 = vand.u32 %v3052, 4294901760
      %v3054 = vsub.f32 %v3052, %v3053
      %v3055 = vand.u32 %v3054, 4294901760
      %3056 = vmatpush1.msra.mxu0 %v3055
      %v3057 = vand.u32 %v383, 4294901760
      %v3058 = vsub.f32 %v383, %v3057
      %v3059 = vand.u32 %v3058, 4294901760
      %v3060 = vsub.f32 %v3058, %v3059
      %v3061 = vand.u32 %v3060, 4294901760
      %3062 = vmatprep.subr.mxu0 %v3061
      %v3063 = vand.u32 %v382, 4294901760
      %v3064 = vsub.f32 %v382, %v3063
      %v3065 = vand.u32 %v3064, 4294901760
      %v3066 = vsub.f32 %v3064, %v3065
      %v3067 = vand.u32 %v3066, 4294901760
      %3068 = vmatpush1.msra.mxu0 %v3067
      %v3069 = vand.u32 %v385, 4294901760
      %v3070 = vsub.f32 %v385, %v3069
      %v3071 = vand.u32 %v3070, 4294901760
      %v3072 = vsub.f32 %v3070, %v3071
      %v3073 = vand.u32 %v3072, 4294901760
      %3074 = vmatprep.subr.mxu0 %v3073
      %v3075 = vand.u32 %v384, 4294901760
      %v3076 = vsub.f32 %v384, %v3075
      %v3077 = vand.u32 %v3076, 4294901760
      %v3078 = vsub.f32 %v3076, %v3077
      %v3079 = vand.u32 %v3078, 4294901760
      %3080 = vmatpush1.msra.mxu0 %v3079
      %v3081 = vand.u32 %v387, 4294901760
      %v3082 = vsub.f32 %v387, %v3081
      %v3083 = vand.u32 %v3082, 4294901760
      %v3084 = vsub.f32 %v3082, %v3083
      %v3085 = vand.u32 %v3084, 4294901760
      %3086 = vmatprep.subr.mxu0 %v3085
      %v3087 = vand.u32 %v386, 4294901760
      %v3088 = vsub.f32 %v386, %v3087
      %v3089 = vand.u32 %v3088, 4294901760
      %v3090 = vsub.f32 %v3088, %v3089
      %v3091 = vand.u32 %v3090, 4294901760
      %3092 = vmatpush1.msra.mxu0 %v3091
      %v3093 = vand.u32 %v389, 4294901760
      %v3094 = vsub.f32 %v389, %v3093
      %v3095 = vand.u32 %v3094, 4294901760
      %v3096 = vsub.f32 %v3094, %v3095
      %v3097 = vand.u32 %v3096, 4294901760
      %3098 = vmatprep.subr.mxu0 %v3097
      %v3099 = vand.u32 %v388, 4294901760
      %v3100 = vsub.f32 %v388, %v3099
      %v3101 = vand.u32 %v3100, 4294901760
      %v3102 = vsub.f32 %v3100, %v3101
      %v3103 = vand.u32 %v3102, 4294901760
      %3104 = vmatpush1.msra.mxu0 %v3103
      %v3105 = vand.u32 %v391, 4294901760
      %v3106 = vsub.f32 %v391, %v3105
      %v3107 = vand.u32 %v3106, 4294901760
      %v3108 = vsub.f32 %v3106, %v3107
      %v3109 = vand.u32 %v3108, 4294901760
      %3110 = vmatprep.subr.mxu0 %v3109
      %v3111 = vand.u32 %v390, 4294901760
      %v3112 = vsub.f32 %v390, %v3111
      %v3113 = vand.u32 %v3112, 4294901760
      %v3114 = vsub.f32 %v3112, %v3113
      %v3115 = vand.u32 %v3114, 4294901760
      %3116 = vmatpush1.msra.mxu0 %v3115
      %v3117 = vand.u32 %v393, 4294901760
      %v3118 = vsub.f32 %v393, %v3117
      %v3119 = vand.u32 %v3118, 4294901760
      %v3120 = vsub.f32 %v3118, %v3119
      %v3121 = vand.u32 %v3120, 4294901760
      %3122 = vmatprep.subr.mxu0 %v3121
      %v3123 = vand.u32 %v392, 4294901760
      %v3124 = vsub.f32 %v392, %v3123
      %v3125 = vand.u32 %v3124, 4294901760
      %v3126 = vsub.f32 %v3124, %v3125
      %v3127 = vand.u32 %v3126, 4294901760
      %3128 = vmatpush1.msra.mxu0 %v3127
      %v3129 = vand.u32 %v197, 4294901760
      %3130 = vmatprep.mubr.f32.mxu0 %v3129
      %v3131 = vand.u32 %v196, 4294901760
      %3132 = vmatmul.mubr.f32.gmra.mrb[0].mxu0 %v3131
      %v3133 = vpop.f32.mrb[0].mxu0
      %v3134 = vadd.f32 %v2565, %v3133
      %v3135 = vpop.f32.mrb[0].mxu0
      %v3136 = vadd.f32 %v2567, %v3135
      %v3137 = vand.u32 %v203, 4294901760
      %3138 = vmatprep.mubr.f32.mxu0 %v3137
      %v3139 = vand.u32 %v202, 4294901760
      %3140 = vmatmul.mubr.f32.gmra.mrb[0].mxu0 %v3139
      %v3141 = vpop.f32.mrb[0].mxu0
      %v3142 = vadd.f32 %v2581, %v3141
      %v3143 = vpop.f32.mrb[0].mxu0
      %v3144 = vadd.f32 %v2583, %v3143
      %v3145 = vand.u32 %v209, 4294901760
      %3146 = vmatprep.mubr.f32.mxu0 %v3145
      %v3147 = vand.u32 %v208, 4294901760
      %3148 = vmatmul.mubr.f32.gmra.mrb[0].mxu0 %v3147
      %v3149 = vpop.f32.mrb[0].mxu0
      %v3150 = vadd.f32 %v2597, %v3149
      %v3151 = vpop.f32.mrb[0].mxu0
      %v3152 = vadd.f32 %v2599, %v3151
      %v3153 = vand.u32 %v215, 4294901760
      %3154 = vmatprep.mubr.f32.mxu0 %v3153
      %v3155 = vand.u32 %v214, 4294901760
      %3156 = vmatmul.mubr.f32.gmra.mrb[0].mxu0 %v3155
      %v3157 = vpop.f32.mrb[0].mxu0
      %v3158 = vadd.f32 %v2613, %v3157
      %v3159 = vpop.f32.mrb[0].mxu0
      %v3160 = vadd.f32 %v2615, %v3159
      %v3161 = vand.u32 %v221, 4294901760
      %3162 = vmatprep.mubr.f32.mxu0 %v3161
      %v3163 = vand.u32 %v220, 4294901760
      %3164 = vmatmul.mubr.f32.gmra.mrb[0].mxu0 %v3163
      %v3165 = vpop.f32.mrb[0].mxu0
      %v3166 = vadd.f32 %v2629, %v3165
      %v3167 = vpop.f32.mrb[0].mxu0
      %v3168 = vadd.f32 %v2631, %v3167
      %v3169 = vand.u32 %v227, 4294901760
      %3170 = vmatprep.mubr.f32.mxu0 %v3169
      %v3171 = vand.u32 %v226, 4294901760
      %3172 = vmatmul.mubr.f32.gmra.mrb[0].mxu0 %v3171
      %v3173 = vpop.f32.mrb[0].mxu0
      %v3174 = vadd.f32 %v2645, %v3173
      %v3175 = vpop.f32.mrb[0].mxu0
      %v3176 = vadd.f32 %v2647, %v3175
      %v3177 = vand.u32 %v233, 4294901760
      %3178 = vmatprep.mubr.f32.mxu0 %v3177
      %v3179 = vand.u32 %v232, 4294901760
      %3180 = vmatmul.mubr.f32.gmra.mrb[0].mxu0 %v3179
      %v3181 = vpop.f32.mrb[0].mxu0
      %v3182 = vadd.f32 %v2661, %v3181
      %v3183 = vpop.f32.mrb[0].mxu0
      %v3184 = vadd.f32 %v2663, %v3183
      %v3185 = vand.u32 %v239, 4294901760
      %3186 = vmatprep.mubr.f32.mxu0 %v3185
      %v3187 = vand.u32 %v238, 4294901760
      %3188 = vmatmul.mubr.f32.gmra.mrb[0].mxu0 %v3187
      %v3189 = vpop.f32.mrb[0].mxu0
      %v3190 = vadd.f32 %v2677, %v3189
      %v3191 = vpop.f32.mrb[0].mxu0
      %v3192 = vadd.f32 %v2679, %v3191
      %v3193 = vand.u32 %v245, 4294901760
      %3194 = vmatprep.mubr.f32.mxu0 %v3193
      %v3195 = vand.u32 %v244, 4294901760
      %3196 = vmatmul.mubr.f32.gmra.mrb[0].mxu0 %v3195
      %v3197 = vpop.f32.mrb[0].mxu0
      %v3198 = vadd.f32 %v2693, %v3197
      %v3199 = vpop.f32.mrb[0].mxu0
      %v3200 = vadd.f32 %v2695, %v3199
      %v3201 = vand.u32 %v251, 4294901760
      %3202 = vmatprep.mubr.f32.mxu0 %v3201
      %v3203 = vand.u32 %v250, 4294901760
      %3204 = vmatmul.mubr.f32.gmra.mrb[0].mxu0 %v3203
      %v3205 = vpop.f32.mrb[0].mxu0
      %v3206 = vadd.f32 %v2709, %v3205
      %v3207 = vpop.f32.mrb[0].mxu0
      %v3208 = vadd.f32 %v2711, %v3207
      %v3209 = vand.u32 %v257, 4294901760
      %3210 = vmatprep.mubr.f32.mxu0 %v3209
      %v3211 = vand.u32 %v256, 4294901760
      %3212 = vmatmul.mubr.f32.gmra.mrb[0].mxu0 %v3211
      %v3213 = vpop.f32.mrb[0].mxu0
      %v3214 = vadd.f32 %v2725, %v3213
      %v3215 = vpop.f32.mrb[0].mxu0
      %v3216 = vadd.f32 %v2727, %v3215
      %v3217 = vand.u32 %v263, 4294901760
      %3218 = vmatprep.mubr.f32.mxu0 %v3217
      %v3219 = vand.u32 %v262, 4294901760
      %3220 = vmatmul.mubr.f32.gmra.mrb[0].mxu0 %v3219
      %v3221 = vpop.f32.mrb[0].mxu0
      %v3222 = vadd.f32 %v2741, %v3221
      %v3223 = vpop.f32.mrb[0].mxu0
      %v3224 = vadd.f32 %v2743, %v3223
      %3225 = vdwg.mxu0
      %v3226 = vand.u32 %v331, 4294901760
      %v3227 = vsub.f32 %v331, %v3226
      %3228 = vmatprep.subr.mxu0 %v3227
      %v3229 = vand.u32 %v330, 4294901760
      %v3230 = vsub.f32 %v330, %v3229
      %3231 = vmatpush1.msra.mxu0 %v3230
      %v3232 = vand.u32 %v333, 4294901760
      %v3233 = vsub.f32 %v333, %v3232
      %3234 = vmatprep.subr.mxu0 %v3233
      %v3235 = vand.u32 %v332, 4294901760
      %v3236 = vsub.f32 %v332, %v3235
      %3237 = vmatpush1.msra.mxu0 %v3236
      %v3238 = vand.u32 %v335, 4294901760
      %v3239 = vsub.f32 %v335, %v3238
      %3240 = vmatprep.subr.mxu0 %v3239
      %v3241 = vand.u32 %v334, 4294901760
      %v3242 = vsub.f32 %v334, %v3241
      %3243 = vmatpush1.msra.mxu0 %v3242
      %v3244 = vand.u32 %v337, 4294901760
      %v3245 = vsub.f32 %v337, %v3244
      %3246 = vmatprep.subr.mxu0 %v3245
      %v3247 = vand.u32 %v336, 4294901760
      %v3248 = vsub.f32 %v336, %v3247
      %3249 = vmatpush1.msra.mxu0 %v3248
      %v3250 = vand.u32 %v339, 4294901760
      %v3251 = vsub.f32 %v339, %v3250
      %3252 = vmatprep.subr.mxu0 %v3251
      %v3253 = vand.u32 %v338, 4294901760
      %v3254 = vsub.f32 %v338, %v3253
      %3255 = vmatpush1.msra.mxu0 %v3254
      %v3256 = vand.u32 %v341, 4294901760
      %v3257 = vsub.f32 %v341, %v3256
      %3258 = vmatprep.subr.mxu0 %v3257
      %v3259 = vand.u32 %v340, 4294901760
      %v3260 = vsub.f32 %v340, %v3259
      %3261 = vmatpush1.msra.mxu0 %v3260
      %v3262 = vand.u32 %v343, 4294901760
      %v3263 = vsub.f32 %v343, %v3262
      %3264 = vmatprep.subr.mxu0 %v3263
      %v3265 = vand.u32 %v342, 4294901760
      %v3266 = vsub.f32 %v342, %v3265
      %3267 = vmatpush1.msra.mxu0 %v3266
      %v3268 = vand.u32 %v345, 4294901760
      %v3269 = vsub.f32 %v345, %v3268
      %3270 = vmatprep.subr.mxu0 %v3269
      %v3271 = vand.u32 %v344, 4294901760
      %v3272 = vsub.f32 %v344, %v3271
      %3273 = vmatpush1.msra.mxu0 %v3272
      %v3274 = vand.u32 %v347, 4294901760
      %v3275 = vsub.f32 %v347, %v3274
      %3276 = vmatprep.subr.mxu0 %v3275
      %v3277 = vand.u32 %v346, 4294901760
      %v3278 = vsub.f32 %v346, %v3277
      %3279 = vmatpush1.msra.mxu0 %v3278
      %v3280 = vand.u32 %v349, 4294901760
      %v3281 = vsub.f32 %v349, %v3280
      %3282 = vmatprep.subr.mxu0 %v3281
      %v3283 = vand.u32 %v348, 4294901760
      %v3284 = vsub.f32 %v348, %v3283
      %3285 = vmatpush1.msra.mxu0 %v3284
      %v3286 = vand.u32 %v351, 4294901760
      %v3287 = vsub.f32 %v351, %v3286
      %3288 = vmatprep.subr.mxu0 %v3287
      %v3289 = vand.u32 %v350, 4294901760
      %v3290 = vsub.f32 %v350, %v3289
      %3291 = vmatpush1.msra.mxu0 %v3290
      %v3292 = vand.u32 %v353, 4294901760
      %v3293 = vsub.f32 %v353, %v3292
      %3294 = vmatprep.subr.mxu0 %v3293
      %v3295 = vand.u32 %v352, 4294901760
      %v3296 = vsub.f32 %v352, %v3295
      %3297 = vmatpush1.msra.mxu0 %v3296
      %v3298 = vand.u32 %v355, 4294901760
      %v3299 = vsub.f32 %v355, %v3298
      %3300 = vmatprep.subr.mxu0 %v3299
      %v3301 = vand.u32 %v354, 4294901760
      %v3302 = vsub.f32 %v354, %v3301
      %3303 = vmatpush1.msra.mxu0 %v3302
      %v3304 = vand.u32 %v357, 4294901760
      %v3305 = vsub.f32 %v357, %v3304
      %3306 = vmatprep.subr.mxu0 %v3305
      %v3307 = vand.u32 %v356, 4294901760
      %v3308 = vsub.f32 %v356, %v3307
      %3309 = vmatpush1.msra.mxu0 %v3308
      %v3310 = vand.u32 %v359, 4294901760
      %v3311 = vsub.f32 %v359, %v3310
      %3312 = vmatprep.subr.mxu0 %v3311
      %v3313 = vand.u32 %v358, 4294901760
      %v3314 = vsub.f32 %v358, %v3313
      %3315 = vmatpush1.msra.mxu0 %v3314
      %v3316 = vand.u32 %v361, 4294901760
      %v3317 = vsub.f32 %v361, %v3316
      %3318 = vmatprep.subr.mxu0 %v3317
      %v3319 = vand.u32 %v360, 4294901760
      %v3320 = vsub.f32 %v360, %v3319
      %3321 = vmatpush1.msra.mxu0 %v3320
      %v3322 = vand.u32 %v363, 4294901760
      %v3323 = vsub.f32 %v363, %v3322
      %3324 = vmatprep.subr.mxu0 %v3323
      %v3325 = vand.u32 %v362, 4294901760
      %v3326 = vsub.f32 %v362, %v3325
      %3327 = vmatpush1.msra.mxu0 %v3326
      %v3328 = vand.u32 %v365, 4294901760
      %v3329 = vsub.f32 %v365, %v3328
      %3330 = vmatprep.subr.mxu0 %v3329
      %v3331 = vand.u32 %v364, 4294901760
      %v3332 = vsub.f32 %v364, %v3331
      %3333 = vmatpush1.msra.mxu0 %v3332
      %v3334 = vand.u32 %v367, 4294901760
      %v3335 = vsub.f32 %v367, %v3334
      %3336 = vmatprep.subr.mxu0 %v3335
      %v3337 = vand.u32 %v366, 4294901760
      %v3338 = vsub.f32 %v366, %v3337
      %3339 = vmatpush1.msra.mxu0 %v3338
      %v3340 = vand.u32 %v369, 4294901760
      %v3341 = vsub.f32 %v369, %v3340
      %3342 = vmatprep.subr.mxu0 %v3341
      %v3343 = vand.u32 %v368, 4294901760
      %v3344 = vsub.f32 %v368, %v3343
      %3345 = vmatpush1.msra.mxu0 %v3344
      %v3346 = vand.u32 %v371, 4294901760
      %v3347 = vsub.f32 %v371, %v3346
      %3348 = vmatprep.subr.mxu0 %v3347
      %v3349 = vand.u32 %v370, 4294901760
      %v3350 = vsub.f32 %v370, %v3349
      %3351 = vmatpush1.msra.mxu0 %v3350
      %v3352 = vand.u32 %v373, 4294901760
      %v3353 = vsub.f32 %v373, %v3352
      %3354 = vmatprep.subr.mxu0 %v3353
      %v3355 = vand.u32 %v372, 4294901760
      %v3356 = vsub.f32 %v372, %v3355
      %3357 = vmatpush1.msra.mxu0 %v3356
      %v3358 = vand.u32 %v375, 4294901760
      %v3359 = vsub.f32 %v375, %v3358
      %3360 = vmatprep.subr.mxu0 %v3359
      %v3361 = vand.u32 %v374, 4294901760
      %v3362 = vsub.f32 %v374, %v3361
      %3363 = vmatpush1.msra.mxu0 %v3362
      %v3364 = vand.u32 %v377, 4294901760
      %v3365 = vsub.f32 %v377, %v3364
      %3366 = vmatprep.subr.mxu0 %v3365
      %v3367 = vand.u32 %v376, 4294901760
      %v3368 = vsub.f32 %v376, %v3367
      %3369 = vmatpush1.msra.mxu0 %v3368
      %v3370 = vand.u32 %v379, 4294901760
      %v3371 = vsub.f32 %v379, %v3370
      %3372 = vmatprep.subr.mxu0 %v3371
      %v3373 = vand.u32 %v378, 4294901760
      %v3374 = vsub.f32 %v378, %v3373
      %3375 = vmatpush1.msra.mxu0 %v3374
      %v3376 = vand.u32 %v381, 4294901760
      %v3377 = vsub.f32 %v381, %v3376
      %3378 = vmatprep.subr.mxu0 %v3377
      %v3379 = vand.u32 %v380, 4294901760
      %v3380 = vsub.f32 %v380, %v3379
      %3381 = vmatpush1.msra.mxu0 %v3380
      %v3382 = vand.u32 %v383, 4294901760
      %v3383 = vsub.f32 %v383, %v3382
      %3384 = vmatprep.subr.mxu0 %v3383
      %v3385 = vand.u32 %v382, 4294901760
      %v3386 = vsub.f32 %v382, %v3385
      %3387 = vmatpush1.msra.mxu0 %v3386
      %v3388 = vand.u32 %v385, 4294901760
      %v3389 = vsub.f32 %v385, %v3388
      %3390 = vmatprep.subr.mxu0 %v3389
      %v3391 = vand.u32 %v384, 4294901760
      %v3392 = vsub.f32 %v384, %v3391
      %3393 = vmatpush1.msra.mxu0 %v3392
      %v3394 = vand.u32 %v387, 4294901760
      %v3395 = vsub.f32 %v387, %v3394
      %3396 = vmatprep.subr.mxu0 %v3395
      %v3397 = vand.u32 %v386, 4294901760
      %v3398 = vsub.f32 %v386, %v3397
      %3399 = vmatpush1.msra.mxu0 %v3398
      %v3400 = vand.u32 %v389, 4294901760
      %v3401 = vsub.f32 %v389, %v3400
      %3402 = vmatprep.subr.mxu0 %v3401
      %v3403 = vand.u32 %v388, 4294901760
      %v3404 = vsub.f32 %v388, %v3403
      %3405 = vmatpush1.msra.mxu0 %v3404
      %v3406 = vand.u32 %v391, 4294901760
      %v3407 = vsub.f32 %v391, %v3406
      %3408 = vmatprep.subr.mxu0 %v3407
      %v3409 = vand.u32 %v390, 4294901760
      %v3410 = vsub.f32 %v390, %v3409
      %3411 = vmatpush1.msra.mxu0 %v3410
      %v3412 = vand.u32 %v393, 4294901760
      %v3413 = vsub.f32 %v393, %v3412
      %3414 = vmatprep.subr.mxu0 %v3413
      %v3415 = vand.u32 %v392, 4294901760
      %v3416 = vsub.f32 %v392, %v3415
      %3417 = vmatpush1.msra.mxu0 %v3416
      %v3418 = vand.u32 %v197, 4294901760
      %v3419 = vsub.f32 %v197, %v3418
      %3420 = vmatprep.mubr.f32.mxu0 %v3419
      %v3421 = vand.u32 %v196, 4294901760
      %v3422 = vsub.f32 %v196, %v3421
      %3423 = vmatmul.mubr.f32.gmra.mrb[0].mxu0 %v3422
      %v3424 = vpop.f32.mrb[0].mxu0
      %v3425 = vadd.f32 %v3134, %v3424
      %v3426 = vpop.f32.mrb[0].mxu0
      %v3427 = vadd.f32 %v3136, %v3426
      %v3428 = vand.u32 %v203, 4294901760
      %v3429 = vsub.f32 %v203, %v3428
      %3430 = vmatprep.mubr.f32.mxu0 %v3429
      %v3431 = vand.u32 %v202, 4294901760
      %v3432 = vsub.f32 %v202, %v3431
      %3433 = vmatmul.mubr.f32.gmra.mrb[0].mxu0 %v3432
      %v3434 = vpop.f32.mrb[0].mxu0
      %v3435 = vadd.f32 %v3142, %v3434
      %v3436 = vpop.f32.mrb[0].mxu0
      %v3437 = vadd.f32 %v3144, %v3436
      %v3438 = vand.u32 %v209, 4294901760
      %v3439 = vsub.f32 %v209, %v3438
      %3440 = vmatprep.mubr.f32.mxu0 %v3439
      %v3441 = vand.u32 %v208, 4294901760
      %v3442 = vsub.f32 %v208, %v3441
      %3443 = vmatmul.mubr.f32.gmra.mrb[0].mxu0 %v3442
      %v3444 = vpop.f32.mrb[0].mxu0
      %v3445 = vadd.f32 %v3150, %v3444
      %v3446 = vpop.f32.mrb[0].mxu0
      %v3447 = vadd.f32 %v3152, %v3446
      %v3448 = vand.u32 %v215, 4294901760
      %v3449 = vsub.f32 %v215, %v3448
      %3450 = vmatprep.mubr.f32.mxu0 %v3449
      %v3451 = vand.u32 %v214, 4294901760
      %v3452 = vsub.f32 %v214, %v3451
      %3453 = vmatmul.mubr.f32.gmra.mrb[0].mxu0 %v3452
      %v3454 = vpop.f32.mrb[0].mxu0
      %v3455 = vadd.f32 %v3158, %v3454
      %v3456 = vpop.f32.mrb[0].mxu0
      %v3457 = vadd.f32 %v3160, %v3456
      %v3458 = vand.u32 %v221, 4294901760
      %v3459 = vsub.f32 %v221, %v3458
      %3460 = vmatprep.mubr.f32.mxu0 %v3459
      %v3461 = vand.u32 %v220, 4294901760
      %v3462 = vsub.f32 %v220, %v3461
      %3463 = vmatmul.mubr.f32.gmra.mrb[0].mxu0 %v3462
      %v3464 = vpop.f32.mrb[0].mxu0
      %v3465 = vadd.f32 %v3166, %v3464
      %v3466 = vpop.f32.mrb[0].mxu0
      %v3467 = vadd.f32 %v3168, %v3466
      %v3468 = vand.u32 %v227, 4294901760
      %v3469 = vsub.f32 %v227, %v3468
      %3470 = vmatprep.mubr.f32.mxu0 %v3469
      %v3471 = vand.u32 %v226, 4294901760
      %v3472 = vsub.f32 %v226, %v3471
      %3473 = vmatmul.mubr.f32.gmra.mrb[0].mxu0 %v3472
      %v3474 = vpop.f32.mrb[0].mxu0
      %v3475 = vadd.f32 %v3174, %v3474
      %v3476 = vpop.f32.mrb[0].mxu0
      %v3477 = vadd.f32 %v3176, %v3476
      %v3478 = vand.u32 %v233, 4294901760
      %v3479 = vsub.f32 %v233, %v3478
      %3480 = vmatprep.mubr.f32.mxu0 %v3479
      %v3481 = vand.u32 %v232, 4294901760
      %v3482 = vsub.f32 %v232, %v3481
      %3483 = vmatmul.mubr.f32.gmra.mrb[0].mxu0 %v3482
      %v3484 = vpop.f32.mrb[0].mxu0
      %v3485 = vadd.f32 %v3182, %v3484
      %v3486 = vpop.f32.mrb[0].mxu0
      %v3487 = vadd.f32 %v3184, %v3486
      %v3488 = vand.u32 %v239, 4294901760
      %v3489 = vsub.f32 %v239, %v3488
      %3490 = vmatprep.mubr.f32.mxu0 %v3489
      %v3491 = vand.u32 %v238, 4294901760
      %v3492 = vsub.f32 %v238, %v3491
      %3493 = vmatmul.mubr.f32.gmra.mrb[0].mxu0 %v3492
      %v3494 = vpop.f32.mrb[0].mxu0
      %v3495 = vadd.f32 %v3190, %v3494
      %v3496 = vpop.f32.mrb[0].mxu0
      %v3497 = vadd.f32 %v3192, %v3496
      %v3498 = vand.u32 %v245, 4294901760
      %v3499 = vsub.f32 %v245, %v3498
      %3500 = vmatprep.mubr.f32.mxu0 %v3499
      %v3501 = vand.u32 %v244, 4294901760
      %v3502 = vsub.f32 %v244, %v3501
      %3503 = vmatmul.mubr.f32.gmra.mrb[0].mxu0 %v3502
      %v3504 = vpop.f32.mrb[0].mxu0
      %v3505 = vadd.f32 %v3198, %v3504
      %v3506 = vpop.f32.mrb[0].mxu0
      %v3507 = vadd.f32 %v3200, %v3506
      %v3508 = vand.u32 %v251, 4294901760
      %v3509 = vsub.f32 %v251, %v3508
      %3510 = vmatprep.mubr.f32.mxu0 %v3509
      %v3511 = vand.u32 %v250, 4294901760
      %v3512 = vsub.f32 %v250, %v3511
      %3513 = vmatmul.mubr.f32.gmra.mrb[0].mxu0 %v3512
      %v3514 = vpop.f32.mrb[0].mxu0
      %v3515 = vadd.f32 %v3206, %v3514
      %v3516 = vpop.f32.mrb[0].mxu0
      %v3517 = vadd.f32 %v3208, %v3516
      %v3518 = vand.u32 %v257, 4294901760
      %v3519 = vsub.f32 %v257, %v3518
      %3520 = vmatprep.mubr.f32.mxu0 %v3519
      %v3521 = vand.u32 %v256, 4294901760
      %v3522 = vsub.f32 %v256, %v3521
      %3523 = vmatmul.mubr.f32.gmra.mrb[0].mxu0 %v3522
      %v3524 = vpop.f32.mrb[0].mxu0
      %v3525 = vadd.f32 %v3214, %v3524
      %v3526 = vpop.f32.mrb[0].mxu0
      %v3527 = vadd.f32 %v3216, %v3526
      %v3528 = vand.u32 %v263, 4294901760
      %v3529 = vsub.f32 %v263, %v3528
      %3530 = vmatprep.mubr.f32.mxu0 %v3529
      %v3531 = vand.u32 %v262, 4294901760
      %v3532 = vsub.f32 %v262, %v3531
      %3533 = vmatmul.mubr.f32.gmra.mrb[0].mxu0 %v3532
      %v3534 = vpop.f32.mrb[0].mxu0
      %v3535 = vadd.f32 %v3222, %v3534
      %v3536 = vpop.f32.mrb[0].mxu0
      %v3537 = vadd.f32 %v3224, %v3536
      %3538 = vdwg.mxu0
      %v3539 = vand.u32 %v331, 4294901760
      %3540 = vmatprep.subr.mxu0 %v3539
      %v3541 = vand.u32 %v330, 4294901760
      %3542 = vmatpush1.msra.mxu0 %v3541
      %v3543 = vand.u32 %v333, 4294901760
      %3544 = vmatprep.subr.mxu0 %v3543
      %v3545 = vand.u32 %v332, 4294901760
      %3546 = vmatpush1.msra.mxu0 %v3545
      %v3547 = vand.u32 %v335, 4294901760
      %3548 = vmatprep.subr.mxu0 %v3547
      %v3549 = vand.u32 %v334, 4294901760
      %3550 = vmatpush1.msra.mxu0 %v3549
      %v3551 = vand.u32 %v337, 4294901760
      %3552 = vmatprep.subr.mxu0 %v3551
      %v3553 = vand.u32 %v336, 4294901760
      %3554 = vmatpush1.msra.mxu0 %v3553
      %v3555 = vand.u32 %v339, 4294901760
      %3556 = vmatprep.subr.mxu0 %v3555
      %v3557 = vand.u32 %v338, 4294901760
      %3558 = vmatpush1.msra.mxu0 %v3557
      %v3559 = vand.u32 %v341, 4294901760
      %3560 = vmatprep.subr.mxu0 %v3559
      %v3561 = vand.u32 %v340, 4294901760
      %3562 = vmatpush1.msra.mxu0 %v3561
      %v3563 = vand.u32 %v343, 4294901760
      %3564 = vmatprep.subr.mxu0 %v3563
      %v3565 = vand.u32 %v342, 4294901760
      %3566 = vmatpush1.msra.mxu0 %v3565
      %v3567 = vand.u32 %v345, 4294901760
      %3568 = vmatprep.subr.mxu0 %v3567
      %v3569 = vand.u32 %v344, 4294901760
      %3570 = vmatpush1.msra.mxu0 %v3569
      %v3571 = vand.u32 %v347, 4294901760
      %3572 = vmatprep.subr.mxu0 %v3571
      %v3573 = vand.u32 %v346, 4294901760
      %3574 = vmatpush1.msra.mxu0 %v3573
      %v3575 = vand.u32 %v349, 4294901760
      %3576 = vmatprep.subr.mxu0 %v3575
      %v3577 = vand.u32 %v348, 4294901760
      %3578 = vmatpush1.msra.mxu0 %v3577
      %v3579 = vand.u32 %v351, 4294901760
      %3580 = vmatprep.subr.mxu0 %v3579
      %v3581 = vand.u32 %v350, 4294901760
      %3582 = vmatpush1.msra.mxu0 %v3581
      %v3583 = vand.u32 %v353, 4294901760
      %3584 = vmatprep.subr.mxu0 %v3583
      %v3585 = vand.u32 %v352, 4294901760
      %3586 = vmatpush1.msra.mxu0 %v3585
      %v3587 = vand.u32 %v355, 4294901760
      %3588 = vmatprep.subr.mxu0 %v3587
      %v3589 = vand.u32 %v354, 4294901760
      %3590 = vmatpush1.msra.mxu0 %v3589
      %v3591 = vand.u32 %v357, 4294901760
      %3592 = vmatprep.subr.mxu0 %v3591
      %v3593 = vand.u32 %v356, 4294901760
      %3594 = vmatpush1.msra.mxu0 %v3593
      %v3595 = vand.u32 %v359, 4294901760
      %3596 = vmatprep.subr.mxu0 %v3595
      %v3597 = vand.u32 %v358, 4294901760
      %3598 = vmatpush1.msra.mxu0 %v3597
      %v3599 = vand.u32 %v361, 4294901760
      %3600 = vmatprep.subr.mxu0 %v3599
      %v3601 = vand.u32 %v360, 4294901760
      %3602 = vmatpush1.msra.mxu0 %v3601
      %v3603 = vand.u32 %v363, 4294901760
      %3604 = vmatprep.subr.mxu0 %v3603
      %v3605 = vand.u32 %v362, 4294901760
      %3606 = vmatpush1.msra.mxu0 %v3605
      %v3607 = vand.u32 %v365, 4294901760
      %3608 = vmatprep.subr.mxu0 %v3607
      %v3609 = vand.u32 %v364, 4294901760
      %3610 = vmatpush1.msra.mxu0 %v3609
      %v3611 = vand.u32 %v367, 4294901760
      %3612 = vmatprep.subr.mxu0 %v3611
      %v3613 = vand.u32 %v366, 4294901760
      %3614 = vmatpush1.msra.mxu0 %v3613
      %v3615 = vand.u32 %v369, 4294901760
      %3616 = vmatprep.subr.mxu0 %v3615
      %v3617 = vand.u32 %v368, 4294901760
      %3618 = vmatpush1.msra.mxu0 %v3617
      %v3619 = vand.u32 %v371, 4294901760
      %3620 = vmatprep.subr.mxu0 %v3619
      %v3621 = vand.u32 %v370, 4294901760
      %3622 = vmatpush1.msra.mxu0 %v3621
      %v3623 = vand.u32 %v373, 4294901760
      %3624 = vmatprep.subr.mxu0 %v3623
      %v3625 = vand.u32 %v372, 4294901760
      %3626 = vmatpush1.msra.mxu0 %v3625
      %v3627 = vand.u32 %v375, 4294901760
      %3628 = vmatprep.subr.mxu0 %v3627
      %v3629 = vand.u32 %v374, 4294901760
      %3630 = vmatpush1.msra.mxu0 %v3629
      %v3631 = vand.u32 %v377, 4294901760
      %3632 = vmatprep.subr.mxu0 %v3631
      %v3633 = vand.u32 %v376, 4294901760
      %3634 = vmatpush1.msra.mxu0 %v3633
      %v3635 = vand.u32 %v379, 4294901760
      %3636 = vmatprep.subr.mxu0 %v3635
      %v3637 = vand.u32 %v378, 4294901760
      %3638 = vmatpush1.msra.mxu0 %v3637
      %v3639 = vand.u32 %v381, 4294901760
      %3640 = vmatprep.subr.mxu0 %v3639
      %v3641 = vand.u32 %v380, 4294901760
      %3642 = vmatpush1.msra.mxu0 %v3641
      %v3643 = vand.u32 %v383, 4294901760
      %3644 = vmatprep.subr.mxu0 %v3643
      %v3645 = vand.u32 %v382, 4294901760
      %3646 = vmatpush1.msra.mxu0 %v3645
      %v3647 = vand.u32 %v385, 4294901760
      %3648 = vmatprep.subr.mxu0 %v3647
      %v3649 = vand.u32 %v384, 4294901760
      %3650 = vmatpush1.msra.mxu0 %v3649
      %v3651 = vand.u32 %v387, 4294901760
      %3652 = vmatprep.subr.mxu0 %v3651
      %v3653 = vand.u32 %v386, 4294901760
      %3654 = vmatpush1.msra.mxu0 %v3653
      %v3655 = vand.u32 %v389, 4294901760
      %3656 = vmatprep.subr.mxu0 %v3655
      %v3657 = vand.u32 %v388, 4294901760
      %3658 = vmatpush1.msra.mxu0 %v3657
      %v3659 = vand.u32 %v391, 4294901760
      %3660 = vmatprep.subr.mxu0 %v3659
      %v3661 = vand.u32 %v390, 4294901760
      %3662 = vmatpush1.msra.mxu0 %v3661
      %v3663 = vand.u32 %v393, 4294901760
      %3664 = vmatprep.subr.mxu0 %v3663
      %v3665 = vand.u32 %v392, 4294901760
      %3666 = vmatpush1.msra.mxu0 %v3665
      %v3667 = vand.u32 %v197, 4294901760
      %v3668 = vsub.f32 %v197, %v3667
      %v3669 = vand.u32 %v3668, 4294901760
      %3670 = vmatprep.mubr.f32.mxu0 %v3669
      %v3671 = vand.u32 %v196, 4294901760
      %v3672 = vsub.f32 %v196, %v3671
      %v3673 = vand.u32 %v3672, 4294901760
      %3674 = vmatmul.mubr.f32.gmra.mrb[0].mxu0 %v3673
      %v3675 = vpop.f32.mrb[0].mxu0
      %v3676 = vadd.f32 %v3425, %v3675
      %v3677 = vpop.f32.mrb[0].mxu0
      %v3678 = vadd.f32 %v3427, %v3677
      %v3679 = vand.u32 %v203, 4294901760
      %v3680 = vsub.f32 %v203, %v3679
      %v3681 = vand.u32 %v3680, 4294901760
      %3682 = vmatprep.mubr.f32.mxu0 %v3681
      %v3683 = vand.u32 %v202, 4294901760
      %v3684 = vsub.f32 %v202, %v3683
      %v3685 = vand.u32 %v3684, 4294901760
      %3686 = vmatmul.mubr.f32.gmra.mrb[0].mxu0 %v3685
      %v3687 = vpop.f32.mrb[0].mxu0
      %v3688 = vadd.f32 %v3435, %v3687
      %v3689 = vpop.f32.mrb[0].mxu0
      %v3690 = vadd.f32 %v3437, %v3689
      %v3691 = vand.u32 %v209, 4294901760
      %v3692 = vsub.f32 %v209, %v3691
      %v3693 = vand.u32 %v3692, 4294901760
      %3694 = vmatprep.mubr.f32.mxu0 %v3693
      %v3695 = vand.u32 %v208, 4294901760
      %v3696 = vsub.f32 %v208, %v3695
      %v3697 = vand.u32 %v3696, 4294901760
      %3698 = vmatmul.mubr.f32.gmra.mrb[0].mxu0 %v3697
      %v3699 = vpop.f32.mrb[0].mxu0
      %v3700 = vadd.f32 %v3445, %v3699
      %v3701 = vpop.f32.mrb[0].mxu0
      %v3702 = vadd.f32 %v3447, %v3701
      %v3703 = vand.u32 %v215, 4294901760
      %v3704 = vsub.f32 %v215, %v3703
      %v3705 = vand.u32 %v3704, 4294901760
      %3706 = vmatprep.mubr.f32.mxu0 %v3705
      %v3707 = vand.u32 %v214, 4294901760
      %v3708 = vsub.f32 %v214, %v3707
      %v3709 = vand.u32 %v3708, 4294901760
      %3710 = vmatmul.mubr.f32.gmra.mrb[0].mxu0 %v3709
      %v3711 = vpop.f32.mrb[0].mxu0
      %v3712 = vadd.f32 %v3455, %v3711
      %v3713 = vpop.f32.mrb[0].mxu0
      %v3714 = vadd.f32 %v3457, %v3713
      %v3715 = vand.u32 %v221, 4294901760
      %v3716 = vsub.f32 %v221, %v3715
      %v3717 = vand.u32 %v3716, 4294901760
      %3718 = vmatprep.mubr.f32.mxu0 %v3717
      %v3719 = vand.u32 %v220, 4294901760
      %v3720 = vsub.f32 %v220, %v3719
      %v3721 = vand.u32 %v3720, 4294901760
      %3722 = vmatmul.mubr.f32.gmra.mrb[0].mxu0 %v3721
      %v3723 = vpop.f32.mrb[0].mxu0
      %v3724 = vadd.f32 %v3465, %v3723
      %v3725 = vpop.f32.mrb[0].mxu0
      %v3726 = vadd.f32 %v3467, %v3725
      %v3727 = vand.u32 %v227, 4294901760
      %v3728 = vsub.f32 %v227, %v3727
      %v3729 = vand.u32 %v3728, 4294901760
      %3730 = vmatprep.mubr.f32.mxu0 %v3729
      %v3731 = vand.u32 %v226, 4294901760
      %v3732 = vsub.f32 %v226, %v3731
      %v3733 = vand.u32 %v3732, 4294901760
      %3734 = vmatmul.mubr.f32.gmra.mrb[0].mxu0 %v3733
      %v3735 = vpop.f32.mrb[0].mxu0
      %v3736 = vadd.f32 %v3475, %v3735
      %v3737 = vpop.f32.mrb[0].mxu0
      %v3738 = vadd.f32 %v3477, %v3737
      %v3739 = vand.u32 %v233, 4294901760
      %v3740 = vsub.f32 %v233, %v3739
      %v3741 = vand.u32 %v3740, 4294901760
      %3742 = vmatprep.mubr.f32.mxu0 %v3741
      %v3743 = vand.u32 %v232, 4294901760
      %v3744 = vsub.f32 %v232, %v3743
      %v3745 = vand.u32 %v3744, 4294901760
      %3746 = vmatmul.mubr.f32.gmra.mrb[0].mxu0 %v3745
      %v3747 = vpop.f32.mrb[0].mxu0
      %v3748 = vadd.f32 %v3485, %v3747
      %v3749 = vpop.f32.mrb[0].mxu0
      %v3750 = vadd.f32 %v3487, %v3749
      %v3751 = vand.u32 %v239, 4294901760
      %v3752 = vsub.f32 %v239, %v3751
      %v3753 = vand.u32 %v3752, 4294901760
      %3754 = vmatprep.mubr.f32.mxu0 %v3753
      %v3755 = vand.u32 %v238, 4294901760
      %v3756 = vsub.f32 %v238, %v3755
      %v3757 = vand.u32 %v3756, 4294901760
      %3758 = vmatmul.mubr.f32.gmra.mrb[0].mxu0 %v3757
      %v3759 = vpop.f32.mrb[0].mxu0
      %v3760 = vadd.f32 %v3495, %v3759
      %v3761 = vpop.f32.mrb[0].mxu0
      %v3762 = vadd.f32 %v3497, %v3761
      %v3763 = vand.u32 %v245, 4294901760
      %v3764 = vsub.f32 %v245, %v3763
      %v3765 = vand.u32 %v3764, 4294901760
      %3766 = vmatprep.mubr.f32.mxu0 %v3765
      %v3767 = vand.u32 %v244, 4294901760
      %v3768 = vsub.f32 %v244, %v3767
      %v3769 = vand.u32 %v3768, 4294901760
      %3770 = vmatmul.mubr.f32.gmra.mrb[0].mxu0 %v3769
      %v3771 = vpop.f32.mrb[0].mxu0
      %v3772 = vadd.f32 %v3505, %v3771
      %v3773 = vpop.f32.mrb[0].mxu0
      %v3774 = vadd.f32 %v3507, %v3773
      %v3775 = vand.u32 %v251, 4294901760
      %v3776 = vsub.f32 %v251, %v3775
      %v3777 = vand.u32 %v3776, 4294901760
      %3778 = vmatprep.mubr.f32.mxu0 %v3777
      %v3779 = vand.u32 %v250, 4294901760
      %v3780 = vsub.f32 %v250, %v3779
      %v3781 = vand.u32 %v3780, 4294901760
      %3782 = vmatmul.mubr.f32.gmra.mrb[0].mxu0 %v3781
      %v3783 = vpop.f32.mrb[0].mxu0
      %v3784 = vadd.f32 %v3515, %v3783
      %v3785 = vpop.f32.mrb[0].mxu0
      %v3786 = vadd.f32 %v3517, %v3785
      %v3787 = vand.u32 %v257, 4294901760
      %v3788 = vsub.f32 %v257, %v3787
      %v3789 = vand.u32 %v3788, 4294901760
      %3790 = vmatprep.mubr.f32.mxu0 %v3789
      %v3791 = vand.u32 %v256, 4294901760
      %v3792 = vsub.f32 %v256, %v3791
      %v3793 = vand.u32 %v3792, 4294901760
      %3794 = vmatmul.mubr.f32.gmra.mrb[0].mxu0 %v3793
      %v3795 = vpop.f32.mrb[0].mxu0
      %v3796 = vadd.f32 %v3525, %v3795
      %v3797 = vpop.f32.mrb[0].mxu0
      %v3798 = vadd.f32 %v3527, %v3797
      %v3799 = vand.u32 %v263, 4294901760
      %v3800 = vsub.f32 %v263, %v3799
      %v3801 = vand.u32 %v3800, 4294901760
      %3802 = vmatprep.mubr.f32.mxu0 %v3801
      %v3803 = vand.u32 %v262, 4294901760
      %v3804 = vsub.f32 %v262, %v3803
      %v3805 = vand.u32 %v3804, 4294901760
      %3806 = vmatmul.mubr.f32.gmra.mrb[0].mxu0 %v3805
      %v3807 = vpop.f32.mrb[0].mxu0
      %v3808 = vadd.f32 %v3535, %v3807
      %v3809 = vpop.f32.mrb[0].mxu0
      %v3810 = vadd.f32 %v3537, %v3809
      %3811 = vdwg.mxu0
      %v3812 = vand.u32 %v331, 4294901760
      %v3813 = vsub.f32 %v331, %v3812
      %v3814 = vand.u32 %v3813, 4294901760
      %3815 = vmatprep.subr.mxu0 %v3814
      %v3816 = vand.u32 %v330, 4294901760
      %v3817 = vsub.f32 %v330, %v3816
      %v3818 = vand.u32 %v3817, 4294901760
      %3819 = vmatpush1.msra.mxu0 %v3818
      %v3820 = vand.u32 %v333, 4294901760
      %v3821 = vsub.f32 %v333, %v3820
      %v3822 = vand.u32 %v3821, 4294901760
      %3823 = vmatprep.subr.mxu0 %v3822
      %v3824 = vand.u32 %v332, 4294901760
      %v3825 = vsub.f32 %v332, %v3824
      %v3826 = vand.u32 %v3825, 4294901760
      %3827 = vmatpush1.msra.mxu0 %v3826
      %v3828 = vand.u32 %v335, 4294901760
      %v3829 = vsub.f32 %v335, %v3828
      %v3830 = vand.u32 %v3829, 4294901760
      %3831 = vmatprep.subr.mxu0 %v3830
      %v3832 = vand.u32 %v334, 4294901760
      %v3833 = vsub.f32 %v334, %v3832
      %v3834 = vand.u32 %v3833, 4294901760
      %3835 = vmatpush1.msra.mxu0 %v3834
      %v3836 = vand.u32 %v337, 4294901760
      %v3837 = vsub.f32 %v337, %v3836
      %v3838 = vand.u32 %v3837, 4294901760
      %3839 = vmatprep.subr.mxu0 %v3838
      %v3840 = vand.u32 %v336, 4294901760
      %v3841 = vsub.f32 %v336, %v3840
      %v3842 = vand.u32 %v3841, 4294901760
      %3843 = vmatpush1.msra.mxu0 %v3842
      %v3844 = vand.u32 %v339, 4294901760
      %v3845 = vsub.f32 %v339, %v3844
      %v3846 = vand.u32 %v3845, 4294901760
      %3847 = vmatprep.subr.mxu0 %v3846
      %v3848 = vand.u32 %v338, 4294901760
      %v3849 = vsub.f32 %v338, %v3848
      %v3850 = vand.u32 %v3849, 4294901760
      %3851 = vmatpush1.msra.mxu0 %v3850
      %v3852 = vand.u32 %v341, 4294901760
      %v3853 = vsub.f32 %v341, %v3852
      %v3854 = vand.u32 %v3853, 4294901760
      %3855 = vmatprep.subr.mxu0 %v3854
      %v3856 = vand.u32 %v340, 4294901760
      %v3857 = vsub.f32 %v340, %v3856
      %v3858 = vand.u32 %v3857, 4294901760
      %3859 = vmatpush1.msra.mxu0 %v3858
      %v3860 = vand.u32 %v343, 4294901760
      %v3861 = vsub.f32 %v343, %v3860
      %v3862 = vand.u32 %v3861, 4294901760
      %3863 = vmatprep.subr.mxu0 %v3862
      %v3864 = vand.u32 %v342, 4294901760
      %v3865 = vsub.f32 %v342, %v3864
      %v3866 = vand.u32 %v3865, 4294901760
      %3867 = vmatpush1.msra.mxu0 %v3866
      %v3868 = vand.u32 %v345, 4294901760
      %v3869 = vsub.f32 %v345, %v3868
      %v3870 = vand.u32 %v3869, 4294901760
      %3871 = vmatprep.subr.mxu0 %v3870
      %v3872 = vand.u32 %v344, 4294901760
      %v3873 = vsub.f32 %v344, %v3872
      %v3874 = vand.u32 %v3873, 4294901760
      %3875 = vmatpush1.msra.mxu0 %v3874
      %v3876 = vand.u32 %v347, 4294901760
      %v3877 = vsub.f32 %v347, %v3876
      %v3878 = vand.u32 %v3877, 4294901760
      %3879 = vmatprep.subr.mxu0 %v3878
      %v3880 = vand.u32 %v346, 4294901760
      %v3881 = vsub.f32 %v346, %v3880
      %v3882 = vand.u32 %v3881, 4294901760
      %3883 = vmatpush1.msra.mxu0 %v3882
      %v3884 = vand.u32 %v349, 4294901760
      %v3885 = vsub.f32 %v349, %v3884
      %v3886 = vand.u32 %v3885, 4294901760
      %3887 = vmatprep.subr.mxu0 %v3886
      %v3888 = vand.u32 %v348, 4294901760
      %v3889 = vsub.f32 %v348, %v3888
      %v3890 = vand.u32 %v3889, 4294901760
      %3891 = vmatpush1.msra.mxu0 %v3890
      %v3892 = vand.u32 %v351, 4294901760
      %v3893 = vsub.f32 %v351, %v3892
      %v3894 = vand.u32 %v3893, 4294901760
      %3895 = vmatprep.subr.mxu0 %v3894
      %v3896 = vand.u32 %v350, 4294901760
      %v3897 = vsub.f32 %v350, %v3896
      %v3898 = vand.u32 %v3897, 4294901760
      %3899 = vmatpush1.msra.mxu0 %v3898
      %v3900 = vand.u32 %v353, 4294901760
      %v3901 = vsub.f32 %v353, %v3900
      %v3902 = vand.u32 %v3901, 4294901760
      %3903 = vmatprep.subr.mxu0 %v3902
      %v3904 = vand.u32 %v352, 4294901760
      %v3905 = vsub.f32 %v352, %v3904
      %v3906 = vand.u32 %v3905, 4294901760
      %3907 = vmatpush1.msra.mxu0 %v3906
      %v3908 = vand.u32 %v355, 4294901760
      %v3909 = vsub.f32 %v355, %v3908
      %v3910 = vand.u32 %v3909, 4294901760
      %3911 = vmatprep.subr.mxu0 %v3910
      %v3912 = vand.u32 %v354, 4294901760
      %v3913 = vsub.f32 %v354, %v3912
      %v3914 = vand.u32 %v3913, 4294901760
      %3915 = vmatpush1.msra.mxu0 %v3914
      %v3916 = vand.u32 %v357, 4294901760
      %v3917 = vsub.f32 %v357, %v3916
      %v3918 = vand.u32 %v3917, 4294901760
      %3919 = vmatprep.subr.mxu0 %v3918
      %v3920 = vand.u32 %v356, 4294901760
      %v3921 = vsub.f32 %v356, %v3920
      %v3922 = vand.u32 %v3921, 4294901760
      %3923 = vmatpush1.msra.mxu0 %v3922
      %v3924 = vand.u32 %v359, 4294901760
      %v3925 = vsub.f32 %v359, %v3924
      %v3926 = vand.u32 %v3925, 4294901760
      %3927 = vmatprep.subr.mxu0 %v3926
      %v3928 = vand.u32 %v358, 4294901760
      %v3929 = vsub.f32 %v358, %v3928
      %v3930 = vand.u32 %v3929, 4294901760
      %3931 = vmatpush1.msra.mxu0 %v3930
      %v3932 = vand.u32 %v361, 4294901760
      %v3933 = vsub.f32 %v361, %v3932
      %v3934 = vand.u32 %v3933, 4294901760
      %3935 = vmatprep.subr.mxu0 %v3934
      %v3936 = vand.u32 %v360, 4294901760
      %v3937 = vsub.f32 %v360, %v3936
      %v3938 = vand.u32 %v3937, 4294901760
      %3939 = vmatpush1.msra.mxu0 %v3938
      %v3940 = vand.u32 %v363, 4294901760
      %v3941 = vsub.f32 %v363, %v3940
      %v3942 = vand.u32 %v3941, 4294901760
      %3943 = vmatprep.subr.mxu0 %v3942
      %v3944 = vand.u32 %v362, 4294901760
      %v3945 = vsub.f32 %v362, %v3944
      %v3946 = vand.u32 %v3945, 4294901760
      %3947 = vmatpush1.msra.mxu0 %v3946
      %v3948 = vand.u32 %v365, 4294901760
      %v3949 = vsub.f32 %v365, %v3948
      %v3950 = vand.u32 %v3949, 4294901760
      %3951 = vmatprep.subr.mxu0 %v3950
      %v3952 = vand.u32 %v364, 4294901760
      %v3953 = vsub.f32 %v364, %v3952
      %v3954 = vand.u32 %v3953, 4294901760
      %3955 = vmatpush1.msra.mxu0 %v3954
      %v3956 = vand.u32 %v367, 4294901760
      %v3957 = vsub.f32 %v367, %v3956
      %v3958 = vand.u32 %v3957, 4294901760
      %3959 = vmatprep.subr.mxu0 %v3958
      %v3960 = vand.u32 %v366, 4294901760
      %v3961 = vsub.f32 %v366, %v3960
      %v3962 = vand.u32 %v3961, 4294901760
      %3963 = vmatpush1.msra.mxu0 %v3962
      %v3964 = vand.u32 %v369, 4294901760
      %v3965 = vsub.f32 %v369, %v3964
      %v3966 = vand.u32 %v3965, 4294901760
      %3967 = vmatprep.subr.mxu0 %v3966
      %v3968 = vand.u32 %v368, 4294901760
      %v3969 = vsub.f32 %v368, %v3968
      %v3970 = vand.u32 %v3969, 4294901760
      %3971 = vmatpush1.msra.mxu0 %v3970
      %v3972 = vand.u32 %v371, 4294901760
      %v3973 = vsub.f32 %v371, %v3972
      %v3974 = vand.u32 %v3973, 4294901760
      %3975 = vmatprep.subr.mxu0 %v3974
      %v3976 = vand.u32 %v370, 4294901760
      %v3977 = vsub.f32 %v370, %v3976
      %v3978 = vand.u32 %v3977, 4294901760
      %3979 = vmatpush1.msra.mxu0 %v3978
      %v3980 = vand.u32 %v373, 4294901760
      %v3981 = vsub.f32 %v373, %v3980
      %v3982 = vand.u32 %v3981, 4294901760
      %3983 = vmatprep.subr.mxu0 %v3982
      %v3984 = vand.u32 %v372, 4294901760
      %v3985 = vsub.f32 %v372, %v3984
      %v3986 = vand.u32 %v3985, 4294901760
      %3987 = vmatpush1.msra.mxu0 %v3986
      %v3988 = vand.u32 %v375, 4294901760
      %v3989 = vsub.f32 %v375, %v3988
      %v3990 = vand.u32 %v3989, 4294901760
      %3991 = vmatprep.subr.mxu0 %v3990
      %v3992 = vand.u32 %v374, 4294901760
      %v3993 = vsub.f32 %v374, %v3992
      %v3994 = vand.u32 %v3993, 4294901760
      %3995 = vmatpush1.msra.mxu0 %v3994
      %v3996 = vand.u32 %v377, 4294901760
      %v3997 = vsub.f32 %v377, %v3996
      %v3998 = vand.u32 %v3997, 4294901760
      %3999 = vmatprep.subr.mxu0 %v3998
      %v4000 = vand.u32 %v376, 4294901760
      %v4001 = vsub.f32 %v376, %v4000
      %v4002 = vand.u32 %v4001, 4294901760
      %4003 = vmatpush1.msra.mxu0 %v4002
      %v4004 = vand.u32 %v379, 4294901760
      %v4005 = vsub.f32 %v379, %v4004
      %v4006 = vand.u32 %v4005, 4294901760
      %4007 = vmatprep.subr.mxu0 %v4006
      %v4008 = vand.u32 %v378, 4294901760
      %v4009 = vsub.f32 %v378, %v4008
      %v4010 = vand.u32 %v4009, 4294901760
      %4011 = vmatpush1.msra.mxu0 %v4010
      %v4012 = vand.u32 %v381, 4294901760
      %v4013 = vsub.f32 %v381, %v4012
      %v4014 = vand.u32 %v4013, 4294901760
      %4015 = vmatprep.subr.mxu0 %v4014
      %v4016 = vand.u32 %v380, 4294901760
      %v4017 = vsub.f32 %v380, %v4016
      %v4018 = vand.u32 %v4017, 4294901760
      %4019 = vmatpush1.msra.mxu0 %v4018
      %v4020 = vand.u32 %v383, 4294901760
      %v4021 = vsub.f32 %v383, %v4020
      %v4022 = vand.u32 %v4021, 4294901760
      %4023 = vmatprep.subr.mxu0 %v4022
      %v4024 = vand.u32 %v382, 4294901760
      %v4025 = vsub.f32 %v382, %v4024
      %v4026 = vand.u32 %v4025, 4294901760
      %4027 = vmatpush1.msra.mxu0 %v4026
      %v4028 = vand.u32 %v385, 4294901760
      %v4029 = vsub.f32 %v385, %v4028
      %v4030 = vand.u32 %v4029, 4294901760
      %4031 = vmatprep.subr.mxu0 %v4030
      %v4032 = vand.u32 %v384, 4294901760
      %v4033 = vsub.f32 %v384, %v4032
      %v4034 = vand.u32 %v4033, 4294901760
      %4035 = vmatpush1.msra.mxu0 %v4034
      %v4036 = vand.u32 %v387, 4294901760
      %v4037 = vsub.f32 %v387, %v4036
      %v4038 = vand.u32 %v4037, 4294901760
      %4039 = vmatprep.subr.mxu0 %v4038
      %v4040 = vand.u32 %v386, 4294901760
      %v4041 = vsub.f32 %v386, %v4040
      %v4042 = vand.u32 %v4041, 4294901760
      %4043 = vmatpush1.msra.mxu0 %v4042
      %v4044 = vand.u32 %v389, 4294901760
      %v4045 = vsub.f32 %v389, %v4044
      %v4046 = vand.u32 %v4045, 4294901760
      %4047 = vmatprep.subr.mxu0 %v4046
      %v4048 = vand.u32 %v388, 4294901760
      %v4049 = vsub.f32 %v388, %v4048
      %v4050 = vand.u32 %v4049, 4294901760
      %4051 = vmatpush1.msra.mxu0 %v4050
      %v4052 = vand.u32 %v391, 4294901760
      %v4053 = vsub.f32 %v391, %v4052
      %v4054 = vand.u32 %v4053, 4294901760
      %4055 = vmatprep.subr.mxu0 %v4054
      %v4056 = vand.u32 %v390, 4294901760
      %v4057 = vsub.f32 %v390, %v4056
      %v4058 = vand.u32 %v4057, 4294901760
      %4059 = vmatpush1.msra.mxu0 %v4058
      %v4060 = vand.u32 %v393, 4294901760
      %v4061 = vsub.f32 %v393, %v4060
      %v4062 = vand.u32 %v4061, 4294901760
      %4063 = vmatprep.subr.mxu0 %v4062
      %v4064 = vand.u32 %v392, 4294901760
      %v4065 = vsub.f32 %v392, %v4064
      %v4066 = vand.u32 %v4065, 4294901760
      %4067 = vmatpush1.msra.mxu0 %v4066
      %v4068 = vand.u32 %v197, 4294901760
      %4069 = vmatprep.mubr.f32.mxu0 %v4068
      %v4070 = vand.u32 %v196, 4294901760
      %4071 = vmatmul.mubr.f32.gmra.mrb[0].mxu0 %v4070
      %v4072 = vpop.f32.mrb[0].mxu0
      %v4073 = vadd.f32 %v3676, %v4072
      %v4074 = vpop.f32.mrb[0].mxu0
      %v4075 = vadd.f32 %v3678, %v4074
      %v4076 = vand.u32 %v203, 4294901760
      %4077 = vmatprep.mubr.f32.mxu0 %v4076
      %v4078 = vand.u32 %v202, 4294901760
      %4079 = vmatmul.mubr.f32.gmra.mrb[0].mxu0 %v4078
      %v4080 = vpop.f32.mrb[0].mxu0
      %v4081 = vadd.f32 %v3688, %v4080
      %v4082 = vpop.f32.mrb[0].mxu0
      %v4083 = vadd.f32 %v3690, %v4082
      %v4084 = vand.u32 %v209, 4294901760
      %4085 = vmatprep.mubr.f32.mxu0 %v4084
      %v4086 = vand.u32 %v208, 4294901760
      %4087 = vmatmul.mubr.f32.gmra.mrb[0].mxu0 %v4086
      %v4088 = vpop.f32.mrb[0].mxu0
      %v4089 = vadd.f32 %v3700, %v4088
      %v4090 = vpop.f32.mrb[0].mxu0
      %v4091 = vadd.f32 %v3702, %v4090
      %v4092 = vand.u32 %v215, 4294901760
      %4093 = vmatprep.mubr.f32.mxu0 %v4092
      %v4094 = vand.u32 %v214, 4294901760
      %4095 = vmatmul.mubr.f32.gmra.mrb[0].mxu0 %v4094
      %v4096 = vpop.f32.mrb[0].mxu0
      %v4097 = vadd.f32 %v3712, %v4096
      %v4098 = vpop.f32.mrb[0].mxu0
      %v4099 = vadd.f32 %v3714, %v4098
      %v4100 = vand.u32 %v221, 4294901760
      %4101 = vmatprep.mubr.f32.mxu0 %v4100
      %v4102 = vand.u32 %v220, 4294901760
      %4103 = vmatmul.mubr.f32.gmra.mrb[0].mxu0 %v4102
      %v4104 = vpop.f32.mrb[0].mxu0
      %v4105 = vadd.f32 %v3724, %v4104
      %v4106 = vpop.f32.mrb[0].mxu0
      %v4107 = vadd.f32 %v3726, %v4106
      %v4108 = vand.u32 %v227, 4294901760
      %4109 = vmatprep.mubr.f32.mxu0 %v4108
      %v4110 = vand.u32 %v226, 4294901760
      %4111 = vmatmul.mubr.f32.gmra.mrb[0].mxu0 %v4110
      %v4112 = vpop.f32.mrb[0].mxu0
      %v4113 = vadd.f32 %v3736, %v4112
      %v4114 = vpop.f32.mrb[0].mxu0
      %v4115 = vadd.f32 %v3738, %v4114
      %v4116 = vand.u32 %v233, 4294901760
      %4117 = vmatprep.mubr.f32.mxu0 %v4116
      %v4118 = vand.u32 %v232, 4294901760
      %4119 = vmatmul.mubr.f32.gmra.mrb[0].mxu0 %v4118
      %v4120 = vpop.f32.mrb[0].mxu0
      %v4121 = vadd.f32 %v3748, %v4120
      %v4122 = vpop.f32.mrb[0].mxu0
      %v4123 = vadd.f32 %v3750, %v4122
      %v4124 = vand.u32 %v239, 4294901760
      %4125 = vmatprep.mubr.f32.mxu0 %v4124
      %v4126 = vand.u32 %v238, 4294901760
      %4127 = vmatmul.mubr.f32.gmra.mrb[0].mxu0 %v4126
      %v4128 = vpop.f32.mrb[0].mxu0
      %v4129 = vadd.f32 %v3760, %v4128
      %v4130 = vpop.f32.mrb[0].mxu0
      %v4131 = vadd.f32 %v3762, %v4130
      %v4132 = vand.u32 %v245, 4294901760
      %4133 = vmatprep.mubr.f32.mxu0 %v4132
      %v4134 = vand.u32 %v244, 4294901760
      %4135 = vmatmul.mubr.f32.gmra.mrb[0].mxu0 %v4134
      %v4136 = vpop.f32.mrb[0].mxu0
      %v4137 = vadd.f32 %v3772, %v4136
      %v4138 = vpop.f32.mrb[0].mxu0
      %v4139 = vadd.f32 %v3774, %v4138
      %v4140 = vand.u32 %v251, 4294901760
      %4141 = vmatprep.mubr.f32.mxu0 %v4140
      %v4142 = vand.u32 %v250, 4294901760
      %4143 = vmatmul.mubr.f32.gmra.mrb[0].mxu0 %v4142
      %v4144 = vpop.f32.mrb[0].mxu0
      %v4145 = vadd.f32 %v3784, %v4144
      %v4146 = vpop.f32.mrb[0].mxu0
      %v4147 = vadd.f32 %v3786, %v4146
      %v4148 = vand.u32 %v257, 4294901760
      %4149 = vmatprep.mubr.f32.mxu0 %v4148
      %v4150 = vand.u32 %v256, 4294901760
      %4151 = vmatmul.mubr.f32.gmra.mrb[0].mxu0 %v4150
      %v4152 = vpop.f32.mrb[0].mxu0
      %v4153 = vadd.f32 %v3796, %v4152
      %v4154 = vpop.f32.mrb[0].mxu0
      %v4155 = vadd.f32 %v3798, %v4154
      %v4156 = vand.u32 %v263, 4294901760
      %4157 = vmatprep.mubr.f32.mxu0 %v4156
      %v4158 = vand.u32 %v262, 4294901760
      %4159 = vmatmul.mubr.f32.gmra.mrb[0].mxu0 %v4158
      %v4160 = vpop.f32.mrb[0].mxu0
      %v4161 = vadd.f32 %v3808, %v4160
      %v4162 = vpop.f32.mrb[0].mxu0
      %v4163 = vadd.f32 %v3810, %v4162
      %4164 = vdwg.mxu0
      %v4165 = vand.u32 %v331, 4294901760
      %4166 = vmatprep.subr.mxu0 %v4165
      %v4167 = vand.u32 %v330, 4294901760
      %4168 = vmatpush1.msra.mxu0 %v4167
      %v4169 = vand.u32 %v333, 4294901760
      %4170 = vmatprep.subr.mxu0 %v4169
      %v4171 = vand.u32 %v332, 4294901760
      %4172 = vmatpush1.msra.mxu0 %v4171
      %v4173 = vand.u32 %v335, 4294901760
      %4174 = vmatprep.subr.mxu0 %v4173
      %v4175 = vand.u32 %v334, 4294901760
      %4176 = vmatpush1.msra.mxu0 %v4175
      %v4177 = vand.u32 %v337, 4294901760
      %4178 = vmatprep.subr.mxu0 %v4177
      %v4179 = vand.u32 %v336, 4294901760
      %4180 = vmatpush1.msra.mxu0 %v4179
      %v4181 = vand.u32 %v339, 4294901760
      %4182 = vmatprep.subr.mxu0 %v4181
      %v4183 = vand.u32 %v338, 4294901760
      %4184 = vmatpush1.msra.mxu0 %v4183
      %v4185 = vand.u32 %v341, 4294901760
      %4186 = vmatprep.subr.mxu0 %v4185
      %v4187 = vand.u32 %v340, 4294901760
      %4188 = vmatpush1.msra.mxu0 %v4187
      %v4189 = vand.u32 %v343, 4294901760
      %4190 = vmatprep.subr.mxu0 %v4189
      %v4191 = vand.u32 %v342, 4294901760
      %4192 = vmatpush1.msra.mxu0 %v4191
      %v4193 = vand.u32 %v345, 4294901760
      %4194 = vmatprep.subr.mxu0 %v4193
      %v4195 = vand.u32 %v344, 4294901760
      %4196 = vmatpush1.msra.mxu0 %v4195
      %v4197 = vand.u32 %v347, 4294901760
      %4198 = vmatprep.subr.mxu0 %v4197
      %v4199 = vand.u32 %v346, 4294901760
      %4200 = vmatpush1.msra.mxu0 %v4199
      %v4201 = vand.u32 %v349, 4294901760
      %4202 = vmatprep.subr.mxu0 %v4201
      %v4203 = vand.u32 %v348, 4294901760
      %4204 = vmatpush1.msra.mxu0 %v4203
      %v4205 = vand.u32 %v351, 4294901760
      %4206 = vmatprep.subr.mxu0 %v4205
      %v4207 = vand.u32 %v350, 4294901760
      %4208 = vmatpush1.msra.mxu0 %v4207
      %v4209 = vand.u32 %v353, 4294901760
      %4210 = vmatprep.subr.mxu0 %v4209
      %v4211 = vand.u32 %v352, 4294901760
      %4212 = vmatpush1.msra.mxu0 %v4211
      %v4213 = vand.u32 %v355, 4294901760
      %4214 = vmatprep.subr.mxu0 %v4213
      %v4215 = vand.u32 %v354, 4294901760
      %4216 = vmatpush1.msra.mxu0 %v4215
      %v4217 = vand.u32 %v357, 4294901760
      %4218 = vmatprep.subr.mxu0 %v4217
      %v4219 = vand.u32 %v356, 4294901760
      %4220 = vmatpush1.msra.mxu0 %v4219
      %v4221 = vand.u32 %v359, 4294901760
      %4222 = vmatprep.subr.mxu0 %v4221
      %v4223 = vand.u32 %v358, 4294901760
      %4224 = vmatpush1.msra.mxu0 %v4223
      %v4225 = vand.u32 %v361, 4294901760
      %4226 = vmatprep.subr.mxu0 %v4225
      %v4227 = vand.u32 %v360, 4294901760
      %4228 = vmatpush1.msra.mxu0 %v4227
      %v4229 = vand.u32 %v363, 4294901760
      %4230 = vmatprep.subr.mxu0 %v4229
      %v4231 = vand.u32 %v362, 4294901760
      %4232 = vmatpush1.msra.mxu0 %v4231
      %v4233 = vand.u32 %v365, 4294901760
      %4234 = vmatprep.subr.mxu0 %v4233
      %v4235 = vand.u32 %v364, 4294901760
      %4236 = vmatpush1.msra.mxu0 %v4235
      %v4237 = vand.u32 %v367, 4294901760
      %4238 = vmatprep.subr.mxu0 %v4237
      %v4239 = vand.u32 %v366, 4294901760
      %4240 = vmatpush1.msra.mxu0 %v4239
      %v4241 = vand.u32 %v369, 4294901760
      %4242 = vmatprep.subr.mxu0 %v4241
      %v4243 = vand.u32 %v368, 4294901760
      %4244 = vmatpush1.msra.mxu0 %v4243
      %v4245 = vand.u32 %v371, 4294901760
      %4246 = vmatprep.subr.mxu0 %v4245
      %v4247 = vand.u32 %v370, 4294901760
      %4248 = vmatpush1.msra.mxu0 %v4247
      %v4249 = vand.u32 %v373, 4294901760
      %4250 = vmatprep.subr.mxu0 %v4249
      %v4251 = vand.u32 %v372, 4294901760
      %4252 = vmatpush1.msra.mxu0 %v4251
      %v4253 = vand.u32 %v375, 4294901760
      %4254 = vmatprep.subr.mxu0 %v4253
      %v4255 = vand.u32 %v374, 4294901760
      %4256 = vmatpush1.msra.mxu0 %v4255
      %v4257 = vand.u32 %v377, 4294901760
      %4258 = vmatprep.subr.mxu0 %v4257
      %v4259 = vand.u32 %v376, 4294901760
      %4260 = vmatpush1.msra.mxu0 %v4259
      %v4261 = vand.u32 %v379, 4294901760
      %4262 = vmatprep.subr.mxu0 %v4261
      %v4263 = vand.u32 %v378, 4294901760
      %4264 = vmatpush1.msra.mxu0 %v4263
      %v4265 = vand.u32 %v381, 4294901760
      %4266 = vmatprep.subr.mxu0 %v4265
      %v4267 = vand.u32 %v380, 4294901760
      %4268 = vmatpush1.msra.mxu0 %v4267
      %v4269 = vand.u32 %v383, 4294901760
      %4270 = vmatprep.subr.mxu0 %v4269
      %v4271 = vand.u32 %v382, 4294901760
      %4272 = vmatpush1.msra.mxu0 %v4271
      %v4273 = vand.u32 %v385, 4294901760
      %4274 = vmatprep.subr.mxu0 %v4273
      %v4275 = vand.u32 %v384, 4294901760
      %4276 = vmatpush1.msra.mxu0 %v4275
      %v4277 = vand.u32 %v387, 4294901760
      %4278 = vmatprep.subr.mxu0 %v4277
      %v4279 = vand.u32 %v386, 4294901760
      %4280 = vmatpush1.msra.mxu0 %v4279
      %v4281 = vand.u32 %v389, 4294901760
      %4282 = vmatprep.subr.mxu0 %v4281
      %v4283 = vand.u32 %v388, 4294901760
      %4284 = vmatpush1.msra.mxu0 %v4283
      %v4285 = vand.u32 %v391, 4294901760
      %4286 = vmatprep.subr.mxu0 %v4285
      %v4287 = vand.u32 %v390, 4294901760
      %4288 = vmatpush1.msra.mxu0 %v4287
      %v4289 = vand.u32 %v393, 4294901760
      %4290 = vmatprep.subr.mxu0 %v4289
      %v4291 = vand.u32 %v392, 4294901760
      %4292 = vmatpush1.msra.mxu0 %v4291
      %v4293 = vand.u32 %v197, 4294901760
      %4294 = vmatprep.mubr.f32.mxu0 %v4293
      %v4295 = vand.u32 %v196, 4294901760
      %4296 = vmatmul.mubr.f32.gmra.mrb[0].mxu0 %v4295
      %v4297 = vpop.f32.mrb[0].mxu0
      %v4298 = vadd.f32 %v4073, %v4297
      %v4299 = vpop.f32.mrb[0].mxu0
      %v4300 = vadd.f32 %v4075, %v4299
      %v4301 = vand.u32 %v203, 4294901760
      %4302 = vmatprep.mubr.f32.mxu0 %v4301
      %v4303 = vand.u32 %v202, 4294901760
      %4304 = vmatmul.mubr.f32.gmra.mrb[0].mxu0 %v4303
      %v4305 = vpop.f32.mrb[0].mxu0
      %v4306 = vadd.f32 %v4081, %v4305
      %v4307 = vpop.f32.mrb[0].mxu0
      %v4308 = vadd.f32 %v4083, %v4307
      %v4309 = vand.u32 %v209, 4294901760
      %4310 = vmatprep.mubr.f32.mxu0 %v4309
      %v4311 = vand.u32 %v208, 4294901760
      %4312 = vmatmul.mubr.f32.gmra.mrb[0].mxu0 %v4311
      %v4313 = vpop.f32.mrb[0].mxu0
      %v4314 = vadd.f32 %v4089, %v4313
      %v4315 = vpop.f32.mrb[0].mxu0
      %v4316 = vadd.f32 %v4091, %v4315
      %v4317 = vand.u32 %v215, 4294901760
      %4318 = vmatprep.mubr.f32.mxu0 %v4317
      %v4319 = vand.u32 %v214, 4294901760
      %4320 = vmatmul.mubr.f32.gmra.mrb[0].mxu0 %v4319
      %v4321 = vpop.f32.mrb[0].mxu0
      %v4322 = vadd.f32 %v4097, %v4321
      %v4323 = vpop.f32.mrb[0].mxu0
      %v4324 = vadd.f32 %v4099, %v4323
      %v4325 = vand.u32 %v221, 4294901760
      %4326 = vmatprep.mubr.f32.mxu0 %v4325
      %v4327 = vand.u32 %v220, 4294901760
      %4328 = vmatmul.mubr.f32.gmra.mrb[0].mxu0 %v4327
      %v4329 = vpop.f32.mrb[0].mxu0
      %v4330 = vadd.f32 %v4105, %v4329
      %v4331 = vpop.f32.mrb[0].mxu0
      %v4332 = vadd.f32 %v4107, %v4331
      %v4333 = vand.u32 %v227, 4294901760
      %4334 = vmatprep.mubr.f32.mxu0 %v4333
      %v4335 = vand.u32 %v226, 4294901760
      %4336 = vmatmul.mubr.f32.gmra.mrb[0].mxu0 %v4335
      %v4337 = vpop.f32.mrb[0].mxu0
      %v4338 = vadd.f32 %v4113, %v4337
      %v4339 = vpop.f32.mrb[0].mxu0
      %v4340 = vadd.f32 %v4115, %v4339
      %v4341 = vand.u32 %v233, 4294901760
      %4342 = vmatprep.mubr.f32.mxu0 %v4341
      %v4343 = vand.u32 %v232, 4294901760
      %4344 = vmatmul.mubr.f32.gmra.mrb[0].mxu0 %v4343
      %v4345 = vpop.f32.mrb[0].mxu0
      %v4346 = vadd.f32 %v4121, %v4345
      %v4347 = vpop.f32.mrb[0].mxu0
      %v4348 = vadd.f32 %v4123, %v4347
      %v4349 = vand.u32 %v239, 4294901760
      %4350 = vmatprep.mubr.f32.mxu0 %v4349
      %v4351 = vand.u32 %v238, 4294901760
      %4352 = vmatmul.mubr.f32.gmra.mrb[0].mxu0 %v4351
      %v4353 = vpop.f32.mrb[0].mxu0
      %v4354 = vadd.f32 %v4129, %v4353
      %v4355 = vpop.f32.mrb[0].mxu0
      %v4356 = vadd.f32 %v4131, %v4355
      %v4357 = vand.u32 %v245, 4294901760
      %4358 = vmatprep.mubr.f32.mxu0 %v4357
      %v4359 = vand.u32 %v244, 4294901760
      %4360 = vmatmul.mubr.f32.gmra.mrb[0].mxu0 %v4359
      %v4361 = vpop.f32.mrb[0].mxu0
      %v4362 = vadd.f32 %v4137, %v4361
      %v4363 = vpop.f32.mrb[0].mxu0
      %v4364 = vadd.f32 %v4139, %v4363
      %v4365 = vand.u32 %v251, 4294901760
      %4366 = vmatprep.mubr.f32.mxu0 %v4365
      %v4367 = vand.u32 %v250, 4294901760
      %4368 = vmatmul.mubr.f32.gmra.mrb[0].mxu0 %v4367
      %v4369 = vpop.f32.mrb[0].mxu0
      %v4370 = vadd.f32 %v4145, %v4369
      %v4371 = vpop.f32.mrb[0].mxu0
      %v4372 = vadd.f32 %v4147, %v4371
      %v4373 = vand.u32 %v257, 4294901760
      %4374 = vmatprep.mubr.f32.mxu0 %v4373
      %v4375 = vand.u32 %v256, 4294901760
      %4376 = vmatmul.mubr.f32.gmra.mrb[0].mxu0 %v4375
      %v4377 = vpop.f32.mrb[0].mxu0
      %v4378 = vadd.f32 %v4153, %v4377
      %v4379 = vpop.f32.mrb[0].mxu0
      %v4380 = vadd.f32 %v4155, %v4379
      %v4381 = vand.u32 %v263, 4294901760
      %4382 = vmatprep.mubr.f32.mxu0 %v4381
      %v4383 = vand.u32 %v262, 4294901760
      %4384 = vmatmul.mubr.f32.gmra.mrb[0].mxu0 %v4383
      %v4385 = vpop.f32.mrb[0].mxu0
      %v4386 = vadd.f32 %v4161, %v4385
      %v4387 = vpop.f32.mrb[0].mxu0
      %v4388 = vadd.f32 %v4163, %v4387
      %4389 = vdwg.mxu0
      %v4390 = vand.u32 %v395, 4294901760
      %4391 = vmatprep.subr.mxu0 %v4390
      %v4392 = vand.u32 %v394, 4294901760
      %4393 = vmatpush1.msra.mxu0 %v4392
      %v4394 = vand.u32 %v397, 4294901760
      %4395 = vmatprep.subr.mxu0 %v4394
      %v4396 = vand.u32 %v396, 4294901760
      %4397 = vmatpush1.msra.mxu0 %v4396
      %v4398 = vand.u32 %v399, 4294901760
      %4399 = vmatprep.subr.mxu0 %v4398
      %v4400 = vand.u32 %v398, 4294901760
      %4401 = vmatpush1.msra.mxu0 %v4400
      %v4402 = vand.u32 %v401, 4294901760
      %4403 = vmatprep.subr.mxu0 %v4402
      %v4404 = vand.u32 %v400, 4294901760
      %4405 = vmatpush1.msra.mxu0 %v4404
      %v4406 = vand.u32 %v403, 4294901760
      %4407 = vmatprep.subr.mxu0 %v4406
      %v4408 = vand.u32 %v402, 4294901760
      %4409 = vmatpush1.msra.mxu0 %v4408
      %v4410 = vand.u32 %v405, 4294901760
      %4411 = vmatprep.subr.mxu0 %v4410
      %v4412 = vand.u32 %v404, 4294901760
      %4413 = vmatpush1.msra.mxu0 %v4412
      %v4414 = vand.u32 %v407, 4294901760
      %4415 = vmatprep.subr.mxu0 %v4414
      %v4416 = vand.u32 %v406, 4294901760
      %4417 = vmatpush1.msra.mxu0 %v4416
      %v4418 = vand.u32 %v409, 4294901760
      %4419 = vmatprep.subr.mxu0 %v4418
      %v4420 = vand.u32 %v408, 4294901760
      %4421 = vmatpush1.msra.mxu0 %v4420
      %v4422 = vand.u32 %v411, 4294901760
      %4423 = vmatprep.subr.mxu0 %v4422
      %v4424 = vand.u32 %v410, 4294901760
      %4425 = vmatpush1.msra.mxu0 %v4424
      %v4426 = vand.u32 %v413, 4294901760
      %4427 = vmatprep.subr.mxu0 %v4426
      %v4428 = vand.u32 %v412, 4294901760
      %4429 = vmatpush1.msra.mxu0 %v4428
      %v4430 = vand.u32 %v415, 4294901760
      %4431 = vmatprep.subr.mxu0 %v4430
      %v4432 = vand.u32 %v414, 4294901760
      %4433 = vmatpush1.msra.mxu0 %v4432
      %v4434 = vand.u32 %v417, 4294901760
      %4435 = vmatprep.subr.mxu0 %v4434
      %v4436 = vand.u32 %v416, 4294901760
      %4437 = vmatpush1.msra.mxu0 %v4436
      %v4438 = vand.u32 %v419, 4294901760
      %4439 = vmatprep.subr.mxu0 %v4438
      %v4440 = vand.u32 %v418, 4294901760
      %4441 = vmatpush1.msra.mxu0 %v4440
      %v4442 = vand.u32 %v421, 4294901760
      %4443 = vmatprep.subr.mxu0 %v4442
      %v4444 = vand.u32 %v420, 4294901760
      %4445 = vmatpush1.msra.mxu0 %v4444
      %v4446 = vand.u32 %v423, 4294901760
      %4447 = vmatprep.subr.mxu0 %v4446
      %v4448 = vand.u32 %v422, 4294901760
      %4449 = vmatpush1.msra.mxu0 %v4448
      %v4450 = vand.u32 %v425, 4294901760
      %4451 = vmatprep.subr.mxu0 %v4450
      %v4452 = vand.u32 %v424, 4294901760
      %4453 = vmatpush1.msra.mxu0 %v4452
      %v4454 = vand.u32 %v427, 4294901760
      %4455 = vmatprep.subr.mxu0 %v4454
      %v4456 = vand.u32 %v426, 4294901760
      %4457 = vmatpush1.msra.mxu0 %v4456
      %v4458 = vand.u32 %v429, 4294901760
      %4459 = vmatprep.subr.mxu0 %v4458
      %v4460 = vand.u32 %v428, 4294901760
      %4461 = vmatpush1.msra.mxu0 %v4460
      %v4462 = vand.u32 %v431, 4294901760
      %4463 = vmatprep.subr.mxu0 %v4462
      %v4464 = vand.u32 %v430, 4294901760
      %4465 = vmatpush1.msra.mxu0 %v4464
      %v4466 = vand.u32 %v433, 4294901760
      %4467 = vmatprep.subr.mxu0 %v4466
      %v4468 = vand.u32 %v432, 4294901760
      %4469 = vmatpush1.msra.mxu0 %v4468
      %v4470 = vand.u32 %v435, 4294901760
      %4471 = vmatprep.subr.mxu0 %v4470
      %v4472 = vand.u32 %v434, 4294901760
      %4473 = vmatpush1.msra.mxu0 %v4472
      %v4474 = vand.u32 %v437, 4294901760
      %4475 = vmatprep.subr.mxu0 %v4474
      %v4476 = vand.u32 %v436, 4294901760
      %4477 = vmatpush1.msra.mxu0 %v4476
      %v4478 = vand.u32 %v439, 4294901760
      %4479 = vmatprep.subr.mxu0 %v4478
      %v4480 = vand.u32 %v438, 4294901760
      %4481 = vmatpush1.msra.mxu0 %v4480
      %v4482 = vand.u32 %v441, 4294901760
      %4483 = vmatprep.subr.mxu0 %v4482
      %v4484 = vand.u32 %v440, 4294901760
      %4485 = vmatpush1.msra.mxu0 %v4484
      %v4486 = vand.u32 %v443, 4294901760
      %4487 = vmatprep.subr.mxu0 %v4486
      %v4488 = vand.u32 %v442, 4294901760
      %4489 = vmatpush1.msra.mxu0 %v4488
      %v4490 = vand.u32 %v445, 4294901760
      %4491 = vmatprep.subr.mxu0 %v4490
      %v4492 = vand.u32 %v444, 4294901760
      %4493 = vmatpush1.msra.mxu0 %v4492
      %v4494 = vand.u32 %v447, 4294901760
      %4495 = vmatprep.subr.mxu0 %v4494
      %v4496 = vand.u32 %v446, 4294901760
      %4497 = vmatpush1.msra.mxu0 %v4496
      %v4498 = vand.u32 %v449, 4294901760
      %4499 = vmatprep.subr.mxu0 %v4498
      %v4500 = vand.u32 %v448, 4294901760
      %4501 = vmatpush1.msra.mxu0 %v4500
      %v4502 = vand.u32 %v451, 4294901760
      %4503 = vmatprep.subr.mxu0 %v4502
      %v4504 = vand.u32 %v450, 4294901760
      %4505 = vmatpush1.msra.mxu0 %v4504
      %v4506 = vand.u32 %v453, 4294901760
      %4507 = vmatprep.subr.mxu0 %v4506
      %v4508 = vand.u32 %v452, 4294901760
      %4509 = vmatpush1.msra.mxu0 %v4508
      %v4510 = vand.u32 %v455, 4294901760
      %4511 = vmatprep.subr.mxu0 %v4510
      %v4512 = vand.u32 %v454, 4294901760
      %4513 = vmatpush1.msra.mxu0 %v4512
      %v4514 = vand.u32 %v457, 4294901760
      %4515 = vmatprep.subr.mxu0 %v4514
      %v4516 = vand.u32 %v456, 4294901760
      %4517 = vmatpush1.msra.mxu0 %v4516
      %v4518 = vand.u32 %v199, 4294901760
      %v4519 = vsub.f32 %v199, %v4518
      %v4520 = vand.u32 %v4519, 4294901760
      %v4521 = vsub.f32 %v4519, %v4520
      %v4522 = vand.u32 %v4521, 4294901760
      %4523 = vmatprep.mubr.f32.mxu0 %v4522
      %v4524 = vand.u32 %v198, 4294901760
      %v4525 = vsub.f32 %v198, %v4524
      %v4526 = vand.u32 %v4525, 4294901760
      %v4527 = vsub.f32 %v4525, %v4526
      %v4528 = vand.u32 %v4527, 4294901760
      %4529 = vmatmul.mubr.f32.gmra.mrb[0].mxu0 %v4528
      %v4530 = vpop.f32.mrb[0].mxu0
      %v4531 = vadd.f32 %v4298, %v4530
      %v4532 = vpop.f32.mrb[0].mxu0
      %v4533 = vadd.f32 %v4300, %v4532
      %v4534 = vand.u32 %v205, 4294901760
      %v4535 = vsub.f32 %v205, %v4534
      %v4536 = vand.u32 %v4535, 4294901760
      %v4537 = vsub.f32 %v4535, %v4536
      %v4538 = vand.u32 %v4537, 4294901760
      %4539 = vmatprep.mubr.f32.mxu0 %v4538
      %v4540 = vand.u32 %v204, 4294901760
      %v4541 = vsub.f32 %v204, %v4540
      %v4542 = vand.u32 %v4541, 4294901760
      %v4543 = vsub.f32 %v4541, %v4542
      %v4544 = vand.u32 %v4543, 4294901760
      %4545 = vmatmul.mubr.f32.gmra.mrb[0].mxu0 %v4544
      %v4546 = vpop.f32.mrb[0].mxu0
      %v4547 = vadd.f32 %v4306, %v4546
      %v4548 = vpop.f32.mrb[0].mxu0
      %v4549 = vadd.f32 %v4308, %v4548
      %v4550 = vand.u32 %v211, 4294901760
      %v4551 = vsub.f32 %v211, %v4550
      %v4552 = vand.u32 %v4551, 4294901760
      %v4553 = vsub.f32 %v4551, %v4552
      %v4554 = vand.u32 %v4553, 4294901760
      %4555 = vmatprep.mubr.f32.mxu0 %v4554
      %v4556 = vand.u32 %v210, 4294901760
      %v4557 = vsub.f32 %v210, %v4556
      %v4558 = vand.u32 %v4557, 4294901760
      %v4559 = vsub.f32 %v4557, %v4558
      %v4560 = vand.u32 %v4559, 4294901760
      %4561 = vmatmul.mubr.f32.gmra.mrb[0].mxu0 %v4560
      %v4562 = vpop.f32.mrb[0].mxu0
      %v4563 = vadd.f32 %v4314, %v4562
      %v4564 = vpop.f32.mrb[0].mxu0
      %v4565 = vadd.f32 %v4316, %v4564
      %v4566 = vand.u32 %v217, 4294901760
      %v4567 = vsub.f32 %v217, %v4566
      %v4568 = vand.u32 %v4567, 4294901760
      %v4569 = vsub.f32 %v4567, %v4568
      %v4570 = vand.u32 %v4569, 4294901760
      %4571 = vmatprep.mubr.f32.mxu0 %v4570
      %v4572 = vand.u32 %v216, 4294901760
      %v4573 = vsub.f32 %v216, %v4572
      %v4574 = vand.u32 %v4573, 4294901760
      %v4575 = vsub.f32 %v4573, %v4574
      %v4576 = vand.u32 %v4575, 4294901760
      %4577 = vmatmul.mubr.f32.gmra.mrb[0].mxu0 %v4576
      %v4578 = vpop.f32.mrb[0].mxu0
      %v4579 = vadd.f32 %v4322, %v4578
      %v4580 = vpop.f32.mrb[0].mxu0
      %v4581 = vadd.f32 %v4324, %v4580
      %v4582 = vand.u32 %v223, 4294901760
      %v4583 = vsub.f32 %v223, %v4582
      %v4584 = vand.u32 %v4583, 4294901760
      %v4585 = vsub.f32 %v4583, %v4584
      %v4586 = vand.u32 %v4585, 4294901760
      %4587 = vmatprep.mubr.f32.mxu0 %v4586
      %v4588 = vand.u32 %v222, 4294901760
      %v4589 = vsub.f32 %v222, %v4588
      %v4590 = vand.u32 %v4589, 4294901760
      %v4591 = vsub.f32 %v4589, %v4590
      %v4592 = vand.u32 %v4591, 4294901760
      %4593 = vmatmul.mubr.f32.gmra.mrb[0].mxu0 %v4592
      %v4594 = vpop.f32.mrb[0].mxu0
      %v4595 = vadd.f32 %v4330, %v4594
      %v4596 = vpop.f32.mrb[0].mxu0
      %v4597 = vadd.f32 %v4332, %v4596
      %v4598 = vand.u32 %v229, 4294901760
      %v4599 = vsub.f32 %v229, %v4598
      %v4600 = vand.u32 %v4599, 4294901760
      %v4601 = vsub.f32 %v4599, %v4600
      %v4602 = vand.u32 %v4601, 4294901760
      %4603 = vmatprep.mubr.f32.mxu0 %v4602
      %v4604 = vand.u32 %v228, 4294901760
      %v4605 = vsub.f32 %v228, %v4604
      %v4606 = vand.u32 %v4605, 4294901760
      %v4607 = vsub.f32 %v4605, %v4606
      %v4608 = vand.u32 %v4607, 4294901760
      %4609 = vmatmul.mubr.f32.gmra.mrb[0].mxu0 %v4608
      %v4610 = vpop.f32.mrb[0].mxu0
      %v4611 = vadd.f32 %v4338, %v4610
      %v4612 = vpop.f32.mrb[0].mxu0
      %v4613 = vadd.f32 %v4340, %v4612
      %v4614 = vand.u32 %v235, 4294901760
      %v4615 = vsub.f32 %v235, %v4614
      %v4616 = vand.u32 %v4615, 4294901760
      %v4617 = vsub.f32 %v4615, %v4616
      %v4618 = vand.u32 %v4617, 4294901760
      %4619 = vmatprep.mubr.f32.mxu0 %v4618
      %v4620 = vand.u32 %v234, 4294901760
      %v4621 = vsub.f32 %v234, %v4620
      %v4622 = vand.u32 %v4621, 4294901760
      %v4623 = vsub.f32 %v4621, %v4622
      %v4624 = vand.u32 %v4623, 4294901760
      %4625 = vmatmul.mubr.f32.gmra.mrb[0].mxu0 %v4624
      %v4626 = vpop.f32.mrb[0].mxu0
      %v4627 = vadd.f32 %v4346, %v4626
      %v4628 = vpop.f32.mrb[0].mxu0
      %v4629 = vadd.f32 %v4348, %v4628
      %v4630 = vand.u32 %v241, 4294901760
      %v4631 = vsub.f32 %v241, %v4630
      %v4632 = vand.u32 %v4631, 4294901760
      %v4633 = vsub.f32 %v4631, %v4632
      %v4634 = vand.u32 %v4633, 4294901760
      %4635 = vmatprep.mubr.f32.mxu0 %v4634
      %v4636 = vand.u32 %v240, 4294901760
      %v4637 = vsub.f32 %v240, %v4636
      %v4638 = vand.u32 %v4637, 4294901760
      %v4639 = vsub.f32 %v4637, %v4638
      %v4640 = vand.u32 %v4639, 4294901760
      %4641 = vmatmul.mubr.f32.gmra.mrb[0].mxu0 %v4640
      %v4642 = vpop.f32.mrb[0].mxu0
      %v4643 = vadd.f32 %v4354, %v4642
      %v4644 = vpop.f32.mrb[0].mxu0
      %v4645 = vadd.f32 %v4356, %v4644
      %v4646 = vand.u32 %v247, 4294901760
      %v4647 = vsub.f32 %v247, %v4646
      %v4648 = vand.u32 %v4647, 4294901760
      %v4649 = vsub.f32 %v4647, %v4648
      %v4650 = vand.u32 %v4649, 4294901760
      %4651 = vmatprep.mubr.f32.mxu0 %v4650
      %v4652 = vand.u32 %v246, 4294901760
      %v4653 = vsub.f32 %v246, %v4652
      %v4654 = vand.u32 %v4653, 4294901760
      %v4655 = vsub.f32 %v4653, %v4654
      %v4656 = vand.u32 %v4655, 4294901760
      %4657 = vmatmul.mubr.f32.gmra.mrb[0].mxu0 %v4656
      %v4658 = vpop.f32.mrb[0].mxu0
      %v4659 = vadd.f32 %v4362, %v4658
      %v4660 = vpop.f32.mrb[0].mxu0
      %v4661 = vadd.f32 %v4364, %v4660
      %v4662 = vand.u32 %v253, 4294901760
      %v4663 = vsub.f32 %v253, %v4662
      %v4664 = vand.u32 %v4663, 4294901760
      %v4665 = vsub.f32 %v4663, %v4664
      %v4666 = vand.u32 %v4665, 4294901760
      %4667 = vmatprep.mubr.f32.mxu0 %v4666
      %v4668 = vand.u32 %v252, 4294901760
      %v4669 = vsub.f32 %v252, %v4668
      %v4670 = vand.u32 %v4669, 4294901760
      %v4671 = vsub.f32 %v4669, %v4670
      %v4672 = vand.u32 %v4671, 4294901760
      %4673 = vmatmul.mubr.f32.gmra.mrb[0].mxu0 %v4672
      %v4674 = vpop.f32.mrb[0].mxu0
      %v4675 = vadd.f32 %v4370, %v4674
      %v4676 = vpop.f32.mrb[0].mxu0
      %v4677 = vadd.f32 %v4372, %v4676
      %v4678 = vand.u32 %v259, 4294901760
      %v4679 = vsub.f32 %v259, %v4678
      %v4680 = vand.u32 %v4679, 4294901760
      %v4681 = vsub.f32 %v4679, %v4680
      %v4682 = vand.u32 %v4681, 4294901760
      %4683 = vmatprep.mubr.f32.mxu0 %v4682
      %v4684 = vand.u32 %v258, 4294901760
      %v4685 = vsub.f32 %v258, %v4684
      %v4686 = vand.u32 %v4685, 4294901760
      %v4687 = vsub.f32 %v4685, %v4686
      %v4688 = vand.u32 %v4687, 4294901760
      %4689 = vmatmul.mubr.f32.gmra.mrb[0].mxu0 %v4688
      %v4690 = vpop.f32.mrb[0].mxu0
      %v4691 = vadd.f32 %v4378, %v4690
      %v4692 = vpop.f32.mrb[0].mxu0
      %v4693 = vadd.f32 %v4380, %v4692
      %v4694 = vand.u32 %v265, 4294901760
      %v4695 = vsub.f32 %v265, %v4694
      %v4696 = vand.u32 %v4695, 4294901760
      %v4697 = vsub.f32 %v4695, %v4696
      %v4698 = vand.u32 %v4697, 4294901760
      %4699 = vmatprep.mubr.f32.mxu0 %v4698
      %v4700 = vand.u32 %v264, 4294901760
      %v4701 = vsub.f32 %v264, %v4700
      %v4702 = vand.u32 %v4701, 4294901760
      %v4703 = vsub.f32 %v4701, %v4702
      %v4704 = vand.u32 %v4703, 4294901760
      %4705 = vmatmul.mubr.f32.gmra.mrb[0].mxu0 %v4704
      %v4706 = vpop.f32.mrb[0].mxu0
      %v4707 = vadd.f32 %v4386, %v4706
      %v4708 = vpop.f32.mrb[0].mxu0
      %v4709 = vadd.f32 %v4388, %v4708
      %4710 = vdwg.mxu0
      %v4711 = vand.u32 %v395, 4294901760
      %v4712 = vsub.f32 %v395, %v4711
      %v4713 = vand.u32 %v4712, 4294901760
      %v4714 = vsub.f32 %v4712, %v4713
      %v4715 = vand.u32 %v4714, 4294901760
      %4716 = vmatprep.subr.mxu0 %v4715
      %v4717 = vand.u32 %v394, 4294901760
      %v4718 = vsub.f32 %v394, %v4717
      %v4719 = vand.u32 %v4718, 4294901760
      %v4720 = vsub.f32 %v4718, %v4719
      %v4721 = vand.u32 %v4720, 4294901760
      %4722 = vmatpush1.msra.mxu0 %v4721
      %v4723 = vand.u32 %v397, 4294901760
      %v4724 = vsub.f32 %v397, %v4723
      %v4725 = vand.u32 %v4724, 4294901760
      %v4726 = vsub.f32 %v4724, %v4725
      %v4727 = vand.u32 %v4726, 4294901760
      %4728 = vmatprep.subr.mxu0 %v4727
      %v4729 = vand.u32 %v396, 4294901760
      %v4730 = vsub.f32 %v396, %v4729
      %v4731 = vand.u32 %v4730, 4294901760
      %v4732 = vsub.f32 %v4730, %v4731
      %v4733 = vand.u32 %v4732, 4294901760
      %4734 = vmatpush1.msra.mxu0 %v4733
      %v4735 = vand.u32 %v399, 4294901760
      %v4736 = vsub.f32 %v399, %v4735
      %v4737 = vand.u32 %v4736, 4294901760
      %v4738 = vsub.f32 %v4736, %v4737
      %v4739 = vand.u32 %v4738, 4294901760
      %4740 = vmatprep.subr.mxu0 %v4739
      %v4741 = vand.u32 %v398, 4294901760
      %v4742 = vsub.f32 %v398, %v4741
      %v4743 = vand.u32 %v4742, 4294901760
      %v4744 = vsub.f32 %v4742, %v4743
      %v4745 = vand.u32 %v4744, 4294901760
      %4746 = vmatpush1.msra.mxu0 %v4745
      %v4747 = vand.u32 %v401, 4294901760
      %v4748 = vsub.f32 %v401, %v4747
      %v4749 = vand.u32 %v4748, 4294901760
      %v4750 = vsub.f32 %v4748, %v4749
      %v4751 = vand.u32 %v4750, 4294901760
      %4752 = vmatprep.subr.mxu0 %v4751
      %v4753 = vand.u32 %v400, 4294901760
      %v4754 = vsub.f32 %v400, %v4753
      %v4755 = vand.u32 %v4754, 4294901760
      %v4756 = vsub.f32 %v4754, %v4755
      %v4757 = vand.u32 %v4756, 4294901760
      %4758 = vmatpush1.msra.mxu0 %v4757
      %v4759 = vand.u32 %v403, 4294901760
      %v4760 = vsub.f32 %v403, %v4759
      %v4761 = vand.u32 %v4760, 4294901760
      %v4762 = vsub.f32 %v4760, %v4761
      %v4763 = vand.u32 %v4762, 4294901760
      %4764 = vmatprep.subr.mxu0 %v4763
      %v4765 = vand.u32 %v402, 4294901760
      %v4766 = vsub.f32 %v402, %v4765
      %v4767 = vand.u32 %v4766, 4294901760
      %v4768 = vsub.f32 %v4766, %v4767
      %v4769 = vand.u32 %v4768, 4294901760
      %4770 = vmatpush1.msra.mxu0 %v4769
      %v4771 = vand.u32 %v405, 4294901760
      %v4772 = vsub.f32 %v405, %v4771
      %v4773 = vand.u32 %v4772, 4294901760
      %v4774 = vsub.f32 %v4772, %v4773
      %v4775 = vand.u32 %v4774, 4294901760
      %4776 = vmatprep.subr.mxu0 %v4775
      %v4777 = vand.u32 %v404, 4294901760
      %v4778 = vsub.f32 %v404, %v4777
      %v4779 = vand.u32 %v4778, 4294901760
      %v4780 = vsub.f32 %v4778, %v4779
      %v4781 = vand.u32 %v4780, 4294901760
      %4782 = vmatpush1.msra.mxu0 %v4781
      %v4783 = vand.u32 %v407, 4294901760
      %v4784 = vsub.f32 %v407, %v4783
      %v4785 = vand.u32 %v4784, 4294901760
      %v4786 = vsub.f32 %v4784, %v4785
      %v4787 = vand.u32 %v4786, 4294901760
      %4788 = vmatprep.subr.mxu0 %v4787
      %v4789 = vand.u32 %v406, 4294901760
      %v4790 = vsub.f32 %v406, %v4789
      %v4791 = vand.u32 %v4790, 4294901760
      %v4792 = vsub.f32 %v4790, %v4791
      %v4793 = vand.u32 %v4792, 4294901760
      %4794 = vmatpush1.msra.mxu0 %v4793
      %v4795 = vand.u32 %v409, 4294901760
      %v4796 = vsub.f32 %v409, %v4795
      %v4797 = vand.u32 %v4796, 4294901760
      %v4798 = vsub.f32 %v4796, %v4797
      %v4799 = vand.u32 %v4798, 4294901760
      %4800 = vmatprep.subr.mxu0 %v4799
      %v4801 = vand.u32 %v408, 4294901760
      %v4802 = vsub.f32 %v408, %v4801
      %v4803 = vand.u32 %v4802, 4294901760
      %v4804 = vsub.f32 %v4802, %v4803
      %v4805 = vand.u32 %v4804, 4294901760
      %4806 = vmatpush1.msra.mxu0 %v4805
      %v4807 = vand.u32 %v411, 4294901760
      %v4808 = vsub.f32 %v411, %v4807
      %v4809 = vand.u32 %v4808, 4294901760
      %v4810 = vsub.f32 %v4808, %v4809
      %v4811 = vand.u32 %v4810, 4294901760
      %4812 = vmatprep.subr.mxu0 %v4811
      %v4813 = vand.u32 %v410, 4294901760
      %v4814 = vsub.f32 %v410, %v4813
      %v4815 = vand.u32 %v4814, 4294901760
      %v4816 = vsub.f32 %v4814, %v4815
      %v4817 = vand.u32 %v4816, 4294901760
      %4818 = vmatpush1.msra.mxu0 %v4817
      %v4819 = vand.u32 %v413, 4294901760
      %v4820 = vsub.f32 %v413, %v4819
      %v4821 = vand.u32 %v4820, 4294901760
      %v4822 = vsub.f32 %v4820, %v4821
      %v4823 = vand.u32 %v4822, 4294901760
      %4824 = vmatprep.subr.mxu0 %v4823
      %v4825 = vand.u32 %v412, 4294901760
      %v4826 = vsub.f32 %v412, %v4825
      %v4827 = vand.u32 %v4826, 4294901760
      %v4828 = vsub.f32 %v4826, %v4827
      %v4829 = vand.u32 %v4828, 4294901760
      %4830 = vmatpush1.msra.mxu0 %v4829
      %v4831 = vand.u32 %v415, 4294901760
      %v4832 = vsub.f32 %v415, %v4831
      %v4833 = vand.u32 %v4832, 4294901760
      %v4834 = vsub.f32 %v4832, %v4833
      %v4835 = vand.u32 %v4834, 4294901760
      %4836 = vmatprep.subr.mxu0 %v4835
      %v4837 = vand.u32 %v414, 4294901760
      %v4838 = vsub.f32 %v414, %v4837
      %v4839 = vand.u32 %v4838, 4294901760
      %v4840 = vsub.f32 %v4838, %v4839
      %v4841 = vand.u32 %v4840, 4294901760
      %4842 = vmatpush1.msra.mxu0 %v4841
      %v4843 = vand.u32 %v417, 4294901760
      %v4844 = vsub.f32 %v417, %v4843
      %v4845 = vand.u32 %v4844, 4294901760
      %v4846 = vsub.f32 %v4844, %v4845
      %v4847 = vand.u32 %v4846, 4294901760
      %4848 = vmatprep.subr.mxu0 %v4847
      %v4849 = vand.u32 %v416, 4294901760
      %v4850 = vsub.f32 %v416, %v4849
      %v4851 = vand.u32 %v4850, 4294901760
      %v4852 = vsub.f32 %v4850, %v4851
      %v4853 = vand.u32 %v4852, 4294901760
      %4854 = vmatpush1.msra.mxu0 %v4853
      %v4855 = vand.u32 %v419, 4294901760
      %v4856 = vsub.f32 %v419, %v4855
      %v4857 = vand.u32 %v4856, 4294901760
      %v4858 = vsub.f32 %v4856, %v4857
      %v4859 = vand.u32 %v4858, 4294901760
      %4860 = vmatprep.subr.mxu0 %v4859
      %v4861 = vand.u32 %v418, 4294901760
      %v4862 = vsub.f32 %v418, %v4861
      %v4863 = vand.u32 %v4862, 4294901760
      %v4864 = vsub.f32 %v4862, %v4863
      %v4865 = vand.u32 %v4864, 4294901760
      %4866 = vmatpush1.msra.mxu0 %v4865
      %v4867 = vand.u32 %v421, 4294901760
      %v4868 = vsub.f32 %v421, %v4867
      %v4869 = vand.u32 %v4868, 4294901760
      %v4870 = vsub.f32 %v4868, %v4869
      %v4871 = vand.u32 %v4870, 4294901760
      %4872 = vmatprep.subr.mxu0 %v4871
      %v4873 = vand.u32 %v420, 4294901760
      %v4874 = vsub.f32 %v420, %v4873
      %v4875 = vand.u32 %v4874, 4294901760
      %v4876 = vsub.f32 %v4874, %v4875
      %v4877 = vand.u32 %v4876, 4294901760
      %4878 = vmatpush1.msra.mxu0 %v4877
      %v4879 = vand.u32 %v423, 4294901760
      %v4880 = vsub.f32 %v423, %v4879
      %v4881 = vand.u32 %v4880, 4294901760
      %v4882 = vsub.f32 %v4880, %v4881
      %v4883 = vand.u32 %v4882, 4294901760
      %4884 = vmatprep.subr.mxu0 %v4883
      %v4885 = vand.u32 %v422, 4294901760
      %v4886 = vsub.f32 %v422, %v4885
      %v4887 = vand.u32 %v4886, 4294901760
      %v4888 = vsub.f32 %v4886, %v4887
      %v4889 = vand.u32 %v4888, 4294901760
      %4890 = vmatpush1.msra.mxu0 %v4889
      %v4891 = vand.u32 %v425, 4294901760
      %v4892 = vsub.f32 %v425, %v4891
      %v4893 = vand.u32 %v4892, 4294901760
      %v4894 = vsub.f32 %v4892, %v4893
      %v4895 = vand.u32 %v4894, 4294901760
      %4896 = vmatprep.subr.mxu0 %v4895
      %v4897 = vand.u32 %v424, 4294901760
      %v4898 = vsub.f32 %v424, %v4897
      %v4899 = vand.u32 %v4898, 4294901760
      %v4900 = vsub.f32 %v4898, %v4899
      %v4901 = vand.u32 %v4900, 4294901760
      %4902 = vmatpush1.msra.mxu0 %v4901
      %v4903 = vand.u32 %v427, 4294901760
      %v4904 = vsub.f32 %v427, %v4903
      %v4905 = vand.u32 %v4904, 4294901760
      %v4906 = vsub.f32 %v4904, %v4905
      %v4907 = vand.u32 %v4906, 4294901760
      %4908 = vmatprep.subr.mxu0 %v4907
      %v4909 = vand.u32 %v426, 4294901760
      %v4910 = vsub.f32 %v426, %v4909
      %v4911 = vand.u32 %v4910, 4294901760
      %v4912 = vsub.f32 %v4910, %v4911
      %v4913 = vand.u32 %v4912, 4294901760
      %4914 = vmatpush1.msra.mxu0 %v4913
      %v4915 = vand.u32 %v429, 4294901760
      %v4916 = vsub.f32 %v429, %v4915
      %v4917 = vand.u32 %v4916, 4294901760
      %v4918 = vsub.f32 %v4916, %v4917
      %v4919 = vand.u32 %v4918, 4294901760
      %4920 = vmatprep.subr.mxu0 %v4919
      %v4921 = vand.u32 %v428, 4294901760
      %v4922 = vsub.f32 %v428, %v4921
      %v4923 = vand.u32 %v4922, 4294901760
      %v4924 = vsub.f32 %v4922, %v4923
      %v4925 = vand.u32 %v4924, 4294901760
      %4926 = vmatpush1.msra.mxu0 %v4925
      %v4927 = vand.u32 %v431, 4294901760
      %v4928 = vsub.f32 %v431, %v4927
      %v4929 = vand.u32 %v4928, 4294901760
      %v4930 = vsub.f32 %v4928, %v4929
      %v4931 = vand.u32 %v4930, 4294901760
      %4932 = vmatprep.subr.mxu0 %v4931
      %v4933 = vand.u32 %v430, 4294901760
      %v4934 = vsub.f32 %v430, %v4933
      %v4935 = vand.u32 %v4934, 4294901760
      %v4936 = vsub.f32 %v4934, %v4935
      %v4937 = vand.u32 %v4936, 4294901760
      %4938 = vmatpush1.msra.mxu0 %v4937
      %v4939 = vand.u32 %v433, 4294901760
      %v4940 = vsub.f32 %v433, %v4939
      %v4941 = vand.u32 %v4940, 4294901760
      %v4942 = vsub.f32 %v4940, %v4941
      %v4943 = vand.u32 %v4942, 4294901760
      %4944 = vmatprep.subr.mxu0 %v4943
      %v4945 = vand.u32 %v432, 4294901760
      %v4946 = vsub.f32 %v432, %v4945
      %v4947 = vand.u32 %v4946, 4294901760
      %v4948 = vsub.f32 %v4946, %v4947
      %v4949 = vand.u32 %v4948, 4294901760
      %4950 = vmatpush1.msra.mxu0 %v4949
      %v4951 = vand.u32 %v435, 4294901760
      %v4952 = vsub.f32 %v435, %v4951
      %v4953 = vand.u32 %v4952, 4294901760
      %v4954 = vsub.f32 %v4952, %v4953
      %v4955 = vand.u32 %v4954, 4294901760
      %4956 = vmatprep.subr.mxu0 %v4955
      %v4957 = vand.u32 %v434, 4294901760
      %v4958 = vsub.f32 %v434, %v4957
      %v4959 = vand.u32 %v4958, 4294901760
      %v4960 = vsub.f32 %v4958, %v4959
      %v4961 = vand.u32 %v4960, 4294901760
      %4962 = vmatpush1.msra.mxu0 %v4961
      %v4963 = vand.u32 %v437, 4294901760
      %v4964 = vsub.f32 %v437, %v4963
      %v4965 = vand.u32 %v4964, 4294901760
      %v4966 = vsub.f32 %v4964, %v4965
      %v4967 = vand.u32 %v4966, 4294901760
      %4968 = vmatprep.subr.mxu0 %v4967
      %v4969 = vand.u32 %v436, 4294901760
      %v4970 = vsub.f32 %v436, %v4969
      %v4971 = vand.u32 %v4970, 4294901760
      %v4972 = vsub.f32 %v4970, %v4971
      %v4973 = vand.u32 %v4972, 4294901760
      %4974 = vmatpush1.msra.mxu0 %v4973
      %v4975 = vand.u32 %v439, 4294901760
      %v4976 = vsub.f32 %v439, %v4975
      %v4977 = vand.u32 %v4976, 4294901760
      %v4978 = vsub.f32 %v4976, %v4977
      %v4979 = vand.u32 %v4978, 4294901760
      %4980 = vmatprep.subr.mxu0 %v4979
      %v4981 = vand.u32 %v438, 4294901760
      %v4982 = vsub.f32 %v438, %v4981
      %v4983 = vand.u32 %v4982, 4294901760
      %v4984 = vsub.f32 %v4982, %v4983
      %v4985 = vand.u32 %v4984, 4294901760
      %4986 = vmatpush1.msra.mxu0 %v4985
      %v4987 = vand.u32 %v441, 4294901760
      %v4988 = vsub.f32 %v441, %v4987
      %v4989 = vand.u32 %v4988, 4294901760
      %v4990 = vsub.f32 %v4988, %v4989
      %v4991 = vand.u32 %v4990, 4294901760
      %4992 = vmatprep.subr.mxu0 %v4991
      %v4993 = vand.u32 %v440, 4294901760
      %v4994 = vsub.f32 %v440, %v4993
      %v4995 = vand.u32 %v4994, 4294901760
      %v4996 = vsub.f32 %v4994, %v4995
      %v4997 = vand.u32 %v4996, 4294901760
      %4998 = vmatpush1.msra.mxu0 %v4997
      %v4999 = vand.u32 %v443, 4294901760
      %v5000 = vsub.f32 %v443, %v4999
      %v5001 = vand.u32 %v5000, 4294901760
      %v5002 = vsub.f32 %v5000, %v5001
      %v5003 = vand.u32 %v5002, 4294901760
      %5004 = vmatprep.subr.mxu0 %v5003
      %v5005 = vand.u32 %v442, 4294901760
      %v5006 = vsub.f32 %v442, %v5005
      %v5007 = vand.u32 %v5006, 4294901760
      %v5008 = vsub.f32 %v5006, %v5007
      %v5009 = vand.u32 %v5008, 4294901760
      %5010 = vmatpush1.msra.mxu0 %v5009
      %v5011 = vand.u32 %v445, 4294901760
      %v5012 = vsub.f32 %v445, %v5011
      %v5013 = vand.u32 %v5012, 4294901760
      %v5014 = vsub.f32 %v5012, %v5013
      %v5015 = vand.u32 %v5014, 4294901760
      %5016 = vmatprep.subr.mxu0 %v5015
      %v5017 = vand.u32 %v444, 4294901760
      %v5018 = vsub.f32 %v444, %v5017
      %v5019 = vand.u32 %v5018, 4294901760
      %v5020 = vsub.f32 %v5018, %v5019
      %v5021 = vand.u32 %v5020, 4294901760
      %5022 = vmatpush1.msra.mxu0 %v5021
      %v5023 = vand.u32 %v447, 4294901760
      %v5024 = vsub.f32 %v447, %v5023
      %v5025 = vand.u32 %v5024, 4294901760
      %v5026 = vsub.f32 %v5024, %v5025
      %v5027 = vand.u32 %v5026, 4294901760
      %5028 = vmatprep.subr.mxu0 %v5027
      %v5029 = vand.u32 %v446, 4294901760
      %v5030 = vsub.f32 %v446, %v5029
      %v5031 = vand.u32 %v5030, 4294901760
      %v5032 = vsub.f32 %v5030, %v5031
      %v5033 = vand.u32 %v5032, 4294901760
      %5034 = vmatpush1.msra.mxu0 %v5033
      %v5035 = vand.u32 %v449, 4294901760
      %v5036 = vsub.f32 %v449, %v5035
      %v5037 = vand.u32 %v5036, 4294901760
      %v5038 = vsub.f32 %v5036, %v5037
      %v5039 = vand.u32 %v5038, 4294901760
      %5040 = vmatprep.subr.mxu0 %v5039
      %v5041 = vand.u32 %v448, 4294901760
      %v5042 = vsub.f32 %v448, %v5041
      %v5043 = vand.u32 %v5042, 4294901760
      %v5044 = vsub.f32 %v5042, %v5043
      %v5045 = vand.u32 %v5044, 4294901760
      %5046 = vmatpush1.msra.mxu0 %v5045
      %v5047 = vand.u32 %v451, 4294901760
      %v5048 = vsub.f32 %v451, %v5047
      %v5049 = vand.u32 %v5048, 4294901760
      %v5050 = vsub.f32 %v5048, %v5049
      %v5051 = vand.u32 %v5050, 4294901760
      %5052 = vmatprep.subr.mxu0 %v5051
      %v5053 = vand.u32 %v450, 4294901760
      %v5054 = vsub.f32 %v450, %v5053
      %v5055 = vand.u32 %v5054, 4294901760
      %v5056 = vsub.f32 %v5054, %v5055
      %v5057 = vand.u32 %v5056, 4294901760
      %5058 = vmatpush1.msra.mxu0 %v5057
      %v5059 = vand.u32 %v453, 4294901760
      %v5060 = vsub.f32 %v453, %v5059
      %v5061 = vand.u32 %v5060, 4294901760
      %v5062 = vsub.f32 %v5060, %v5061
      %v5063 = vand.u32 %v5062, 4294901760
      %5064 = vmatprep.subr.mxu0 %v5063
      %v5065 = vand.u32 %v452, 4294901760
      %v5066 = vsub.f32 %v452, %v5065
      %v5067 = vand.u32 %v5066, 4294901760
      %v5068 = vsub.f32 %v5066, %v5067
      %v5069 = vand.u32 %v5068, 4294901760
      %5070 = vmatpush1.msra.mxu0 %v5069
      %v5071 = vand.u32 %v455, 4294901760
      %v5072 = vsub.f32 %v455, %v5071
      %v5073 = vand.u32 %v5072, 4294901760
      %v5074 = vsub.f32 %v5072, %v5073
      %v5075 = vand.u32 %v5074, 4294901760
      %5076 = vmatprep.subr.mxu0 %v5075
      %v5077 = vand.u32 %v454, 4294901760
      %v5078 = vsub.f32 %v454, %v5077
      %v5079 = vand.u32 %v5078, 4294901760
      %v5080 = vsub.f32 %v5078, %v5079
      %v5081 = vand.u32 %v5080, 4294901760
      %5082 = vmatpush1.msra.mxu0 %v5081
      %v5083 = vand.u32 %v457, 4294901760
      %v5084 = vsub.f32 %v457, %v5083
      %v5085 = vand.u32 %v5084, 4294901760
      %v5086 = vsub.f32 %v5084, %v5085
      %v5087 = vand.u32 %v5086, 4294901760
      %5088 = vmatprep.subr.mxu0 %v5087
      %v5089 = vand.u32 %v456, 4294901760
      %v5090 = vsub.f32 %v456, %v5089
      %v5091 = vand.u32 %v5090, 4294901760
      %v5092 = vsub.f32 %v5090, %v5091
      %v5093 = vand.u32 %v5092, 4294901760
      %5094 = vmatpush1.msra.mxu0 %v5093
      %v5095 = vand.u32 %v199, 4294901760
      %5096 = vmatprep.mubr.f32.mxu0 %v5095
      %v5097 = vand.u32 %v198, 4294901760
      %5098 = vmatmul.mubr.f32.gmra.mrb[0].mxu0 %v5097
      %v5099 = vpop.f32.mrb[0].mxu0
      %v5100 = vadd.f32 %v4531, %v5099
      %v5101 = vpop.f32.mrb[0].mxu0
      %v5102 = vadd.f32 %v4533, %v5101
      %v5103 = vand.u32 %v205, 4294901760
      %5104 = vmatprep.mubr.f32.mxu0 %v5103
      %v5105 = vand.u32 %v204, 4294901760
      %5106 = vmatmul.mubr.f32.gmra.mrb[0].mxu0 %v5105
      %v5107 = vpop.f32.mrb[0].mxu0
      %v5108 = vadd.f32 %v4547, %v5107
      %v5109 = vpop.f32.mrb[0].mxu0
      %v5110 = vadd.f32 %v4549, %v5109
      %v5111 = vand.u32 %v211, 4294901760
      %5112 = vmatprep.mubr.f32.mxu0 %v5111
      %v5113 = vand.u32 %v210, 4294901760
      %5114 = vmatmul.mubr.f32.gmra.mrb[0].mxu0 %v5113
      %v5115 = vpop.f32.mrb[0].mxu0
      %v5116 = vadd.f32 %v4563, %v5115
      %v5117 = vpop.f32.mrb[0].mxu0
      %v5118 = vadd.f32 %v4565, %v5117
      %v5119 = vand.u32 %v217, 4294901760
      %5120 = vmatprep.mubr.f32.mxu0 %v5119
      %v5121 = vand.u32 %v216, 4294901760
      %5122 = vmatmul.mubr.f32.gmra.mrb[0].mxu0 %v5121
      %v5123 = vpop.f32.mrb[0].mxu0
      %v5124 = vadd.f32 %v4579, %v5123
      %v5125 = vpop.f32.mrb[0].mxu0
      %v5126 = vadd.f32 %v4581, %v5125
      %v5127 = vand.u32 %v223, 4294901760
      %5128 = vmatprep.mubr.f32.mxu0 %v5127
      %v5129 = vand.u32 %v222, 4294901760
      %5130 = vmatmul.mubr.f32.gmra.mrb[0].mxu0 %v5129
      %v5131 = vpop.f32.mrb[0].mxu0
      %v5132 = vadd.f32 %v4595, %v5131
      %v5133 = vpop.f32.mrb[0].mxu0
      %v5134 = vadd.f32 %v4597, %v5133
      %v5135 = vand.u32 %v229, 4294901760
      %5136 = vmatprep.mubr.f32.mxu0 %v5135
      %v5137 = vand.u32 %v228, 4294901760
      %5138 = vmatmul.mubr.f32.gmra.mrb[0].mxu0 %v5137
      %v5139 = vpop.f32.mrb[0].mxu0
      %v5140 = vadd.f32 %v4611, %v5139
      %v5141 = vpop.f32.mrb[0].mxu0
      %v5142 = vadd.f32 %v4613, %v5141
      %v5143 = vand.u32 %v235, 4294901760
      %5144 = vmatprep.mubr.f32.mxu0 %v5143
      %v5145 = vand.u32 %v234, 4294901760
      %5146 = vmatmul.mubr.f32.gmra.mrb[0].mxu0 %v5145
      %v5147 = vpop.f32.mrb[0].mxu0
      %v5148 = vadd.f32 %v4627, %v5147
      %v5149 = vpop.f32.mrb[0].mxu0
      %v5150 = vadd.f32 %v4629, %v5149
      %v5151 = vand.u32 %v241, 4294901760
      %5152 = vmatprep.mubr.f32.mxu0 %v5151
      %v5153 = vand.u32 %v240, 4294901760
      %5154 = vmatmul.mubr.f32.gmra.mrb[0].mxu0 %v5153
      %v5155 = vpop.f32.mrb[0].mxu0
      %v5156 = vadd.f32 %v4643, %v5155
      %v5157 = vpop.f32.mrb[0].mxu0
      %v5158 = vadd.f32 %v4645, %v5157
      %v5159 = vand.u32 %v247, 4294901760
      %5160 = vmatprep.mubr.f32.mxu0 %v5159
      %v5161 = vand.u32 %v246, 4294901760
      %5162 = vmatmul.mubr.f32.gmra.mrb[0].mxu0 %v5161
      %v5163 = vpop.f32.mrb[0].mxu0
      %v5164 = vadd.f32 %v4659, %v5163
      %v5165 = vpop.f32.mrb[0].mxu0
      %v5166 = vadd.f32 %v4661, %v5165
      %v5167 = vand.u32 %v253, 4294901760
      %5168 = vmatprep.mubr.f32.mxu0 %v5167
      %v5169 = vand.u32 %v252, 4294901760
      %5170 = vmatmul.mubr.f32.gmra.mrb[0].mxu0 %v5169
      %v5171 = vpop.f32.mrb[0].mxu0
      %v5172 = vadd.f32 %v4675, %v5171
      %v5173 = vpop.f32.mrb[0].mxu0
      %v5174 = vadd.f32 %v4677, %v5173
      %v5175 = vand.u32 %v259, 4294901760
      %5176 = vmatprep.mubr.f32.mxu0 %v5175
      %v5177 = vand.u32 %v258, 4294901760
      %5178 = vmatmul.mubr.f32.gmra.mrb[0].mxu0 %v5177
      %v5179 = vpop.f32.mrb[0].mxu0
      %v5180 = vadd.f32 %v4691, %v5179
      %v5181 = vpop.f32.mrb[0].mxu0
      %v5182 = vadd.f32 %v4693, %v5181
      %v5183 = vand.u32 %v265, 4294901760
      %5184 = vmatprep.mubr.f32.mxu0 %v5183
      %v5185 = vand.u32 %v264, 4294901760
      %5186 = vmatmul.mubr.f32.gmra.mrb[0].mxu0 %v5185
      %v5187 = vpop.f32.mrb[0].mxu0
      %v5188 = vadd.f32 %v4707, %v5187
      %v5189 = vpop.f32.mrb[0].mxu0
      %v5190 = vadd.f32 %v4709, %v5189
      %5191 = vdwg.mxu0
      %v5192 = vand.u32 %v395, 4294901760
      %v5193 = vsub.f32 %v395, %v5192
      %5194 = vmatprep.subr.mxu0 %v5193
      %v5195 = vand.u32 %v394, 4294901760
      %v5196 = vsub.f32 %v394, %v5195
      %5197 = vmatpush1.msra.mxu0 %v5196
      %v5198 = vand.u32 %v397, 4294901760
      %v5199 = vsub.f32 %v397, %v5198
      %5200 = vmatprep.subr.mxu0 %v5199
      %v5201 = vand.u32 %v396, 4294901760
      %v5202 = vsub.f32 %v396, %v5201
      %5203 = vmatpush1.msra.mxu0 %v5202
      %v5204 = vand.u32 %v399, 4294901760
      %v5205 = vsub.f32 %v399, %v5204
      %5206 = vmatprep.subr.mxu0 %v5205
      %v5207 = vand.u32 %v398, 4294901760
      %v5208 = vsub.f32 %v398, %v5207
      %5209 = vmatpush1.msra.mxu0 %v5208
      %v5210 = vand.u32 %v401, 4294901760
      %v5211 = vsub.f32 %v401, %v5210
      %5212 = vmatprep.subr.mxu0 %v5211
      %v5213 = vand.u32 %v400, 4294901760
      %v5214 = vsub.f32 %v400, %v5213
      %5215 = vmatpush1.msra.mxu0 %v5214
      %v5216 = vand.u32 %v403, 4294901760
      %v5217 = vsub.f32 %v403, %v5216
      %5218 = vmatprep.subr.mxu0 %v5217
      %v5219 = vand.u32 %v402, 4294901760
      %v5220 = vsub.f32 %v402, %v5219
      %5221 = vmatpush1.msra.mxu0 %v5220
      %v5222 = vand.u32 %v405, 4294901760
      %v5223 = vsub.f32 %v405, %v5222
      %5224 = vmatprep.subr.mxu0 %v5223
      %v5225 = vand.u32 %v404, 4294901760
      %v5226 = vsub.f32 %v404, %v5225
      %5227 = vmatpush1.msra.mxu0 %v5226
      %v5228 = vand.u32 %v407, 4294901760
      %v5229 = vsub.f32 %v407, %v5228
      %5230 = vmatprep.subr.mxu0 %v5229
      %v5231 = vand.u32 %v406, 4294901760
      %v5232 = vsub.f32 %v406, %v5231
      %5233 = vmatpush1.msra.mxu0 %v5232
      %v5234 = vand.u32 %v409, 4294901760
      %v5235 = vsub.f32 %v409, %v5234
      %5236 = vmatprep.subr.mxu0 %v5235
      %v5237 = vand.u32 %v408, 4294901760
      %v5238 = vsub.f32 %v408, %v5237
      %5239 = vmatpush1.msra.mxu0 %v5238
      %v5240 = vand.u32 %v411, 4294901760
      %v5241 = vsub.f32 %v411, %v5240
      %5242 = vmatprep.subr.mxu0 %v5241
      %v5243 = vand.u32 %v410, 4294901760
      %v5244 = vsub.f32 %v410, %v5243
      %5245 = vmatpush1.msra.mxu0 %v5244
      %v5246 = vand.u32 %v413, 4294901760
      %v5247 = vsub.f32 %v413, %v5246
      %5248 = vmatprep.subr.mxu0 %v5247
      %v5249 = vand.u32 %v412, 4294901760
      %v5250 = vsub.f32 %v412, %v5249
      %5251 = vmatpush1.msra.mxu0 %v5250
      %v5252 = vand.u32 %v415, 4294901760
      %v5253 = vsub.f32 %v415, %v5252
      %5254 = vmatprep.subr.mxu0 %v5253
      %v5255 = vand.u32 %v414, 4294901760
      %v5256 = vsub.f32 %v414, %v5255
      %5257 = vmatpush1.msra.mxu0 %v5256
      %v5258 = vand.u32 %v417, 4294901760
      %v5259 = vsub.f32 %v417, %v5258
      %5260 = vmatprep.subr.mxu0 %v5259
      %v5261 = vand.u32 %v416, 4294901760
      %v5262 = vsub.f32 %v416, %v5261
      %5263 = vmatpush1.msra.mxu0 %v5262
      %v5264 = vand.u32 %v419, 4294901760
      %v5265 = vsub.f32 %v419, %v5264
      %5266 = vmatprep.subr.mxu0 %v5265
      %v5267 = vand.u32 %v418, 4294901760
      %v5268 = vsub.f32 %v418, %v5267
      %5269 = vmatpush1.msra.mxu0 %v5268
      %v5270 = vand.u32 %v421, 4294901760
      %v5271 = vsub.f32 %v421, %v5270
      %5272 = vmatprep.subr.mxu0 %v5271
      %v5273 = vand.u32 %v420, 4294901760
      %v5274 = vsub.f32 %v420, %v5273
      %5275 = vmatpush1.msra.mxu0 %v5274
      %v5276 = vand.u32 %v423, 4294901760
      %v5277 = vsub.f32 %v423, %v5276
      %5278 = vmatprep.subr.mxu0 %v5277
      %v5279 = vand.u32 %v422, 4294901760
      %v5280 = vsub.f32 %v422, %v5279
      %5281 = vmatpush1.msra.mxu0 %v5280
      %v5282 = vand.u32 %v425, 4294901760
      %v5283 = vsub.f32 %v425, %v5282
      %5284 = vmatprep.subr.mxu0 %v5283
      %v5285 = vand.u32 %v424, 4294901760
      %v5286 = vsub.f32 %v424, %v5285
      %5287 = vmatpush1.msra.mxu0 %v5286
      %v5288 = vand.u32 %v427, 4294901760
      %v5289 = vsub.f32 %v427, %v5288
      %5290 = vmatprep.subr.mxu0 %v5289
      %v5291 = vand.u32 %v426, 4294901760
      %v5292 = vsub.f32 %v426, %v5291
      %5293 = vmatpush1.msra.mxu0 %v5292
      %v5294 = vand.u32 %v429, 4294901760
      %v5295 = vsub.f32 %v429, %v5294
      %5296 = vmatprep.subr.mxu0 %v5295
      %v5297 = vand.u32 %v428, 4294901760
      %v5298 = vsub.f32 %v428, %v5297
      %5299 = vmatpush1.msra.mxu0 %v5298
      %v5300 = vand.u32 %v431, 4294901760
      %v5301 = vsub.f32 %v431, %v5300
      %5302 = vmatprep.subr.mxu0 %v5301
      %v5303 = vand.u32 %v430, 4294901760
      %v5304 = vsub.f32 %v430, %v5303
      %5305 = vmatpush1.msra.mxu0 %v5304
      %v5306 = vand.u32 %v433, 4294901760
      %v5307 = vsub.f32 %v433, %v5306
      %5308 = vmatprep.subr.mxu0 %v5307
      %v5309 = vand.u32 %v432, 4294901760
      %v5310 = vsub.f32 %v432, %v5309
      %5311 = vmatpush1.msra.mxu0 %v5310
      %v5312 = vand.u32 %v435, 4294901760
      %v5313 = vsub.f32 %v435, %v5312
      %5314 = vmatprep.subr.mxu0 %v5313
      %v5315 = vand.u32 %v434, 4294901760
      %v5316 = vsub.f32 %v434, %v5315
      %5317 = vmatpush1.msra.mxu0 %v5316
      %v5318 = vand.u32 %v437, 4294901760
      %v5319 = vsub.f32 %v437, %v5318
      %5320 = vmatprep.subr.mxu0 %v5319
      %v5321 = vand.u32 %v436, 4294901760
      %v5322 = vsub.f32 %v436, %v5321
      %5323 = vmatpush1.msra.mxu0 %v5322
      %v5324 = vand.u32 %v439, 4294901760
      %v5325 = vsub.f32 %v439, %v5324
      %5326 = vmatprep.subr.mxu0 %v5325
      %v5327 = vand.u32 %v438, 4294901760
      %v5328 = vsub.f32 %v438, %v5327
      %5329 = vmatpush1.msra.mxu0 %v5328
      %v5330 = vand.u32 %v441, 4294901760
      %v5331 = vsub.f32 %v441, %v5330
      %5332 = vmatprep.subr.mxu0 %v5331
      %v5333 = vand.u32 %v440, 4294901760
      %v5334 = vsub.f32 %v440, %v5333
      %5335 = vmatpush1.msra.mxu0 %v5334
      %v5336 = vand.u32 %v443, 4294901760
      %v5337 = vsub.f32 %v443, %v5336
      %5338 = vmatprep.subr.mxu0 %v5337
      %v5339 = vand.u32 %v442, 4294901760
      %v5340 = vsub.f32 %v442, %v5339
      %5341 = vmatpush1.msra.mxu0 %v5340
      %v5342 = vand.u32 %v445, 4294901760
      %v5343 = vsub.f32 %v445, %v5342
      %5344 = vmatprep.subr.mxu0 %v5343
      %v5345 = vand.u32 %v444, 4294901760
      %v5346 = vsub.f32 %v444, %v5345
      %5347 = vmatpush1.msra.mxu0 %v5346
      %v5348 = vand.u32 %v447, 4294901760
      %v5349 = vsub.f32 %v447, %v5348
      %5350 = vmatprep.subr.mxu0 %v5349
      %v5351 = vand.u32 %v446, 4294901760
      %v5352 = vsub.f32 %v446, %v5351
      %5353 = vmatpush1.msra.mxu0 %v5352
      %v5354 = vand.u32 %v449, 4294901760
      %v5355 = vsub.f32 %v449, %v5354
      %5356 = vmatprep.subr.mxu0 %v5355
      %v5357 = vand.u32 %v448, 4294901760
      %v5358 = vsub.f32 %v448, %v5357
      %5359 = vmatpush1.msra.mxu0 %v5358
      %v5360 = vand.u32 %v451, 4294901760
      %v5361 = vsub.f32 %v451, %v5360
      %5362 = vmatprep.subr.mxu0 %v5361
      %v5363 = vand.u32 %v450, 4294901760
      %v5364 = vsub.f32 %v450, %v5363
      %5365 = vmatpush1.msra.mxu0 %v5364
      %v5366 = vand.u32 %v453, 4294901760
      %v5367 = vsub.f32 %v453, %v5366
      %5368 = vmatprep.subr.mxu0 %v5367
      %v5369 = vand.u32 %v452, 4294901760
      %v5370 = vsub.f32 %v452, %v5369
      %5371 = vmatpush1.msra.mxu0 %v5370
      %v5372 = vand.u32 %v455, 4294901760
      %v5373 = vsub.f32 %v455, %v5372
      %5374 = vmatprep.subr.mxu0 %v5373
      %v5375 = vand.u32 %v454, 4294901760
      %v5376 = vsub.f32 %v454, %v5375
      %5377 = vmatpush1.msra.mxu0 %v5376
      %v5378 = vand.u32 %v457, 4294901760
      %v5379 = vsub.f32 %v457, %v5378
      %5380 = vmatprep.subr.mxu0 %v5379
      %v5381 = vand.u32 %v456, 4294901760
      %v5382 = vsub.f32 %v456, %v5381
      %5383 = vmatpush1.msra.mxu0 %v5382
      %v5384 = vand.u32 %v199, 4294901760
      %v5385 = vsub.f32 %v199, %v5384
      %5386 = vmatprep.mubr.f32.mxu0 %v5385
      %v5387 = vand.u32 %v198, 4294901760
      %v5388 = vsub.f32 %v198, %v5387
      %5389 = vmatmul.mubr.f32.gmra.mrb[0].mxu0 %v5388
      %v5390 = vpop.f32.mrb[0].mxu0
      %v5391 = vadd.f32 %v5100, %v5390
      %v5392 = vpop.f32.mrb[0].mxu0
      %v5393 = vadd.f32 %v5102, %v5392
      %v5394 = vand.u32 %v205, 4294901760
      %v5395 = vsub.f32 %v205, %v5394
      %5396 = vmatprep.mubr.f32.mxu0 %v5395
      %v5397 = vand.u32 %v204, 4294901760
      %v5398 = vsub.f32 %v204, %v5397
      %5399 = vmatmul.mubr.f32.gmra.mrb[0].mxu0 %v5398
      %v5400 = vpop.f32.mrb[0].mxu0
      %v5401 = vadd.f32 %v5108, %v5400
      %v5402 = vpop.f32.mrb[0].mxu0
      %v5403 = vadd.f32 %v5110, %v5402
      %v5404 = vand.u32 %v211, 4294901760
      %v5405 = vsub.f32 %v211, %v5404
      %5406 = vmatprep.mubr.f32.mxu0 %v5405
      %v5407 = vand.u32 %v210, 4294901760
      %v5408 = vsub.f32 %v210, %v5407
      %5409 = vmatmul.mubr.f32.gmra.mrb[0].mxu0 %v5408
      %v5410 = vpop.f32.mrb[0].mxu0
      %v5411 = vadd.f32 %v5116, %v5410
      %v5412 = vpop.f32.mrb[0].mxu0
      %v5413 = vadd.f32 %v5118, %v5412
      %v5414 = vand.u32 %v217, 4294901760
      %v5415 = vsub.f32 %v217, %v5414
      %5416 = vmatprep.mubr.f32.mxu0 %v5415
      %v5417 = vand.u32 %v216, 4294901760
      %v5418 = vsub.f32 %v216, %v5417
      %5419 = vmatmul.mubr.f32.gmra.mrb[0].mxu0 %v5418
      %v5420 = vpop.f32.mrb[0].mxu0
      %v5421 = vadd.f32 %v5124, %v5420
      %v5422 = vpop.f32.mrb[0].mxu0
      %v5423 = vadd.f32 %v5126, %v5422
      %v5424 = vand.u32 %v223, 4294901760
      %v5425 = vsub.f32 %v223, %v5424
      %5426 = vmatprep.mubr.f32.mxu0 %v5425
      %v5427 = vand.u32 %v222, 4294901760
      %v5428 = vsub.f32 %v222, %v5427
      %5429 = vmatmul.mubr.f32.gmra.mrb[0].mxu0 %v5428
      %v5430 = vpop.f32.mrb[0].mxu0
      %v5431 = vadd.f32 %v5132, %v5430
      %v5432 = vpop.f32.mrb[0].mxu0
      %v5433 = vadd.f32 %v5134, %v5432
      %v5434 = vand.u32 %v229, 4294901760
      %v5435 = vsub.f32 %v229, %v5434
      %5436 = vmatprep.mubr.f32.mxu0 %v5435
      %v5437 = vand.u32 %v228, 4294901760
      %v5438 = vsub.f32 %v228, %v5437
      %5439 = vmatmul.mubr.f32.gmra.mrb[0].mxu0 %v5438
      %v5440 = vpop.f32.mrb[0].mxu0
      %v5441 = vadd.f32 %v5140, %v5440
      %v5442 = vpop.f32.mrb[0].mxu0
      %v5443 = vadd.f32 %v5142, %v5442
      %v5444 = vand.u32 %v235, 4294901760
      %v5445 = vsub.f32 %v235, %v5444
      %5446 = vmatprep.mubr.f32.mxu0 %v5445
      %v5447 = vand.u32 %v234, 4294901760
      %v5448 = vsub.f32 %v234, %v5447
      %5449 = vmatmul.mubr.f32.gmra.mrb[0].mxu0 %v5448
      %v5450 = vpop.f32.mrb[0].mxu0
      %v5451 = vadd.f32 %v5148, %v5450
      %v5452 = vpop.f32.mrb[0].mxu0
      %v5453 = vadd.f32 %v5150, %v5452
      %v5454 = vand.u32 %v241, 4294901760
      %v5455 = vsub.f32 %v241, %v5454
      %5456 = vmatprep.mubr.f32.mxu0 %v5455
      %v5457 = vand.u32 %v240, 4294901760
      %v5458 = vsub.f32 %v240, %v5457
      %5459 = vmatmul.mubr.f32.gmra.mrb[0].mxu0 %v5458
      %v5460 = vpop.f32.mrb[0].mxu0
      %v5461 = vadd.f32 %v5156, %v5460
      %v5462 = vpop.f32.mrb[0].mxu0
      %v5463 = vadd.f32 %v5158, %v5462
      %v5464 = vand.u32 %v247, 4294901760
      %v5465 = vsub.f32 %v247, %v5464
      %5466 = vmatprep.mubr.f32.mxu0 %v5465
      %v5467 = vand.u32 %v246, 4294901760
      %v5468 = vsub.f32 %v246, %v5467
      %5469 = vmatmul.mubr.f32.gmra.mrb[0].mxu0 %v5468
      %v5470 = vpop.f32.mrb[0].mxu0
      %v5471 = vadd.f32 %v5164, %v5470
      %v5472 = vpop.f32.mrb[0].mxu0
      %v5473 = vadd.f32 %v5166, %v5472
      %v5474 = vand.u32 %v253, 4294901760
      %v5475 = vsub.f32 %v253, %v5474
      %5476 = vmatprep.mubr.f32.mxu0 %v5475
      %v5477 = vand.u32 %v252, 4294901760
      %v5478 = vsub.f32 %v252, %v5477
      %5479 = vmatmul.mubr.f32.gmra.mrb[0].mxu0 %v5478
      %v5480 = vpop.f32.mrb[0].mxu0
      %v5481 = vadd.f32 %v5172, %v5480
      %v5482 = vpop.f32.mrb[0].mxu0
      %v5483 = vadd.f32 %v5174, %v5482
      %v5484 = vand.u32 %v259, 4294901760
      %v5485 = vsub.f32 %v259, %v5484
      %5486 = vmatprep.mubr.f32.mxu0 %v5485
      %v5487 = vand.u32 %v258, 4294901760
      %v5488 = vsub.f32 %v258, %v5487
      %5489 = vmatmul.mubr.f32.gmra.mrb[0].mxu0 %v5488
      %v5490 = vpop.f32.mrb[0].mxu0
      %v5491 = vadd.f32 %v5180, %v5490
      %v5492 = vpop.f32.mrb[0].mxu0
      %v5493 = vadd.f32 %v5182, %v5492
      %v5494 = vand.u32 %v265, 4294901760
      %v5495 = vsub.f32 %v265, %v5494
      %5496 = vmatprep.mubr.f32.mxu0 %v5495
      %v5497 = vand.u32 %v264, 4294901760
      %v5498 = vsub.f32 %v264, %v5497
      %5499 = vmatmul.mubr.f32.gmra.mrb[0].mxu0 %v5498
      %v5500 = vpop.f32.mrb[0].mxu0
      %v5501 = vadd.f32 %v5188, %v5500
      %v5502 = vpop.f32.mrb[0].mxu0
      %v5503 = vadd.f32 %v5190, %v5502
      %5504 = vdwg.mxu0
      %v5505 = vand.u32 %v395, 4294901760
      %5506 = vmatprep.subr.mxu0 %v5505
      %v5507 = vand.u32 %v394, 4294901760
      %5508 = vmatpush1.msra.mxu0 %v5507
      %v5509 = vand.u32 %v397, 4294901760
      %5510 = vmatprep.subr.mxu0 %v5509
      %v5511 = vand.u32 %v396, 4294901760
      %5512 = vmatpush1.msra.mxu0 %v5511
      %v5513 = vand.u32 %v399, 4294901760
      %5514 = vmatprep.subr.mxu0 %v5513
      %v5515 = vand.u32 %v398, 4294901760
      %5516 = vmatpush1.msra.mxu0 %v5515
      %v5517 = vand.u32 %v401, 4294901760
      %5518 = vmatprep.subr.mxu0 %v5517
      %v5519 = vand.u32 %v400, 4294901760
      %5520 = vmatpush1.msra.mxu0 %v5519
      %v5521 = vand.u32 %v403, 4294901760
      %5522 = vmatprep.subr.mxu0 %v5521
      %v5523 = vand.u32 %v402, 4294901760
      %5524 = vmatpush1.msra.mxu0 %v5523
      %v5525 = vand.u32 %v405, 4294901760
      %5526 = vmatprep.subr.mxu0 %v5525
      %v5527 = vand.u32 %v404, 4294901760
      %5528 = vmatpush1.msra.mxu0 %v5527
      %v5529 = vand.u32 %v407, 4294901760
      %5530 = vmatprep.subr.mxu0 %v5529
      %v5531 = vand.u32 %v406, 4294901760
      %5532 = vmatpush1.msra.mxu0 %v5531
      %v5533 = vand.u32 %v409, 4294901760
      %5534 = vmatprep.subr.mxu0 %v5533
      %v5535 = vand.u32 %v408, 4294901760
      %5536 = vmatpush1.msra.mxu0 %v5535
      %v5537 = vand.u32 %v411, 4294901760
      %5538 = vmatprep.subr.mxu0 %v5537
      %v5539 = vand.u32 %v410, 4294901760
      %5540 = vmatpush1.msra.mxu0 %v5539
      %v5541 = vand.u32 %v413, 4294901760
      %5542 = vmatprep.subr.mxu0 %v5541
      %v5543 = vand.u32 %v412, 4294901760
      %5544 = vmatpush1.msra.mxu0 %v5543
      %v5545 = vand.u32 %v415, 4294901760
      %5546 = vmatprep.subr.mxu0 %v5545
      %v5547 = vand.u32 %v414, 4294901760
      %5548 = vmatpush1.msra.mxu0 %v5547
      %v5549 = vand.u32 %v417, 4294901760
      %5550 = vmatprep.subr.mxu0 %v5549
      %v5551 = vand.u32 %v416, 4294901760
      %5552 = vmatpush1.msra.mxu0 %v5551
      %v5553 = vand.u32 %v419, 4294901760
      %5554 = vmatprep.subr.mxu0 %v5553
      %v5555 = vand.u32 %v418, 4294901760
      %5556 = vmatpush1.msra.mxu0 %v5555
      %v5557 = vand.u32 %v421, 4294901760
      %5558 = vmatprep.subr.mxu0 %v5557
      %v5559 = vand.u32 %v420, 4294901760
      %5560 = vmatpush1.msra.mxu0 %v5559
      %v5561 = vand.u32 %v423, 4294901760
      %5562 = vmatprep.subr.mxu0 %v5561
      %v5563 = vand.u32 %v422, 4294901760
      %5564 = vmatpush1.msra.mxu0 %v5563
      %v5565 = vand.u32 %v425, 4294901760
      %5566 = vmatprep.subr.mxu0 %v5565
      %v5567 = vand.u32 %v424, 4294901760
      %5568 = vmatpush1.msra.mxu0 %v5567
      %v5569 = vand.u32 %v427, 4294901760
      %5570 = vmatprep.subr.mxu0 %v5569
      %v5571 = vand.u32 %v426, 4294901760
      %5572 = vmatpush1.msra.mxu0 %v5571
      %v5573 = vand.u32 %v429, 4294901760
      %5574 = vmatprep.subr.mxu0 %v5573
      %v5575 = vand.u32 %v428, 4294901760
      %5576 = vmatpush1.msra.mxu0 %v5575
      %v5577 = vand.u32 %v431, 4294901760
      %5578 = vmatprep.subr.mxu0 %v5577
      %v5579 = vand.u32 %v430, 4294901760
      %5580 = vmatpush1.msra.mxu0 %v5579
      %v5581 = vand.u32 %v433, 4294901760
      %5582 = vmatprep.subr.mxu0 %v5581
      %v5583 = vand.u32 %v432, 4294901760
      %5584 = vmatpush1.msra.mxu0 %v5583
      %v5585 = vand.u32 %v435, 4294901760
      %5586 = vmatprep.subr.mxu0 %v5585
      %v5587 = vand.u32 %v434, 4294901760
      %5588 = vmatpush1.msra.mxu0 %v5587
      %v5589 = vand.u32 %v437, 4294901760
      %5590 = vmatprep.subr.mxu0 %v5589
      %v5591 = vand.u32 %v436, 4294901760
      %5592 = vmatpush1.msra.mxu0 %v5591
      %v5593 = vand.u32 %v439, 4294901760
      %5594 = vmatprep.subr.mxu0 %v5593
      %v5595 = vand.u32 %v438, 4294901760
      %5596 = vmatpush1.msra.mxu0 %v5595
      %v5597 = vand.u32 %v441, 4294901760
      %5598 = vmatprep.subr.mxu0 %v5597
      %v5599 = vand.u32 %v440, 4294901760
      %5600 = vmatpush1.msra.mxu0 %v5599
      %v5601 = vand.u32 %v443, 4294901760
      %5602 = vmatprep.subr.mxu0 %v5601
      %v5603 = vand.u32 %v442, 4294901760
      %5604 = vmatpush1.msra.mxu0 %v5603
      %v5605 = vand.u32 %v445, 4294901760
      %5606 = vmatprep.subr.mxu0 %v5605
      %v5607 = vand.u32 %v444, 4294901760
      %5608 = vmatpush1.msra.mxu0 %v5607
      %v5609 = vand.u32 %v447, 4294901760
      %5610 = vmatprep.subr.mxu0 %v5609
      %v5611 = vand.u32 %v446, 4294901760
      %5612 = vmatpush1.msra.mxu0 %v5611
      %v5613 = vand.u32 %v449, 4294901760
      %5614 = vmatprep.subr.mxu0 %v5613
      %v5615 = vand.u32 %v448, 4294901760
      %5616 = vmatpush1.msra.mxu0 %v5615
      %v5617 = vand.u32 %v451, 4294901760
      %5618 = vmatprep.subr.mxu0 %v5617
      %v5619 = vand.u32 %v450, 4294901760
      %5620 = vmatpush1.msra.mxu0 %v5619
      %v5621 = vand.u32 %v453, 4294901760
      %5622 = vmatprep.subr.mxu0 %v5621
      %v5623 = vand.u32 %v452, 4294901760
      %5624 = vmatpush1.msra.mxu0 %v5623
      %v5625 = vand.u32 %v455, 4294901760
      %5626 = vmatprep.subr.mxu0 %v5625
      %v5627 = vand.u32 %v454, 4294901760
      %5628 = vmatpush1.msra.mxu0 %v5627
      %v5629 = vand.u32 %v457, 4294901760
      %5630 = vmatprep.subr.mxu0 %v5629
      %v5631 = vand.u32 %v456, 4294901760
      %5632 = vmatpush1.msra.mxu0 %v5631
      %v5633 = vand.u32 %v199, 4294901760
      %v5634 = vsub.f32 %v199, %v5633
      %v5635 = vand.u32 %v5634, 4294901760
      %5636 = vmatprep.mubr.f32.mxu0 %v5635
      %v5637 = vand.u32 %v198, 4294901760
      %v5638 = vsub.f32 %v198, %v5637
      %v5639 = vand.u32 %v5638, 4294901760
      %5640 = vmatmul.mubr.f32.gmra.mrb[0].mxu0 %v5639
      %v5641 = vpop.f32.mrb[0].mxu0
      %v5642 = vadd.f32 %v5391, %v5641
      %v5643 = vpop.f32.mrb[0].mxu0
      %v5644 = vadd.f32 %v5393, %v5643
      %v5645 = vand.u32 %v205, 4294901760
      %v5646 = vsub.f32 %v205, %v5645
      %v5647 = vand.u32 %v5646, 4294901760
      %5648 = vmatprep.mubr.f32.mxu0 %v5647
      %v5649 = vand.u32 %v204, 4294901760
      %v5650 = vsub.f32 %v204, %v5649
      %v5651 = vand.u32 %v5650, 4294901760
      %5652 = vmatmul.mubr.f32.gmra.mrb[0].mxu0 %v5651
      %v5653 = vpop.f32.mrb[0].mxu0
      %v5654 = vadd.f32 %v5401, %v5653
      %v5655 = vpop.f32.mrb[0].mxu0
      %v5656 = vadd.f32 %v5403, %v5655
      %v5657 = vand.u32 %v211, 4294901760
      %v5658 = vsub.f32 %v211, %v5657
      %v5659 = vand.u32 %v5658, 4294901760
      %5660 = vmatprep.mubr.f32.mxu0 %v5659
      %v5661 = vand.u32 %v210, 4294901760
      %v5662 = vsub.f32 %v210, %v5661
      %v5663 = vand.u32 %v5662, 4294901760
      %5664 = vmatmul.mubr.f32.gmra.mrb[0].mxu0 %v5663
      %v5665 = vpop.f32.mrb[0].mxu0
      %v5666 = vadd.f32 %v5411, %v5665
      %v5667 = vpop.f32.mrb[0].mxu0
      %v5668 = vadd.f32 %v5413, %v5667
      %v5669 = vand.u32 %v217, 4294901760
      %v5670 = vsub.f32 %v217, %v5669
      %v5671 = vand.u32 %v5670, 4294901760
      %5672 = vmatprep.mubr.f32.mxu0 %v5671
      %v5673 = vand.u32 %v216, 4294901760
      %v5674 = vsub.f32 %v216, %v5673
      %v5675 = vand.u32 %v5674, 4294901760
      %5676 = vmatmul.mubr.f32.gmra.mrb[0].mxu0 %v5675
      %v5677 = vpop.f32.mrb[0].mxu0
      %v5678 = vadd.f32 %v5421, %v5677
      %v5679 = vpop.f32.mrb[0].mxu0
      %v5680 = vadd.f32 %v5423, %v5679
      %v5681 = vand.u32 %v223, 4294901760
      %v5682 = vsub.f32 %v223, %v5681
      %v5683 = vand.u32 %v5682, 4294901760
      %5684 = vmatprep.mubr.f32.mxu0 %v5683
      %v5685 = vand.u32 %v222, 4294901760
      %v5686 = vsub.f32 %v222, %v5685
      %v5687 = vand.u32 %v5686, 4294901760
      %5688 = vmatmul.mubr.f32.gmra.mrb[0].mxu0 %v5687
      %v5689 = vpop.f32.mrb[0].mxu0
      %v5690 = vadd.f32 %v5431, %v5689
      %v5691 = vpop.f32.mrb[0].mxu0
      %v5692 = vadd.f32 %v5433, %v5691
      %v5693 = vand.u32 %v229, 4294901760
      %v5694 = vsub.f32 %v229, %v5693
      %v5695 = vand.u32 %v5694, 4294901760
      %5696 = vmatprep.mubr.f32.mxu0 %v5695
      %v5697 = vand.u32 %v228, 4294901760
      %v5698 = vsub.f32 %v228, %v5697
      %v5699 = vand.u32 %v5698, 4294901760
      %5700 = vmatmul.mubr.f32.gmra.mrb[0].mxu0 %v5699
      %v5701 = vpop.f32.mrb[0].mxu0
      %v5702 = vadd.f32 %v5441, %v5701
      %v5703 = vpop.f32.mrb[0].mxu0
      %v5704 = vadd.f32 %v5443, %v5703
      %v5705 = vand.u32 %v235, 4294901760
      %v5706 = vsub.f32 %v235, %v5705
      %v5707 = vand.u32 %v5706, 4294901760
      %5708 = vmatprep.mubr.f32.mxu0 %v5707
      %v5709 = vand.u32 %v234, 4294901760
      %v5710 = vsub.f32 %v234, %v5709
      %v5711 = vand.u32 %v5710, 4294901760
      %5712 = vmatmul.mubr.f32.gmra.mrb[0].mxu0 %v5711
      %v5713 = vpop.f32.mrb[0].mxu0
      %v5714 = vadd.f32 %v5451, %v5713
      %v5715 = vpop.f32.mrb[0].mxu0
      %v5716 = vadd.f32 %v5453, %v5715
      %v5717 = vand.u32 %v241, 4294901760
      %v5718 = vsub.f32 %v241, %v5717
      %v5719 = vand.u32 %v5718, 4294901760
      %5720 = vmatprep.mubr.f32.mxu0 %v5719
      %v5721 = vand.u32 %v240, 4294901760
      %v5722 = vsub.f32 %v240, %v5721
      %v5723 = vand.u32 %v5722, 4294901760
      %5724 = vmatmul.mubr.f32.gmra.mrb[0].mxu0 %v5723
      %v5725 = vpop.f32.mrb[0].mxu0
      %v5726 = vadd.f32 %v5461, %v5725
      %v5727 = vpop.f32.mrb[0].mxu0
      %v5728 = vadd.f32 %v5463, %v5727
      %v5729 = vand.u32 %v247, 4294901760
      %v5730 = vsub.f32 %v247, %v5729
      %v5731 = vand.u32 %v5730, 4294901760
      %5732 = vmatprep.mubr.f32.mxu0 %v5731
      %v5733 = vand.u32 %v246, 4294901760
      %v5734 = vsub.f32 %v246, %v5733
      %v5735 = vand.u32 %v5734, 4294901760
      %5736 = vmatmul.mubr.f32.gmra.mrb[0].mxu0 %v5735
      %v5737 = vpop.f32.mrb[0].mxu0
      %v5738 = vadd.f32 %v5471, %v5737
      %v5739 = vpop.f32.mrb[0].mxu0
      %v5740 = vadd.f32 %v5473, %v5739
      %v5741 = vand.u32 %v253, 4294901760
      %v5742 = vsub.f32 %v253, %v5741
      %v5743 = vand.u32 %v5742, 4294901760
      %5744 = vmatprep.mubr.f32.mxu0 %v5743
      %v5745 = vand.u32 %v252, 4294901760
      %v5746 = vsub.f32 %v252, %v5745
      %v5747 = vand.u32 %v5746, 4294901760
      %5748 = vmatmul.mubr.f32.gmra.mrb[0].mxu0 %v5747
      %v5749 = vpop.f32.mrb[0].mxu0
      %v5750 = vadd.f32 %v5481, %v5749
      %v5751 = vpop.f32.mrb[0].mxu0
      %v5752 = vadd.f32 %v5483, %v5751
      %v5753 = vand.u32 %v259, 4294901760
      %v5754 = vsub.f32 %v259, %v5753
      %v5755 = vand.u32 %v5754, 4294901760
      %5756 = vmatprep.mubr.f32.mxu0 %v5755
      %v5757 = vand.u32 %v258, 4294901760
      %v5758 = vsub.f32 %v258, %v5757
      %v5759 = vand.u32 %v5758, 4294901760
      %5760 = vmatmul.mubr.f32.gmra.mrb[0].mxu0 %v5759
      %v5761 = vpop.f32.mrb[0].mxu0
      %v5762 = vadd.f32 %v5491, %v5761
      %v5763 = vpop.f32.mrb[0].mxu0
      %v5764 = vadd.f32 %v5493, %v5763
      %v5765 = vand.u32 %v265, 4294901760
      %v5766 = vsub.f32 %v265, %v5765
      %v5767 = vand.u32 %v5766, 4294901760
      %5768 = vmatprep.mubr.f32.mxu0 %v5767
      %v5769 = vand.u32 %v264, 4294901760
      %v5770 = vsub.f32 %v264, %v5769
      %v5771 = vand.u32 %v5770, 4294901760
      %5772 = vmatmul.mubr.f32.gmra.mrb[0].mxu0 %v5771
      %v5773 = vpop.f32.mrb[0].mxu0
      %v5774 = vadd.f32 %v5501, %v5773
      %v5775 = vpop.f32.mrb[0].mxu0
      %v5776 = vadd.f32 %v5503, %v5775
      %5777 = vdwg.mxu0
      %v5778 = vand.u32 %v395, 4294901760
      %v5779 = vsub.f32 %v395, %v5778
      %v5780 = vand.u32 %v5779, 4294901760
      %5781 = vmatprep.subr.mxu0 %v5780
      %v5782 = vand.u32 %v394, 4294901760
      %v5783 = vsub.f32 %v394, %v5782
      %v5784 = vand.u32 %v5783, 4294901760
      %5785 = vmatpush1.msra.mxu0 %v5784
      %v5786 = vand.u32 %v397, 4294901760
      %v5787 = vsub.f32 %v397, %v5786
      %v5788 = vand.u32 %v5787, 4294901760
      %5789 = vmatprep.subr.mxu0 %v5788
      %v5790 = vand.u32 %v396, 4294901760
      %v5791 = vsub.f32 %v396, %v5790
      %v5792 = vand.u32 %v5791, 4294901760
      %5793 = vmatpush1.msra.mxu0 %v5792
      %v5794 = vand.u32 %v399, 4294901760
      %v5795 = vsub.f32 %v399, %v5794
      %v5796 = vand.u32 %v5795, 4294901760
      %5797 = vmatprep.subr.mxu0 %v5796
      %v5798 = vand.u32 %v398, 4294901760
      %v5799 = vsub.f32 %v398, %v5798
      %v5800 = vand.u32 %v5799, 4294901760
      %5801 = vmatpush1.msra.mxu0 %v5800
      %v5802 = vand.u32 %v401, 4294901760
      %v5803 = vsub.f32 %v401, %v5802
      %v5804 = vand.u32 %v5803, 4294901760
      %5805 = vmatprep.subr.mxu0 %v5804
      %v5806 = vand.u32 %v400, 4294901760
      %v5807 = vsub.f32 %v400, %v5806
      %v5808 = vand.u32 %v5807, 4294901760
      %5809 = vmatpush1.msra.mxu0 %v5808
      %v5810 = vand.u32 %v403, 4294901760
      %v5811 = vsub.f32 %v403, %v5810
      %v5812 = vand.u32 %v5811, 4294901760
      %5813 = vmatprep.subr.mxu0 %v5812
      %v5814 = vand.u32 %v402, 4294901760
      %v5815 = vsub.f32 %v402, %v5814
      %v5816 = vand.u32 %v5815, 4294901760
      %5817 = vmatpush1.msra.mxu0 %v5816
      %v5818 = vand.u32 %v405, 4294901760
      %v5819 = vsub.f32 %v405, %v5818
      %v5820 = vand.u32 %v5819, 4294901760
      %5821 = vmatprep.subr.mxu0 %v5820
      %v5822 = vand.u32 %v404, 4294901760
      %v5823 = vsub.f32 %v404, %v5822
      %v5824 = vand.u32 %v5823, 4294901760
      %5825 = vmatpush1.msra.mxu0 %v5824
      %v5826 = vand.u32 %v407, 4294901760
      %v5827 = vsub.f32 %v407, %v5826
      %v5828 = vand.u32 %v5827, 4294901760
      %5829 = vmatprep.subr.mxu0 %v5828
      %v5830 = vand.u32 %v406, 4294901760
      %v5831 = vsub.f32 %v406, %v5830
      %v5832 = vand.u32 %v5831, 4294901760
      %5833 = vmatpush1.msra.mxu0 %v5832
      %v5834 = vand.u32 %v409, 4294901760
      %v5835 = vsub.f32 %v409, %v5834
      %v5836 = vand.u32 %v5835, 4294901760
      %5837 = vmatprep.subr.mxu0 %v5836
      %v5838 = vand.u32 %v408, 4294901760
      %v5839 = vsub.f32 %v408, %v5838
      %v5840 = vand.u32 %v5839, 4294901760
      %5841 = vmatpush1.msra.mxu0 %v5840
      %v5842 = vand.u32 %v411, 4294901760
      %v5843 = vsub.f32 %v411, %v5842
      %v5844 = vand.u32 %v5843, 4294901760
      %5845 = vmatprep.subr.mxu0 %v5844
      %v5846 = vand.u32 %v410, 4294901760
      %v5847 = vsub.f32 %v410, %v5846
      %v5848 = vand.u32 %v5847, 4294901760
      %5849 = vmatpush1.msra.mxu0 %v5848
      %v5850 = vand.u32 %v413, 4294901760
      %v5851 = vsub.f32 %v413, %v5850
      %v5852 = vand.u32 %v5851, 4294901760
      %5853 = vmatprep.subr.mxu0 %v5852
      %v5854 = vand.u32 %v412, 4294901760
      %v5855 = vsub.f32 %v412, %v5854
      %v5856 = vand.u32 %v5855, 4294901760
      %5857 = vmatpush1.msra.mxu0 %v5856
      %v5858 = vand.u32 %v415, 4294901760
      %v5859 = vsub.f32 %v415, %v5858
      %v5860 = vand.u32 %v5859, 4294901760
      %5861 = vmatprep.subr.mxu0 %v5860
      %v5862 = vand.u32 %v414, 4294901760
      %v5863 = vsub.f32 %v414, %v5862
      %v5864 = vand.u32 %v5863, 4294901760
      %5865 = vmatpush1.msra.mxu0 %v5864
      %v5866 = vand.u32 %v417, 4294901760
      %v5867 = vsub.f32 %v417, %v5866
      %v5868 = vand.u32 %v5867, 4294901760
      %5869 = vmatprep.subr.mxu0 %v5868
      %v5870 = vand.u32 %v416, 4294901760
      %v5871 = vsub.f32 %v416, %v5870
      %v5872 = vand.u32 %v5871, 4294901760
      %5873 = vmatpush1.msra.mxu0 %v5872
      %v5874 = vand.u32 %v419, 4294901760
      %v5875 = vsub.f32 %v419, %v5874
      %v5876 = vand.u32 %v5875, 4294901760
      %5877 = vmatprep.subr.mxu0 %v5876
      %v5878 = vand.u32 %v418, 4294901760
      %v5879 = vsub.f32 %v418, %v5878
      %v5880 = vand.u32 %v5879, 4294901760
      %5881 = vmatpush1.msra.mxu0 %v5880
      %v5882 = vand.u32 %v421, 4294901760
      %v5883 = vsub.f32 %v421, %v5882
      %v5884 = vand.u32 %v5883, 4294901760
      %5885 = vmatprep.subr.mxu0 %v5884
      %v5886 = vand.u32 %v420, 4294901760
      %v5887 = vsub.f32 %v420, %v5886
      %v5888 = vand.u32 %v5887, 4294901760
      %5889 = vmatpush1.msra.mxu0 %v5888
      %v5890 = vand.u32 %v423, 4294901760
      %v5891 = vsub.f32 %v423, %v5890
      %v5892 = vand.u32 %v5891, 4294901760
      %5893 = vmatprep.subr.mxu0 %v5892
      %v5894 = vand.u32 %v422, 4294901760
      %v5895 = vsub.f32 %v422, %v5894
      %v5896 = vand.u32 %v5895, 4294901760
      %5897 = vmatpush1.msra.mxu0 %v5896
      %v5898 = vand.u32 %v425, 4294901760
      %v5899 = vsub.f32 %v425, %v5898
      %v5900 = vand.u32 %v5899, 4294901760
      %5901 = vmatprep.subr.mxu0 %v5900
      %v5902 = vand.u32 %v424, 4294901760
      %v5903 = vsub.f32 %v424, %v5902
      %v5904 = vand.u32 %v5903, 4294901760
      %5905 = vmatpush1.msra.mxu0 %v5904
      %v5906 = vand.u32 %v427, 4294901760
      %v5907 = vsub.f32 %v427, %v5906
      %v5908 = vand.u32 %v5907, 4294901760
      %5909 = vmatprep.subr.mxu0 %v5908
      %v5910 = vand.u32 %v426, 4294901760
      %v5911 = vsub.f32 %v426, %v5910
      %v5912 = vand.u32 %v5911, 4294901760
      %5913 = vmatpush1.msra.mxu0 %v5912
      %v5914 = vand.u32 %v429, 4294901760
      %v5915 = vsub.f32 %v429, %v5914
      %v5916 = vand.u32 %v5915, 4294901760
      %5917 = vmatprep.subr.mxu0 %v5916
      %v5918 = vand.u32 %v428, 4294901760
      %v5919 = vsub.f32 %v428, %v5918
      %v5920 = vand.u32 %v5919, 4294901760
      %5921 = vmatpush1.msra.mxu0 %v5920
      %v5922 = vand.u32 %v431, 4294901760
      %v5923 = vsub.f32 %v431, %v5922
      %v5924 = vand.u32 %v5923, 4294901760
      %5925 = vmatprep.subr.mxu0 %v5924
      %v5926 = vand.u32 %v430, 4294901760
      %v5927 = vsub.f32 %v430, %v5926
      %v5928 = vand.u32 %v5927, 4294901760
      %5929 = vmatpush1.msra.mxu0 %v5928
      %v5930 = vand.u32 %v433, 4294901760
      %v5931 = vsub.f32 %v433, %v5930
      %v5932 = vand.u32 %v5931, 4294901760
      %5933 = vmatprep.subr.mxu0 %v5932
      %v5934 = vand.u32 %v432, 4294901760
      %v5935 = vsub.f32 %v432, %v5934
      %v5936 = vand.u32 %v5935, 4294901760
      %5937 = vmatpush1.msra.mxu0 %v5936
      %v5938 = vand.u32 %v435, 4294901760
      %v5939 = vsub.f32 %v435, %v5938
      %v5940 = vand.u32 %v5939, 4294901760
      %5941 = vmatprep.subr.mxu0 %v5940
      %v5942 = vand.u32 %v434, 4294901760
      %v5943 = vsub.f32 %v434, %v5942
      %v5944 = vand.u32 %v5943, 4294901760
      %5945 = vmatpush1.msra.mxu0 %v5944
      %v5946 = vand.u32 %v437, 4294901760
      %v5947 = vsub.f32 %v437, %v5946
      %v5948 = vand.u32 %v5947, 4294901760
      %5949 = vmatprep.subr.mxu0 %v5948
      %v5950 = vand.u32 %v436, 4294901760
      %v5951 = vsub.f32 %v436, %v5950
      %v5952 = vand.u32 %v5951, 4294901760
      %5953 = vmatpush1.msra.mxu0 %v5952
      %v5954 = vand.u32 %v439, 4294901760
      %v5955 = vsub.f32 %v439, %v5954
      %v5956 = vand.u32 %v5955, 4294901760
      %5957 = vmatprep.subr.mxu0 %v5956
      %v5958 = vand.u32 %v438, 4294901760
      %v5959 = vsub.f32 %v438, %v5958
      %v5960 = vand.u32 %v5959, 4294901760
      %5961 = vmatpush1.msra.mxu0 %v5960
      %v5962 = vand.u32 %v441, 4294901760
      %v5963 = vsub.f32 %v441, %v5962
      %v5964 = vand.u32 %v5963, 4294901760
      %5965 = vmatprep.subr.mxu0 %v5964
      %v5966 = vand.u32 %v440, 4294901760
      %v5967 = vsub.f32 %v440, %v5966
      %v5968 = vand.u32 %v5967, 4294901760
      %5969 = vmatpush1.msra.mxu0 %v5968
      %v5970 = vand.u32 %v443, 4294901760
      %v5971 = vsub.f32 %v443, %v5970
      %v5972 = vand.u32 %v5971, 4294901760
      %5973 = vmatprep.subr.mxu0 %v5972
      %v5974 = vand.u32 %v442, 4294901760
      %v5975 = vsub.f32 %v442, %v5974
      %v5976 = vand.u32 %v5975, 4294901760
      %5977 = vmatpush1.msra.mxu0 %v5976
      %v5978 = vand.u32 %v445, 4294901760
      %v5979 = vsub.f32 %v445, %v5978
      %v5980 = vand.u32 %v5979, 4294901760
      %5981 = vmatprep.subr.mxu0 %v5980
      %v5982 = vand.u32 %v444, 4294901760
      %v5983 = vsub.f32 %v444, %v5982
      %v5984 = vand.u32 %v5983, 4294901760
      %5985 = vmatpush1.msra.mxu0 %v5984
      %v5986 = vand.u32 %v447, 4294901760
      %v5987 = vsub.f32 %v447, %v5986
      %v5988 = vand.u32 %v5987, 4294901760
      %5989 = vmatprep.subr.mxu0 %v5988
      %v5990 = vand.u32 %v446, 4294901760
      %v5991 = vsub.f32 %v446, %v5990
      %v5992 = vand.u32 %v5991, 4294901760
      %5993 = vmatpush1.msra.mxu0 %v5992
      %v5994 = vand.u32 %v449, 4294901760
      %v5995 = vsub.f32 %v449, %v5994
      %v5996 = vand.u32 %v5995, 4294901760
      %5997 = vmatprep.subr.mxu0 %v5996
      %v5998 = vand.u32 %v448, 4294901760
      %v5999 = vsub.f32 %v448, %v5998
      %v6000 = vand.u32 %v5999, 4294901760
      %6001 = vmatpush1.msra.mxu0 %v6000
      %v6002 = vand.u32 %v451, 4294901760
      %v6003 = vsub.f32 %v451, %v6002
      %v6004 = vand.u32 %v6003, 4294901760
      %6005 = vmatprep.subr.mxu0 %v6004
      %v6006 = vand.u32 %v450, 4294901760
      %v6007 = vsub.f32 %v450, %v6006
      %v6008 = vand.u32 %v6007, 4294901760
      %6009 = vmatpush1.msra.mxu0 %v6008
      %v6010 = vand.u32 %v453, 4294901760
      %v6011 = vsub.f32 %v453, %v6010
      %v6012 = vand.u32 %v6011, 4294901760
      %6013 = vmatprep.subr.mxu0 %v6012
      %v6014 = vand.u32 %v452, 4294901760
      %v6015 = vsub.f32 %v452, %v6014
      %v6016 = vand.u32 %v6015, 4294901760
      %6017 = vmatpush1.msra.mxu0 %v6016
      %v6018 = vand.u32 %v455, 4294901760
      %v6019 = vsub.f32 %v455, %v6018
      %v6020 = vand.u32 %v6019, 4294901760
      %6021 = vmatprep.subr.mxu0 %v6020
      %v6022 = vand.u32 %v454, 4294901760
      %v6023 = vsub.f32 %v454, %v6022
      %v6024 = vand.u32 %v6023, 4294901760
      %6025 = vmatpush1.msra.mxu0 %v6024
      %v6026 = vand.u32 %v457, 4294901760
      %v6027 = vsub.f32 %v457, %v6026
      %v6028 = vand.u32 %v6027, 4294901760
      %6029 = vmatprep.subr.mxu0 %v6028
      %v6030 = vand.u32 %v456, 4294901760
      %v6031 = vsub.f32 %v456, %v6030
      %v6032 = vand.u32 %v6031, 4294901760
      %6033 = vmatpush1.msra.mxu0 %v6032
      %v6034 = vand.u32 %v199, 4294901760
      %6035 = vmatprep.mubr.f32.mxu0 %v6034
      %v6036 = vand.u32 %v198, 4294901760
      %6037 = vmatmul.mubr.f32.gmra.mrb[0].mxu0 %v6036
      %v6038 = vpop.f32.mrb[0].mxu0
      %v6039 = vadd.f32 %v5642, %v6038
      %v6040 = vpop.f32.mrb[0].mxu0
      %v6041 = vadd.f32 %v5644, %v6040
      %v6042 = vand.u32 %v205, 4294901760
      %6043 = vmatprep.mubr.f32.mxu0 %v6042
      %v6044 = vand.u32 %v204, 4294901760
      %6045 = vmatmul.mubr.f32.gmra.mrb[0].mxu0 %v6044
      %v6046 = vpop.f32.mrb[0].mxu0
      %v6047 = vadd.f32 %v5654, %v6046
      %v6048 = vpop.f32.mrb[0].mxu0
      %v6049 = vadd.f32 %v5656, %v6048
      %v6050 = vand.u32 %v211, 4294901760
      %6051 = vmatprep.mubr.f32.mxu0 %v6050
      %v6052 = vand.u32 %v210, 4294901760
      %6053 = vmatmul.mubr.f32.gmra.mrb[0].mxu0 %v6052
      %v6054 = vpop.f32.mrb[0].mxu0
      %v6055 = vadd.f32 %v5666, %v6054
      %v6056 = vpop.f32.mrb[0].mxu0
      %v6057 = vadd.f32 %v5668, %v6056
      %v6058 = vand.u32 %v217, 4294901760
      %6059 = vmatprep.mubr.f32.mxu0 %v6058
      %v6060 = vand.u32 %v216, 4294901760
      %6061 = vmatmul.mubr.f32.gmra.mrb[0].mxu0 %v6060
      %v6062 = vpop.f32.mrb[0].mxu0
      %v6063 = vadd.f32 %v5678, %v6062
      %v6064 = vpop.f32.mrb[0].mxu0
      %v6065 = vadd.f32 %v5680, %v6064
      %v6066 = vand.u32 %v223, 4294901760
      %6067 = vmatprep.mubr.f32.mxu0 %v6066
      %v6068 = vand.u32 %v222, 4294901760
      %6069 = vmatmul.mubr.f32.gmra.mrb[0].mxu0 %v6068
      %v6070 = vpop.f32.mrb[0].mxu0
      %v6071 = vadd.f32 %v5690, %v6070
      %v6072 = vpop.f32.mrb[0].mxu0
      %v6073 = vadd.f32 %v5692, %v6072
      %v6074 = vand.u32 %v229, 4294901760
      %6075 = vmatprep.mubr.f32.mxu0 %v6074
      %v6076 = vand.u32 %v228, 4294901760
      %6077 = vmatmul.mubr.f32.gmra.mrb[0].mxu0 %v6076
      %v6078 = vpop.f32.mrb[0].mxu0
      %v6079 = vadd.f32 %v5702, %v6078
      %v6080 = vpop.f32.mrb[0].mxu0
      %v6081 = vadd.f32 %v5704, %v6080
      %v6082 = vand.u32 %v235, 4294901760
      %6083 = vmatprep.mubr.f32.mxu0 %v6082
      %v6084 = vand.u32 %v234, 4294901760
      %6085 = vmatmul.mubr.f32.gmra.mrb[0].mxu0 %v6084
      %v6086 = vpop.f32.mrb[0].mxu0
      %v6087 = vadd.f32 %v5714, %v6086
      %v6088 = vpop.f32.mrb[0].mxu0
      %v6089 = vadd.f32 %v5716, %v6088
      %v6090 = vand.u32 %v241, 4294901760
      %6091 = vmatprep.mubr.f32.mxu0 %v6090
      %v6092 = vand.u32 %v240, 4294901760
      %6093 = vmatmul.mubr.f32.gmra.mrb[0].mxu0 %v6092
      %v6094 = vpop.f32.mrb[0].mxu0
      %v6095 = vadd.f32 %v5726, %v6094
      %v6096 = vpop.f32.mrb[0].mxu0
      %v6097 = vadd.f32 %v5728, %v6096
      %v6098 = vand.u32 %v247, 4294901760
      %6099 = vmatprep.mubr.f32.mxu0 %v6098
      %v6100 = vand.u32 %v246, 4294901760
      %6101 = vmatmul.mubr.f32.gmra.mrb[0].mxu0 %v6100
      %v6102 = vpop.f32.mrb[0].mxu0
      %v6103 = vadd.f32 %v5738, %v6102
      %v6104 = vpop.f32.mrb[0].mxu0
      %v6105 = vadd.f32 %v5740, %v6104
      %v6106 = vand.u32 %v253, 4294901760
      %6107 = vmatprep.mubr.f32.mxu0 %v6106
      %v6108 = vand.u32 %v252, 4294901760
      %6109 = vmatmul.mubr.f32.gmra.mrb[0].mxu0 %v6108
      %v6110 = vpop.f32.mrb[0].mxu0
      %v6111 = vadd.f32 %v5750, %v6110
      %v6112 = vpop.f32.mrb[0].mxu0
      %v6113 = vadd.f32 %v5752, %v6112
      %v6114 = vand.u32 %v259, 4294901760
      %6115 = vmatprep.mubr.f32.mxu0 %v6114
      %v6116 = vand.u32 %v258, 4294901760
      %6117 = vmatmul.mubr.f32.gmra.mrb[0].mxu0 %v6116
      %v6118 = vpop.f32.mrb[0].mxu0
      %v6119 = vadd.f32 %v5762, %v6118
      %v6120 = vpop.f32.mrb[0].mxu0
      %v6121 = vadd.f32 %v5764, %v6120
      %v6122 = vand.u32 %v265, 4294901760
      %6123 = vmatprep.mubr.f32.mxu0 %v6122
      %v6124 = vand.u32 %v264, 4294901760
      %6125 = vmatmul.mubr.f32.gmra.mrb[0].mxu0 %v6124
      %v6126 = vpop.f32.mrb[0].mxu0
      %v6127 = vadd.f32 %v5774, %v6126
      %v6128 = vpop.f32.mrb[0].mxu0
      %v6129 = vadd.f32 %v5776, %v6128
      %6130 = vdwg.mxu0
      %v6131 = vand.u32 %v395, 4294901760
      %6132 = vmatprep.subr.mxu0 %v6131
      %v6133 = vand.u32 %v394, 4294901760
      %6134 = vmatpush1.msra.mxu0 %v6133
      %v6135 = vand.u32 %v397, 4294901760
      %6136 = vmatprep.subr.mxu0 %v6135
      %v6137 = vand.u32 %v396, 4294901760
      %6138 = vmatpush1.msra.mxu0 %v6137
      %v6139 = vand.u32 %v399, 4294901760
      %6140 = vmatprep.subr.mxu0 %v6139
      %v6141 = vand.u32 %v398, 4294901760
      %6142 = vmatpush1.msra.mxu0 %v6141
      %v6143 = vand.u32 %v401, 4294901760
      %6144 = vmatprep.subr.mxu0 %v6143
      %v6145 = vand.u32 %v400, 4294901760
      %6146 = vmatpush1.msra.mxu0 %v6145
      %v6147 = vand.u32 %v403, 4294901760
      %6148 = vmatprep.subr.mxu0 %v6147
      %v6149 = vand.u32 %v402, 4294901760
      %6150 = vmatpush1.msra.mxu0 %v6149
      %v6151 = vand.u32 %v405, 4294901760
      %6152 = vmatprep.subr.mxu0 %v6151
      %v6153 = vand.u32 %v404, 4294901760
      %6154 = vmatpush1.msra.mxu0 %v6153
      %v6155 = vand.u32 %v407, 4294901760
      %6156 = vmatprep.subr.mxu0 %v6155
      %v6157 = vand.u32 %v406, 4294901760
      %6158 = vmatpush1.msra.mxu0 %v6157
      %v6159 = vand.u32 %v409, 4294901760
      %6160 = vmatprep.subr.mxu0 %v6159
      %v6161 = vand.u32 %v408, 4294901760
      %6162 = vmatpush1.msra.mxu0 %v6161
      %v6163 = vand.u32 %v411, 4294901760
      %6164 = vmatprep.subr.mxu0 %v6163
      %v6165 = vand.u32 %v410, 4294901760
      %6166 = vmatpush1.msra.mxu0 %v6165
      %v6167 = vand.u32 %v413, 4294901760
      %6168 = vmatprep.subr.mxu0 %v6167
      %v6169 = vand.u32 %v412, 4294901760
      %6170 = vmatpush1.msra.mxu0 %v6169
      %v6171 = vand.u32 %v415, 4294901760
      %6172 = vmatprep.subr.mxu0 %v6171
      %v6173 = vand.u32 %v414, 4294901760
      %6174 = vmatpush1.msra.mxu0 %v6173
      %v6175 = vand.u32 %v417, 4294901760
      %6176 = vmatprep.subr.mxu0 %v6175
      %v6177 = vand.u32 %v416, 4294901760
      %6178 = vmatpush1.msra.mxu0 %v6177
      %v6179 = vand.u32 %v419, 4294901760
      %6180 = vmatprep.subr.mxu0 %v6179
      %v6181 = vand.u32 %v418, 4294901760
      %6182 = vmatpush1.msra.mxu0 %v6181
      %v6183 = vand.u32 %v421, 4294901760
      %6184 = vmatprep.subr.mxu0 %v6183
      %v6185 = vand.u32 %v420, 4294901760
      %6186 = vmatpush1.msra.mxu0 %v6185
      %v6187 = vand.u32 %v423, 4294901760
      %6188 = vmatprep.subr.mxu0 %v6187
      %v6189 = vand.u32 %v422, 4294901760
      %6190 = vmatpush1.msra.mxu0 %v6189
      %v6191 = vand.u32 %v425, 4294901760
      %6192 = vmatprep.subr.mxu0 %v6191
      %v6193 = vand.u32 %v424, 4294901760
      %6194 = vmatpush1.msra.mxu0 %v6193
      %v6195 = vand.u32 %v427, 4294901760
      %6196 = vmatprep.subr.mxu0 %v6195
      %v6197 = vand.u32 %v426, 4294901760
      %6198 = vmatpush1.msra.mxu0 %v6197
      %v6199 = vand.u32 %v429, 4294901760
      %6200 = vmatprep.subr.mxu0 %v6199
      %v6201 = vand.u32 %v428, 4294901760
      %6202 = vmatpush1.msra.mxu0 %v6201
      %v6203 = vand.u32 %v431, 4294901760
      %6204 = vmatprep.subr.mxu0 %v6203
      %v6205 = vand.u32 %v430, 4294901760
      %6206 = vmatpush1.msra.mxu0 %v6205
      %v6207 = vand.u32 %v433, 4294901760
      %6208 = vmatprep.subr.mxu0 %v6207
      %v6209 = vand.u32 %v432, 4294901760
      %6210 = vmatpush1.msra.mxu0 %v6209
      %v6211 = vand.u32 %v435, 4294901760
      %6212 = vmatprep.subr.mxu0 %v6211
      %v6213 = vand.u32 %v434, 4294901760
      %6214 = vmatpush1.msra.mxu0 %v6213
      %v6215 = vand.u32 %v437, 4294901760
      %6216 = vmatprep.subr.mxu0 %v6215
      %v6217 = vand.u32 %v436, 4294901760
      %6218 = vmatpush1.msra.mxu0 %v6217
      %v6219 = vand.u32 %v439, 4294901760
      %6220 = vmatprep.subr.mxu0 %v6219
      %v6221 = vand.u32 %v438, 4294901760
      %6222 = vmatpush1.msra.mxu0 %v6221
      %v6223 = vand.u32 %v441, 4294901760
      %6224 = vmatprep.subr.mxu0 %v6223
      %v6225 = vand.u32 %v440, 4294901760
      %6226 = vmatpush1.msra.mxu0 %v6225
      %v6227 = vand.u32 %v443, 4294901760
      %6228 = vmatprep.subr.mxu0 %v6227
      %v6229 = vand.u32 %v442, 4294901760
      %6230 = vmatpush1.msra.mxu0 %v6229
      %v6231 = vand.u32 %v445, 4294901760
      %6232 = vmatprep.subr.mxu0 %v6231
      %v6233 = vand.u32 %v444, 4294901760
      %6234 = vmatpush1.msra.mxu0 %v6233
      %v6235 = vand.u32 %v447, 4294901760
      %6236 = vmatprep.subr.mxu0 %v6235
      %v6237 = vand.u32 %v446, 4294901760
      %6238 = vmatpush1.msra.mxu0 %v6237
      %v6239 = vand.u32 %v449, 4294901760
      %6240 = vmatprep.subr.mxu0 %v6239
      %v6241 = vand.u32 %v448, 4294901760
      %6242 = vmatpush1.msra.mxu0 %v6241
      %v6243 = vand.u32 %v451, 4294901760
      %6244 = vmatprep.subr.mxu0 %v6243
      %v6245 = vand.u32 %v450, 4294901760
      %6246 = vmatpush1.msra.mxu0 %v6245
      %v6247 = vand.u32 %v453, 4294901760
      %6248 = vmatprep.subr.mxu0 %v6247
      %v6249 = vand.u32 %v452, 4294901760
      %6250 = vmatpush1.msra.mxu0 %v6249
      %v6251 = vand.u32 %v455, 4294901760
      %6252 = vmatprep.subr.mxu0 %v6251
      %v6253 = vand.u32 %v454, 4294901760
      %6254 = vmatpush1.msra.mxu0 %v6253
      %v6255 = vand.u32 %v457, 4294901760
      %6256 = vmatprep.subr.mxu0 %v6255
      %v6257 = vand.u32 %v456, 4294901760
      %6258 = vmatpush1.msra.mxu0 %v6257
      %v6259 = vand.u32 %v199, 4294901760
      %6260 = vmatprep.mubr.f32.mxu0 %v6259
      %v6261 = vand.u32 %v198, 4294901760
      %6262 = vmatmul.mubr.f32.gmra.mrb[0].mxu0 %v6261
      %v6263 = vpop.f32.mrb[0].mxu0
      %v6264 = vadd.f32 %v6039, %v6263
      %v6265 = vpop.f32.mrb[0].mxu0
      %v6266 = vadd.f32 %v6041, %v6265
      %v6267 = vand.u32 %v205, 4294901760
      %6268 = vmatprep.mubr.f32.mxu0 %v6267
      %v6269 = vand.u32 %v204, 4294901760
      %6270 = vmatmul.mubr.f32.gmra.mrb[0].mxu0 %v6269
      %v6271 = vpop.f32.mrb[0].mxu0
      %v6272 = vadd.f32 %v6047, %v6271
      %v6273 = vpop.f32.mrb[0].mxu0
      %v6274 = vadd.f32 %v6049, %v6273
      %v6275 = vand.u32 %v211, 4294901760
      %6276 = vmatprep.mubr.f32.mxu0 %v6275
      %v6277 = vand.u32 %v210, 4294901760
      %6278 = vmatmul.mubr.f32.gmra.mrb[0].mxu0 %v6277
      %v6279 = vpop.f32.mrb[0].mxu0
      %v6280 = vadd.f32 %v6055, %v6279
      %v6281 = vpop.f32.mrb[0].mxu0
      %v6282 = vadd.f32 %v6057, %v6281
      %v6283 = vand.u32 %v217, 4294901760
      %6284 = vmatprep.mubr.f32.mxu0 %v6283
      %v6285 = vand.u32 %v216, 4294901760
      %6286 = vmatmul.mubr.f32.gmra.mrb[0].mxu0 %v6285
      %v6287 = vpop.f32.mrb[0].mxu0
      %v6288 = vadd.f32 %v6063, %v6287
      %v6289 = vpop.f32.mrb[0].mxu0
      %v6290 = vadd.f32 %v6065, %v6289
      %v6291 = vand.u32 %v223, 4294901760
      %6292 = vmatprep.mubr.f32.mxu0 %v6291
      %v6293 = vand.u32 %v222, 4294901760
      %6294 = vmatmul.mubr.f32.gmra.mrb[0].mxu0 %v6293
      %v6295 = vpop.f32.mrb[0].mxu0
      %v6296 = vadd.f32 %v6071, %v6295
      %v6297 = vpop.f32.mrb[0].mxu0
      %v6298 = vadd.f32 %v6073, %v6297
      %v6299 = vand.u32 %v229, 4294901760
      %6300 = vmatprep.mubr.f32.mxu0 %v6299
      %v6301 = vand.u32 %v228, 4294901760
      %6302 = vmatmul.mubr.f32.gmra.mrb[0].mxu0 %v6301
      %v6303 = vpop.f32.mrb[0].mxu0
      %v6304 = vadd.f32 %v6079, %v6303
      %v6305 = vpop.f32.mrb[0].mxu0
      %v6306 = vadd.f32 %v6081, %v6305
      %v6307 = vand.u32 %v235, 4294901760
      %6308 = vmatprep.mubr.f32.mxu0 %v6307
      %v6309 = vand.u32 %v234, 4294901760
      %6310 = vmatmul.mubr.f32.gmra.mrb[0].mxu0 %v6309
      %v6311 = vpop.f32.mrb[0].mxu0
      %v6312 = vadd.f32 %v6087, %v6311
      %v6313 = vpop.f32.mrb[0].mxu0
      %v6314 = vadd.f32 %v6089, %v6313
      %v6315 = vand.u32 %v241, 4294901760
      %6316 = vmatprep.mubr.f32.mxu0 %v6315
      %v6317 = vand.u32 %v240, 4294901760
      %6318 = vmatmul.mubr.f32.gmra.mrb[0].mxu0 %v6317
      %v6319 = vpop.f32.mrb[0].mxu0
      %v6320 = vadd.f32 %v6095, %v6319
      %v6321 = vpop.f32.mrb[0].mxu0
      %v6322 = vadd.f32 %v6097, %v6321
      %v6323 = vand.u32 %v247, 4294901760
      %6324 = vmatprep.mubr.f32.mxu0 %v6323
      %v6325 = vand.u32 %v246, 4294901760
      %6326 = vmatmul.mubr.f32.gmra.mrb[0].mxu0 %v6325
      %v6327 = vpop.f32.mrb[0].mxu0
      %v6328 = vadd.f32 %v6103, %v6327
      %v6329 = vpop.f32.mrb[0].mxu0
      %v6330 = vadd.f32 %v6105, %v6329
      %v6331 = vand.u32 %v253, 4294901760
      %6332 = vmatprep.mubr.f32.mxu0 %v6331
      %v6333 = vand.u32 %v252, 4294901760
      %6334 = vmatmul.mubr.f32.gmra.mrb[0].mxu0 %v6333
      %v6335 = vpop.f32.mrb[0].mxu0
      %v6336 = vadd.f32 %v6111, %v6335
      %v6337 = vpop.f32.mrb[0].mxu0
      %v6338 = vadd.f32 %v6113, %v6337
      %v6339 = vand.u32 %v259, 4294901760
      %6340 = vmatprep.mubr.f32.mxu0 %v6339
      %v6341 = vand.u32 %v258, 4294901760
      %6342 = vmatmul.mubr.f32.gmra.mrb[0].mxu0 %v6341
      %v6343 = vpop.f32.mrb[0].mxu0
      %v6344 = vadd.f32 %v6119, %v6343
      %v6345 = vpop.f32.mrb[0].mxu0
      %v6346 = vadd.f32 %v6121, %v6345
      %v6347 = vand.u32 %v265, 4294901760
      %6348 = vmatprep.mubr.f32.mxu0 %v6347
      %v6349 = vand.u32 %v264, 4294901760
      %6350 = vmatmul.mubr.f32.gmra.mrb[0].mxu0 %v6349
      %v6351 = vpop.f32.mrb[0].mxu0
      %v6352 = vadd.f32 %v6127, %v6351
      %v6353 = vpop.f32.mrb[0].mxu0
      %v6354 = vadd.f32 %v6129, %v6353
      %6355 = vdwg.mxu0
      %6356 = vst [vmem:[%s192] sm:$0xff] %v6264
      %vm6357 = vcmask 130048
      %6358 = vst.msk [vmem:[%s192 + $0x8] sm:$0xff] %vm6357, %v6266
      %6359 = vst [vmem:[%s192 + $0x10] sm:$0xff] %v6272
      %6360 = vst.msk [vmem:[%s192 + $0x18] sm:$0xff] %vm6357, %v6274
      %6361 = vst [vmem:[%s192 + $0x20] sm:$0xff] %v6280
      %6362 = vst.msk [vmem:[%s192 + $0x28] sm:$0xff] %vm6357, %v6282
      %6363 = vst [vmem:[%s192 + $0x30] sm:$0xff] %v6288
      %6364 = vst.msk [vmem:[%s192 + $0x38] sm:$0xff] %vm6357, %v6290
      %6365 = vst [vmem:[%s192 + $0x40] sm:$0xff] %v6296
      %6366 = vst.msk [vmem:[%s192 + $0x48] sm:$0xff] %vm6357, %v6298
      %6367 = vst [vmem:[%s192 + $0x50] sm:$0xff] %v6304
      %6368 = vst.msk [vmem:[%s192 + $0x58] sm:$0xff] %vm6357, %v6306
      %6369 = vst [vmem:[%s192 + $0x60] sm:$0xff] %v6312
      %6370 = vst.msk [vmem:[%s192 + $0x68] sm:$0xff] %vm6357, %v6314
      %6371 = vst [vmem:[%s192 + $0x70] sm:$0xff] %v6320
      %6372 = vst.msk [vmem:[%s192 + $0x78] sm:$0xff] %vm6357, %v6322
      %6373 = vst [vmem:[%s192 + $0x80] sm:$0xff] %v6328
      %6374 = vst.msk [vmem:[%s192 + $0x88] sm:$0xff] %vm6357, %v6330
      %6375 = vst [vmem:[%s192 + $0x90] sm:$0xff] %v6336
      %6376 = vst.msk [vmem:[%s192 + $0x98] sm:$0xff] %vm6357, %v6338
      %6377 = vst [vmem:[%s192 + $0xa0] sm:$0xff] %v6344
      %6378 = vst.msk [vmem:[%s192 + $0xa8] sm:$0xff] %vm6357, %v6346
      %6379 = vst [vmem:[%s192 + $0xb0] sm:$0xff] %v6352
      %6380 = vst.msk [vmem:[%s192 + $0xb8] sm:$0xff] %vm6357, %v6354
      %s6381 = smul.u32 12, %s18
      %p6382 = scmp.lt.s32.totalorder %s17, 0
      %s6383 = scalar_select %p6382, %s17, 0
      %p6384 = scmp.lt.s32.totalorder %s6381, 23
      %s6385 = scalar_select %p6384, %s6381, 23
      %s6386 = smul.addr %s6385, 2
      %s6387 = smul.addr %s6383, 48
      %s6388 = sadd.s32 %s6386, %s6387
      %s6389 = smul.addr %s6388, 8
      %s6390 = scalar_lea.vmem %s2, %s6389
      // Predicated region
      $region29: #{tpu_custom_call.1} parent=27 // pred_check
        %p6391 = pneg %p97
      $region30: #{tpu_custom_call.1} parent=27 // pred_check_branch
        %6393 = sbr.rel (%p6391) target = $region32
      $region31: #{tpu_custom_call.1} parent=27 // pred_region
        %s6394 = smul.u32 12, %s18
      $region32: #{tpu_custom_call.1} parent=27 // pred_fallthru
        _
    $region28: #{tpu_custom_call.1} parent=5 // pred_fallthru
      _
    %p6395 = scmp.le.s32.totalorder 2, %s8
    // Predicated region
    $region33: #{tpu_custom_call.1} parent=5 // pred_check
      %p6396 = pneg %p6395
    $region34: #{tpu_custom_call.1} parent=5 // pred_check_branch
      %6398 = sbr.rel (%p6396) target = $region36
    $region35: #{tpu_custom_call.1} parent=5 // pred_region
      %s6399 = ssub.s32 %s8, 2
      // Predicated region
      $region37: #{tpu_custom_call.1} parent=35 // pred_check
        %p6400 = pneg %p103
      $region38: #{tpu_custom_call.1} parent=35 // pred_check_branch
        %6402 = sbr.rel (%p6400) target = $region40
      $region39: #{tpu_custom_call.1} parent=35 // pred_region
        %s6403 = smul.u32 12, %s20
        %p6404 = scmp.lt.s32.totalorder %s19, 0
        %s6405 = scalar_select %p6404, %s19, 0
        %p6406 = scmp.lt.s32.totalorder %s6403, 23
        %s6407 = scalar_select %p6406, %s6403, 23
        %s6408 = smul.addr %s6407, 2
        %s6409 = smul.addr %s6405, 48
        %s6410 = sadd.s32 %s6408, %s6409
        %s6411 = smul.addr %s6410, 8
        %s6412 = scalar_lea.vmem %s2, %s6411
      $region40: #{tpu_custom_call.1} parent=35 // pred_fallthru
        _
    $region36: #{tpu_custom_call.1} parent=5 // pred_fallthru
      _
  $region6: #{tpu_custom_call.1} parent=0 // loop_footer
    %s12 = sadd.s32 1, %s8
  $region7: #{tpu_custom_call.1} parent=0 // loop_footer_branch
    %7 = sbr.rel target = $region3
  $region8: #{tpu_custom_call.1} parent=0 // loop_exit
    _

</llo_original>
